<compile_context>
chip_gen: v7x
topology: tpu7x:2x2x1
jax: 0.10.0
libtpu: 0.0.40
codegen_flags: <defaults>
</compile_context>

<pallas_src>
import math
import functools

import jax
import jax.numpy as jnp
from jax.experimental import pallas as pl
from jax.experimental.pallas import tpu as pltpu


def _layernorm(v, g, b, eps):
    mu = jnp.mean(v, axis=-1, keepdims=True)
    var = jnp.mean((v - mu) ** 2, axis=-1, keepdims=True)
    return (v - mu) * jax.lax.rsqrt(var + eps) * g + b


def _gelu_exact(v):
    # exact (erf-based) GELU, matching torch.nn.GELU default
    return 0.5 * v * (1.0 + jax.lax.erf(v * (1.0 / math.sqrt(2.0))))


# --------------------- optimized kernel: bf16 MXU, batched heads ---------------------
def _block_kernel_fast(x_ref,
                       n1g_ref, n1b_ref,
                       qkvw_ref,
                       projw_ref, projb_ref,
                       n2g_ref, n2b_ref,
                       fc1w_ref, fc1b_ref,
                       fc2w_ref, fc2b_ref,
                       o_ref,
                       *, num_heads, scale, eps):
    x = x_ref[...]                            # (N, C) f32 (leading batch dim squeezed)
    N, C = x.shape
    hd = C // num_heads
    bf16 = jnp.bfloat16

    # ---- Attention branch ----
    xn = _layernorm(x, n1g_ref[0], n1b_ref[0], eps)
    qkv = jnp.dot(xn.astype(bf16), qkvw_ref[...],
                  preferred_element_type=jnp.float32)            # (N, 3C), f32 accum
    q = qkv[:, 0:C] * scale                  # fold qk scale into q (NxC, not nh*NxN)
    k = qkv[:, C:2 * C]
    v = qkv[:, 2 * C:3 * C]

    def to_heads(t):                          # (N, C) -> (H, N, hd), head-major stack
        return jnp.stack([t[:, h * hd:(h + 1) * hd] for h in range(num_heads)], axis=0)

    qh = to_heads(q).astype(bf16)
    kh = to_heads(k).astype(bf16)
    vh = to_heads(v).astype(bf16)

    att = jnp.einsum('hnd,hmd->hnm', qh, kh,
                     preferred_element_type=jnp.float32)         # (H, N, N)
    att = att - jnp.max(att, axis=-1, keepdims=True)
    p = jnp.exp(att)
    p = p * pl.reciprocal(jnp.sum(p, axis=-1, keepdims=True), approx=True)

    o = jnp.einsum('hnm,hmd->hnd', p.astype(bf16), vh,
                   preferred_element_type=jnp.float32)           # (H, N, hd)

    # Projection folded per head (proj weight host-reshaped to (H, hd, C)); summing the
    # per-head partial projections avoids the lane-dim concatenate of the head outputs.
    proj = jnp.einsum('hnd,hdc->hnc', o.astype(bf16), projw_ref[...],
                      preferred_element_type=jnp.float32)        # (H, N, C)
    attn_out = jnp.sum(proj, axis=0) + projb_ref[0]
    x1 = x + attn_out

    # ---- MLP branch ----
    # NOTE: for ViT-L/H sized models the MLP should additionally be tiled over the
    # hidden dim with a grid axis + VMEM accumulator (VMEM pressure on v7x).
    x2n = _layernorm(x1, n2g_ref[0], n2b_ref[0], eps)
    h1 = jnp.dot(x2n.astype(bf16), fc1w_ref[...],
                 preferred_element_type=jnp.float32) + fc1b_ref[0]
    h1 = _gelu_exact(h1)
    h2 = jnp.dot(h1.astype(bf16), fc2w_ref[...],
                 preferred_element_type=jnp.float32) + fc2b_ref[0]

    o_ref[...] = (x1 + h2).astype(o_ref.dtype)


def _vit_block_pallas_fast(x, params, *, num_heads, eps):
    B, N, C = x.shape
    H = params["fc1_w"].shape[1]
    hd = C // num_heads
    scale = hd ** (-0.5)
    bf16 = jnp.bfloat16

    # Host-side weight prep: bf16 MXU inputs, head-major proj weight.
    qkv_w = params["qkv_w"].astype(bf16)                         # (C, 3C)
    proj_w3 = params["proj_w"].reshape(num_heads, hd, C).astype(bf16)
    fc1_w = params["fc1_w"].astype(bf16)                         # (C, H)
    fc2_w = params["fc2_w"].astype(bf16)                         # (H, C)

    const2 = lambda b: (0, 0)
    const3 = lambda b: (0, 0, 0)
    row = lambda b: (b, 0, 0)

    # Constant-index weight/bias blocks: single buffer (no pointless double-buffering).
    W = functools.partial(pl.BlockSpec, pipeline_mode=pl.Buffered(1))

    kernel = functools.partial(_block_kernel_fast,
                               num_heads=num_heads, scale=scale, eps=eps)

    return pl.pallas_call(
        kernel,
        out_shape=jax.ShapeDtypeStruct((B, N, C), jnp.float32),
        grid_spec=pltpu.PrefetchScalarGridSpec(
            num_scalar_prefetch=0,
            grid=(B,),
            in_specs=[
                pl.BlockSpec((None, N, C), row),     # x (batch dim squeezed)
                W((1, C), const2),                   # norm1 gamma
                W((1, C), const2),                   # norm1 beta
                W((C, 3 * C), const2),               # qkv weight (in, out) bf16
                W((num_heads, hd, C), const3),       # proj weight head-major bf16
                W((1, C), const2),                   # proj bias
                W((1, C), const2),                   # norm2 gamma
                W((1, C), const2),                   # norm2 beta
                W((C, H), const2),                   # fc1 weight bf16
                W((1, H), const2),                   # fc1 bias
                W((H, C), const2),                   # fc2 weight bf16
                W((1, C), const2),                   # fc2 bias
            ],
            out_specs=pl.BlockSpec((None, N, C), row),
        ),
        compiler_params=pltpu.CompilerParams(
            dimension_semantics=("parallel",),        # shard batch across TensorCores
            vmem_limit_bytes=48 * 1024 * 1024,        # explicit budget (v7x: 64 MiB)
        ),
    )(
        x,
        params["norm1_g"], params["norm1_b"],
        qkv_w,
        proj_w3, params["proj_b"],
        params["norm2_g"], params["norm2_b"],
        fc1_w, params["fc1_b"],
        fc2_w, params["fc2_b"],
    )


# --------------- conservative fallback kernel (previously validated path) ---------------
def _block_kernel_safe(x_ref, n1g_ref, n1b_ref, qkvw_ref, projw_ref, projb_ref,
                       n2g_ref, n2b_ref, fc1w_ref, fc1b_ref, fc2w_ref, fc2b_ref,
                       o_ref, *, num_heads, scale, eps):
    x = x_ref[0]                              # (N, C)
    N, C = x.shape
    hd = C // num_heads

    xn = _layernorm(x, n1g_ref[0], n1b_ref[0], eps)
    qkv = jnp.dot(xn, qkvw_ref[...], preferred_element_type=jnp.float32)
    q, k, v = qkv[:, 0:C], qkv[:, C:2 * C], qkv[:, 2 * C:3 * C]

    head_outs = []
    for h in range(num_heads):
        sl = slice(h * hd, (h + 1) * hd)
        att = jnp.dot(q[:, sl], k[:, sl].T, preferred_element_type=jnp.float32) * scale
        att = att - jnp.max(att, axis=-1, keepdims=True)
        p = jnp.exp(att)
        p = p / jnp.sum(p, axis=-1, keepdims=True)
        head_outs.append(jnp.dot(p, v[:, sl], preferred_element_type=jnp.float32))
    attn_out = jnp.concatenate(head_outs, axis=-1)
    attn_out = jnp.dot(attn_out, projw_ref[...],
                       preferred_element_type=jnp.float32) + projb_ref[0]
    x1 = x + attn_out

    x2n = _layernorm(x1, n2g_ref[0], n2b_ref[0], eps)
    h1 = _gelu_exact(jnp.dot(x2n, fc1w_ref[...],
                             preferred_element_type=jnp.float32) + fc1b_ref[0])
    h2 = jnp.dot(h1, fc2w_ref[...], preferred_element_type=jnp.float32) + fc2b_ref[0]
    o_ref[0] = x1 + h2


def _vit_block_pallas_safe(x, params, *, num_heads, eps):
    B, N, C = x.shape
    H = params["fc1_w"].shape[1]
    hd = C // num_heads
    scale = hd ** (-0.5)

    full = lambda b: (0, 0)
    row = lambda b: (b, 0, 0)
    kernel = functools.partial(_block_kernel_safe,
                               num_heads=num_heads, scale=scale, eps=eps)

    return pl.pallas_call(
        kernel,
        out_shape=jax.ShapeDtypeStruct((B, N, C), jnp.float32),
        grid_spec=pltpu.PrefetchScalarGridSpec(
            num_scalar_prefetch=0,
            grid=(B,),
            in_specs=[
                pl.BlockSpec((1, N, C), row),
                pl.BlockSpec((1, C), full), pl.BlockSpec((1, C), full),
                pl.BlockSpec((C, 3 * C), full),
                pl.BlockSpec((C, C), full), pl.BlockSpec((1, C), full),
                pl.BlockSpec((1, C), full), pl.BlockSpec((1, C), full),
                pl.BlockSpec((C, H), full), pl.BlockSpec((1, H), full),
                pl.BlockSpec((H, C), full), pl.BlockSpec((1, C), full),
            ],
            out_specs=pl.BlockSpec((1, N, C), row),
        ),
        compiler_params=pltpu.CompilerParams(dimension_semantics=("parallel",)),
    )(
        x,
        params["norm1_g"], params["norm1_b"],
        params["qkv_w"],
        params["proj_w"], params["proj_b"],
        params["norm2_g"], params["norm2_b"],
        params["fc1_w"], params["fc1_b"],
        params["fc2_w"], params["fc2_b"],
    )


def vit_block_pallas(x, params, *, num_heads, eps=1e-5):
    try:
        return jax.block_until_ready(
            _vit_block_pallas_fast(x, params, num_heads=num_heads, eps=eps))
    except Exception:
        # Safety net: if this jax/Mosaic build rejects Buffered(1) or the batched-head
        # einsum path, fall back to the previously validated f32 per-head kernel.
        return jax.block_until_ready(
            _vit_block_pallas_safe(x, params, num_heads=num_heads, eps=eps))


# ------------------------------- pure-JAX reference -------------------------------
def vit_block_ref(x, params, *, num_heads, eps=1e-5):
    B, N, C = x.shape
    hd = C // num_heads
    scale = hd ** (-0.5)

    def ln(v, g, b):
        mu = jnp.mean(v, axis=-1, keepdims=True)
        var = jnp.mean((v - mu) ** 2, axis=-1, keepdims=True)
        return (v - mu) / jnp.sqrt(var + eps) * g[0] + b[0]

    xn = ln(x, params["norm1_g"], params["norm1_b"])
    qkv = xn @ params["qkv_w"]                                    # (B, N, 3C)
    qkv = qkv.reshape(B, N, 3, num_heads, hd).transpose(2, 0, 3, 1, 4)
    q, k, v = qkv[0], qkv[1], qkv[2]                              # (B, h, N, hd)
    att = jnp.einsum("bhnd,bhmd->bhnm", q, k) * scale
    att = jax.nn.softmax(att, axis=-1)
    o = jnp.einsum("bhnm,bhmd->bhnd", att, v).transpose(0, 2, 1, 3).reshape(B, N, C)
    o = o @ params["proj_w"] + params["proj_b"][0]
    x1 = x + o

    x2n = ln(x1, params["norm2_g"], params["norm2_b"])
    h1 = x2n @ params["fc1_w"] + params["fc1_b"][0]
    h1 = 0.5 * h1 * (1.0 + jax.lax.erf(h1 / math.sqrt(2.0)))
    h2 = h1 @ params["fc2_w"] + params["fc2_b"][0]
    return x1 + h2


def make_params(key, dim, num_heads, mlp_ratio=4.0):
    H = int(dim * mlp_ratio)
    ks = jax.random.split(key, 6)
    s = 0.02
    return {
        "norm1_g": jnp.ones((1, dim), jnp.float32),
        "norm1_b": jnp.zeros((1, dim), jnp.float32),
        # qkv_bias=False in the module defaults -> no qkv bias
        "qkv_w": (s * jax.random.normal(ks[0], (dim, 3 * dim))).astype(jnp.float32),
        "proj_w": (s * jax.random.normal(ks[1], (dim, dim))).astype(jnp.float32),
        "proj_b": (s * jax.random.normal(ks[2], (1, dim))).astype(jnp.float32),
        "norm2_g": jnp.ones((1, dim), jnp.float32),
        "norm2_b": jnp.zeros((1, dim), jnp.float32),
        "fc1_w": (s * jax.random.normal(ks[3], (dim, H))).astype(jnp.float32),
        "fc1_b": (s * jax.random.normal(ks[4], (1, H))).astype(jnp.float32),
        "fc2_w": (s * jax.random.normal(ks[5], (H, dim))).astype(jnp.float32),
        "fc2_b": jnp.zeros((1, dim), jnp.float32),
    }


if __name__ == "__main__":
    # TODO(synk): Dropout / DropPath are identity here (ratios = 0.0, eval mode).
    B, N, C = 2, 8, 32
    num_heads = 4

    key = jax.random.PRNGKey(0)
    k_x, k_p = jax.random.split(key)
    x = jax.random.normal(k_x, (B, N, C), dtype=jnp.float32)
    params = make_params(k_p, C, num_heads)

    out = vit_block_pallas(x, params, num_heads=num_heads)
    out = jax.block_until_ready(out)

    ref = vit_block_ref(x, params, num_heads=num_heads)
    assert out.shape == (B, N, C)
    max_err = float(jnp.max(jnp.abs(out - ref)))
    # tolerance loosened vs pure f32 because the optimized path runs MXU inputs in bf16
    # (f32 accumulation) and uses the EUP approximate reciprocal in the softmax.
    assert jnp.allclose(out, ref, atol=2e-2, rtol=2e-2), \
        f"Pallas output mismatch vs reference (max abs err={max_err})"

    print("KERNEL_OK")
</pallas_src>

<mosaic_0001>
module attributes {stable_mosaic.version = 11 : i64} {
  func.func @_block_kernel_fast(%arg0: i32, %arg1: memref<1x8x32xf32, #tpu.memory_space<vmem>>, %arg2: memref<1x32xf32, #tpu.memory_space<vmem>>, %arg3: memref<1x32xf32, #tpu.memory_space<vmem>>, %arg4: memref<32x96xbf16, #tpu.memory_space<vmem>>, %arg5: memref<4x8x32xbf16, #tpu.memory_space<vmem>>, %arg6: memref<1x32xf32, #tpu.memory_space<vmem>>, %arg7: memref<1x32xf32, #tpu.memory_space<vmem>>, %arg8: memref<1x32xf32, #tpu.memory_space<vmem>>, %arg9: memref<32x128xbf16, #tpu.memory_space<vmem>>, %arg10: memref<1x128xf32, #tpu.memory_space<vmem>>, %arg11: memref<128x32xbf16, #tpu.memory_space<vmem>>, %arg12: memref<1x32xf32, #tpu.memory_space<vmem>>, %arg13: memref<1x8x32xf32, #tpu.memory_space<vmem>>) attributes {dimension_semantics = [#tpu.dimension_semantics<parallel>], iteration_bounds = array<i64: 2>, scalar_prefetch = 0 : i64, scratch_operands = 0 : i64, tpu.core_type = #tpu.core_type<tc>, window_params = [{transform_indices = @transform_0, window_bounds = array<i64: 1, 8, 32>}, {pipeline_mode = #tpu.pipeline_mode<synchronous>, transform_indices = @transform_1, window_bounds = array<i64: 1, 32>}, {pipeline_mode = #tpu.pipeline_mode<synchronous>, transform_indices = @transform_2, window_bounds = array<i64: 1, 32>}, {pipeline_mode = #tpu.pipeline_mode<synchronous>, transform_indices = @transform_3, window_bounds = array<i64: 32, 96>}, {pipeline_mode = #tpu.pipeline_mode<synchronous>, transform_indices = @transform_4, window_bounds = array<i64: 4, 8, 32>}, {pipeline_mode = #tpu.pipeline_mode<synchronous>, transform_indices = @transform_5, window_bounds = array<i64: 1, 32>}, {pipeline_mode = #tpu.pipeline_mode<synchronous>, transform_indices = @transform_6, window_bounds = array<i64: 1, 32>}, {pipeline_mode = #tpu.pipeline_mode<synchronous>, transform_indices = @transform_7, window_bounds = array<i64: 1, 32>}, {pipeline_mode = #tpu.pipeline_mode<synchronous>, transform_indices = @transform_8, window_bounds = array<i64: 32, 128>}, {pipeline_mode = #tpu.pipeline_mode<synchronous>, transform_indices = @transform_9, window_bounds = array<i64: 1, 128>}, {pipeline_mode = #tpu.pipeline_mode<synchronous>, transform_indices = @transform_10, window_bounds = array<i64: 128, 32>}, {pipeline_mode = #tpu.pipeline_mode<synchronous>, transform_indices = @transform_11, window_bounds = array<i64: 1, 32>}, {transform_indices = @transform_12, window_bounds = array<i64: 1, 8, 32>}]} {
    %c0 = arith.constant 0 : index
    %c0_0 = arith.constant 0 : index
    %c0_1 = arith.constant 0 : index
    %0 = vector.load %arg1[%c0, %c0_0, %c0_1] : memref<1x8x32xf32, #tpu.memory_space<vmem>>, vector<1x8x32xf32>
    %1 = vector.shape_cast %0 : vector<1x8x32xf32> to vector<8x32xf32>
    %c0_2 = arith.constant 0 : index
    %c0_3 = arith.constant 0 : index
    %2 = vector.load %arg2[%c0_2, %c0_3] : memref<1x32xf32, #tpu.memory_space<vmem>>, vector<1x32xf32>
    %3 = vector.shape_cast %2 : vector<1x32xf32> to vector<32xf32>
    %c0_4 = arith.constant 0 : index
    %c0_5 = arith.constant 0 : index
    %4 = vector.load %arg3[%c0_4, %c0_5] : memref<1x32xf32, #tpu.memory_space<vmem>>, vector<1x32xf32>
    %5 = vector.shape_cast %4 : vector<1x32xf32> to vector<32xf32>
    %cst = arith.constant dense<0.000000e+00> : vector<8xf32>
    %6 = vector.multi_reduction <add>, %1, %cst [1] : vector<8x32xf32> to vector<8xf32>
    %7 = vector.shape_cast %6 : vector<8xf32> to vector<8x1xf32>
    %cst_6 = arith.constant 3.200000e+01 : f32
    %8 = vector.broadcast %cst_6 : f32 to vector<8x1xf32>
    %9 = arith.divf %7, %8 : vector<8x1xf32>
    %10 = vector.broadcast %9 : vector<8x1xf32> to vector<8x32xf32>
    %11 = arith.subf %1, %10 : vector<8x32xf32>
    %12 = arith.mulf %11, %11 : vector<8x32xf32>
    %cst_7 = arith.constant dense<0.000000e+00> : vector<8xf32>
    %13 = vector.multi_reduction <add>, %12, %cst_7 [1] : vector<8x32xf32> to vector<8xf32>
    %14 = vector.shape_cast %13 : vector<8xf32> to vector<8x1xf32>
    %cst_8 = arith.constant 3.200000e+01 : f32
    %15 = vector.broadcast %cst_8 : f32 to vector<8x1xf32>
    %16 = arith.divf %14, %15 : vector<8x1xf32>
    %17 = vector.broadcast %9 : vector<8x1xf32> to vector<8x32xf32>
    %18 = arith.subf %1, %17 : vector<8x32xf32>
    %cst_9 = arith.constant 9.99999974E-6 : f32
    %19 = vector.broadcast %cst_9 : f32 to vector<8x1xf32>
    %20 = arith.addf %16, %19 : vector<8x1xf32>
    %21 = math.rsqrt %20 : vector<8x1xf32>
    %22 = vector.broadcast %21 : vector<8x1xf32> to vector<8x32xf32>
    %23 = arith.mulf %18, %22 : vector<8x32xf32>
    %24 = vector.shape_cast %3 : vector<32xf32> to vector<1x32xf32>
    %25 = vector.broadcast %24 : vector<1x32xf32> to vector<8x32xf32>
    %26 = arith.mulf %23, %25 : vector<8x32xf32>
    %27 = vector.shape_cast %5 : vector<32xf32> to vector<1x32xf32>
    %28 = vector.broadcast %27 : vector<1x32xf32> to vector<8x32xf32>
    %29 = arith.addf %26, %28 : vector<8x32xf32>
    %30 = arith.truncf %29 : vector<8x32xf32> to vector<8x32xbf16>
    %c0_10 = arith.constant 0 : index
    %c0_11 = arith.constant 0 : index
    %31 = vector.load %arg4[%c0_10, %c0_11] : memref<32x96xbf16, #tpu.memory_space<vmem>>, vector<32x96xbf16>
    %cst_12 = arith.constant dense<0.000000e+00> : vector<8x96xf32>
    %32 = tpu.matmul %30, %31, %cst_12 {dimension_numbers = #tpu.dot_dimension_numbers<[1], [0], [0], [1], [0, 0, 1, 1], [], []>} : vector<8x32xbf16>, vector<32x96xbf16>, vector<8x96xf32> -> vector<8x96xf32>
    %33 = vector.extract_strided_slice %32 {offsets = [0, 0], sizes = [8, 32], strides = [1, 1]} : vector<8x96xf32> to vector<8x32xf32>
    %cst_13 = arith.constant 0.353553385 : f32
    %34 = vector.broadcast %cst_13 : f32 to vector<8x32xf32>
    %35 = arith.mulf %33, %34 : vector<8x32xf32>
    %36 = vector.extract_strided_slice %32 {offsets = [0, 32], sizes = [8, 32], strides = [1, 1]} : vector<8x96xf32> to vector<8x32xf32>
    %37 = vector.extract_strided_slice %32 {offsets = [0, 64], sizes = [8, 32], strides = [1, 1]} : vector<8x96xf32> to vector<8x32xf32>
    %38 = vector.extract_strided_slice %35 {offsets = [0, 0], sizes = [8, 8], strides = [1, 1]} : vector<8x32xf32> to vector<8x8xf32>
    %39 = vector.extract_strided_slice %35 {offsets = [0, 8], sizes = [8, 8], strides = [1, 1]} : vector<8x32xf32> to vector<8x8xf32>
    %40 = vector.extract_strided_slice %35 {offsets = [0, 16], sizes = [8, 8], strides = [1, 1]} : vector<8x32xf32> to vector<8x8xf32>
    %41 = vector.extract_strided_slice %35 {offsets = [0, 24], sizes = [8, 8], strides = [1, 1]} : vector<8x32xf32> to vector<8x8xf32>
    %42 = vector.shape_cast %38 : vector<8x8xf32> to vector<1x8x8xf32>
    %43 = vector.shape_cast %39 : vector<8x8xf32> to vector<1x8x8xf32>
    %44 = vector.shape_cast %40 : vector<8x8xf32> to vector<1x8x8xf32>
    %45 = vector.shape_cast %41 : vector<8x8xf32> to vector<1x8x8xf32>
    %46 = tpu.concatenate %42, %43, %44, %45 in 0 : vector<1x8x8xf32>, vector<1x8x8xf32>, vector<1x8x8xf32>, vector<1x8x8xf32> -> vector<4x8x8xf32>
    %47 = arith.truncf %46 : vector<4x8x8xf32> to vector<4x8x8xbf16>
    %48 = vector.extract_strided_slice %36 {offsets = [0, 0], sizes = [8, 8], strides = [1, 1]} : vector<8x32xf32> to vector<8x8xf32>
    %49 = vector.extract_strided_slice %36 {offsets = [0, 8], sizes = [8, 8], strides = [1, 1]} : vector<8x32xf32> to vector<8x8xf32>
    %50 = vector.extract_strided_slice %36 {offsets = [0, 16], sizes = [8, 8], strides = [1, 1]} : vector<8x32xf32> to vector<8x8xf32>
    %51 = vector.extract_strided_slice %36 {offsets = [0, 24], sizes = [8, 8], strides = [1, 1]} : vector<8x32xf32> to vector<8x8xf32>
    %52 = vector.shape_cast %48 : vector<8x8xf32> to vector<1x8x8xf32>
    %53 = vector.shape_cast %49 : vector<8x8xf32> to vector<1x8x8xf32>
    %54 = vector.shape_cast %50 : vector<8x8xf32> to vector<1x8x8xf32>
    %55 = vector.shape_cast %51 : vector<8x8xf32> to vector<1x8x8xf32>
    %56 = tpu.concatenate %52, %53, %54, %55 in 0 : vector<1x8x8xf32>, vector<1x8x8xf32>, vector<1x8x8xf32>, vector<1x8x8xf32> -> vector<4x8x8xf32>
    %57 = arith.truncf %56 : vector<4x8x8xf32> to vector<4x8x8xbf16>
    %58 = vector.extract_strided_slice %37 {offsets = [0, 0], sizes = [8, 8], strides = [1, 1]} : vector<8x32xf32> to vector<8x8xf32>
    %59 = vector.extract_strided_slice %37 {offsets = [0, 8], sizes = [8, 8], strides = [1, 1]} : vector<8x32xf32> to vector<8x8xf32>
    %60 = vector.extract_strided_slice %37 {offsets = [0, 16], sizes = [8, 8], strides = [1, 1]} : vector<8x32xf32> to vector<8x8xf32>
    %61 = vector.extract_strided_slice %37 {offsets = [0, 24], sizes = [8, 8], strides = [1, 1]} : vector<8x32xf32> to vector<8x8xf32>
    %62 = vector.shape_cast %58 : vector<8x8xf32> to vector<1x8x8xf32>
    %63 = vector.shape_cast %59 : vector<8x8xf32> to vector<1x8x8xf32>
    %64 = vector.shape_cast %60 : vector<8x8xf32> to vector<1x8x8xf32>
    %65 = vector.shape_cast %61 : vector<8x8xf32> to vector<1x8x8xf32>
    %66 = tpu.concatenate %62, %63, %64, %65 in 0 : vector<1x8x8xf32>, vector<1x8x8xf32>, vector<1x8x8xf32>, vector<1x8x8xf32> -> vector<4x8x8xf32>
    %67 = arith.truncf %66 : vector<4x8x8xf32> to vector<4x8x8xbf16>
    "tpu.trace_start"() <{level = 10 : i32, message = "hnd,hmd->hnm"}> : () -> ()
    %cst_14 = arith.constant dense<0.000000e+00> : vector<4x8x8xf32>
    %68 = tpu.matmul %47, %57, %cst_14 {dimension_numbers = #tpu.dot_dimension_numbers<[2], [2], [1], [1], [0, 0, 0, 1, 1, 1], [0], [0]>} : vector<4x8x8xbf16>, vector<4x8x8xbf16>, vector<4x8x8xf32> -> vector<4x8x8xf32>
    "tpu.trace_stop"() : () -> ()
    %cst_15 = arith.constant dense<0xFF800000> : vector<4x8xf32>
    %69 = vector.multi_reduction <maximumf>, %68, %cst_15 [2] : vector<4x8x8xf32> to vector<4x8xf32>
    %70 = vector.shape_cast %69 : vector<4x8xf32> to vector<4x8x1xf32>
    %71 = vector.broadcast %70 : vector<4x8x1xf32> to vector<4x8x8xf32>
    %72 = arith.subf %68, %71 : vector<4x8x8xf32>
    %73 = math.exp %72 : vector<4x8x8xf32>
    %cst_16 = arith.constant dense<0.000000e+00> : vector<4x8xf32>
    %74 = vector.multi_reduction <add>, %73, %cst_16 [2] : vector<4x8x8xf32> to vector<4x8xf32>
    %75 = vector.shape_cast %74 : vector<4x8xf32> to vector<4x8x1xf32>
    %76 = tpu.reciprocal %75 {approx = true} : vector<4x8x1xf32> -> vector<4x8x1xf32>
    %77 = vector.broadcast %76 : vector<4x8x1xf32> to vector<4x8x8xf32>
    %78 = arith.mulf %73, %77 : vector<4x8x8xf32>
    %79 = arith.truncf %78 : vector<4x8x8xf32> to vector<4x8x8xbf16>
    "tpu.trace_start"() <{level = 10 : i32, message = "hnm,hmd->hnd"}> : () -> ()
    %cst_17 = arith.constant dense<0.000000e+00> : vector<4x8x8xf32>
    %80 = tpu.matmul %79, %67, %cst_17 {dimension_numbers = #tpu.dot_dimension_numbers<[2], [1], [1], [2], [0, 0, 0, 1, 1, 2], [0], [0]>} : vector<4x8x8xbf16>, vector<4x8x8xbf16>, vector<4x8x8xf32> -> vector<4x8x8xf32>
    "tpu.trace_stop"() : () -> ()
    %81 = arith.truncf %80 : vector<4x8x8xf32> to vector<4x8x8xbf16>
    %c0_18 = arith.constant 0 : index
    %c0_19 = arith.constant 0 : index
    %c0_20 = arith.constant 0 : index
    %82 = vector.load %arg5[%c0_18, %c0_19, %c0_20] : memref<4x8x32xbf16, #tpu.memory_space<vmem>>, vector<4x8x32xbf16>
    "tpu.trace_start"() <{level = 10 : i32, message = "hnd,hdc->hnc"}> : () -> ()
    %cst_21 = arith.constant dense<0.000000e+00> : vector<4x8x32xf32>
    %83 = tpu.matmul %81, %82, %cst_21 {dimension_numbers = #tpu.dot_dimension_numbers<[2], [1], [1], [2], [0, 0, 0, 1, 1, 2], [0], [0]>} : vector<4x8x8xbf16>, vector<4x8x32xbf16>, vector<4x8x32xf32> -> vector<4x8x32xf32>
    "tpu.trace_stop"() : () -> ()
    %cst_22 = arith.constant dense<0.000000e+00> : vector<8x32xf32>
    %84 = vector.multi_reduction <add>, %83, %cst_22 [0] : vector<4x8x32xf32> to vector<8x32xf32>
    %c0_23 = arith.constant 0 : index
    %c0_24 = arith.constant 0 : index
    %85 = vector.load %arg6[%c0_23, %c0_24] : memref<1x32xf32, #tpu.memory_space<vmem>>, vector<1x32xf32>
    %86 = vector.shape_cast %85 : vector<1x32xf32> to vector<32xf32>
    %87 = vector.shape_cast %86 : vector<32xf32> to vector<1x32xf32>
    %88 = vector.broadcast %87 : vector<1x32xf32> to vector<8x32xf32>
    %89 = arith.addf %84, %88 : vector<8x32xf32>
    %90 = arith.addf %1, %89 : vector<8x32xf32>
    %c0_25 = arith.constant 0 : index
    %c0_26 = arith.constant 0 : index
    %91 = vector.load %arg7[%c0_25, %c0_26] : memref<1x32xf32, #tpu.memory_space<vmem>>, vector<1x32xf32>
    %92 = vector.shape_cast %91 : vector<1x32xf32> to vector<32xf32>
    %c0_27 = arith.constant 0 : index
    %c0_28 = arith.constant 0 : index
    %93 = vector.load %arg8[%c0_27, %c0_28] : memref<1x32xf32, #tpu.memory_space<vmem>>, vector<1x32xf32>
    %94 = vector.shape_cast %93 : vector<1x32xf32> to vector<32xf32>
    %cst_29 = arith.constant dense<0.000000e+00> : vector<8xf32>
    %95 = vector.multi_reduction <add>, %90, %cst_29 [1] : vector<8x32xf32> to vector<8xf32>
    %96 = vector.shape_cast %95 : vector<8xf32> to vector<8x1xf32>
    %cst_30 = arith.constant 3.200000e+01 : f32
    %97 = vector.broadcast %cst_30 : f32 to vector<8x1xf32>
    %98 = arith.divf %96, %97 : vector<8x1xf32>
    %99 = vector.broadcast %98 : vector<8x1xf32> to vector<8x32xf32>
    %100 = arith.subf %90, %99 : vector<8x32xf32>
    %101 = arith.mulf %100, %100 : vector<8x32xf32>
    %cst_31 = arith.constant dense<0.000000e+00> : vector<8xf32>
    %102 = vector.multi_reduction <add>, %101, %cst_31 [1] : vector<8x32xf32> to vector<8xf32>
    %103 = vector.shape_cast %102 : vector<8xf32> to vector<8x1xf32>
    %cst_32 = arith.constant 3.200000e+01 : f32
    %104 = vector.broadcast %cst_32 : f32 to vector<8x1xf32>
    %105 = arith.divf %103, %104 : vector<8x1xf32>
    %106 = vector.broadcast %98 : vector<8x1xf32> to vector<8x32xf32>
    %107 = arith.subf %90, %106 : vector<8x32xf32>
    %cst_33 = arith.constant 9.99999974E-6 : f32
    %108 = vector.broadcast %cst_33 : f32 to vector<8x1xf32>
    %109 = arith.addf %105, %108 : vector<8x1xf32>
    %110 = math.rsqrt %109 : vector<8x1xf32>
    %111 = vector.broadcast %110 : vector<8x1xf32> to vector<8x32xf32>
    %112 = arith.mulf %107, %111 : vector<8x32xf32>
    %113 = vector.shape_cast %92 : vector<32xf32> to vector<1x32xf32>
    %114 = vector.broadcast %113 : vector<1x32xf32> to vector<8x32xf32>
    %115 = arith.mulf %112, %114 : vector<8x32xf32>
    %116 = vector.shape_cast %94 : vector<32xf32> to vector<1x32xf32>
    %117 = vector.broadcast %116 : vector<1x32xf32> to vector<8x32xf32>
    %118 = arith.addf %115, %117 : vector<8x32xf32>
    %119 = arith.truncf %118 : vector<8x32xf32> to vector<8x32xbf16>
    %c0_34 = arith.constant 0 : index
    %c0_35 = arith.constant 0 : index
    %120 = vector.load %arg9[%c0_34, %c0_35] : memref<32x128xbf16, #tpu.memory_space<vmem>>, vector<32x128xbf16>
    %cst_36 = arith.constant dense<0.000000e+00> : vector<8x128xf32>
    %121 = tpu.matmul %119, %120, %cst_36 {dimension_numbers = #tpu.dot_dimension_numbers<[1], [0], [0], [1], [0, 0, 1, 1], [], []>} : vector<8x32xbf16>, vector<32x128xbf16>, vector<8x128xf32> -> vector<8x128xf32>
    %c0_37 = arith.constant 0 : index
    %c0_38 = arith.constant 0 : index
    %122 = vector.load %arg10[%c0_37, %c0_38] : memref<1x128xf32, #tpu.memory_space<vmem>>, vector<1x128xf32>
    %123 = vector.shape_cast %122 : vector<1x128xf32> to vector<128xf32>
    %124 = vector.shape_cast %123 : vector<128xf32> to vector<1x128xf32>
    %125 = vector.broadcast %124 : vector<1x128xf32> to vector<8x128xf32>
    %126 = arith.addf %121, %125 : vector<8x128xf32>
    %cst_39 = arith.constant 5.000000e-01 : f32
    %127 = vector.broadcast %cst_39 : f32 to vector<8x128xf32>
    %128 = arith.mulf %127, %126 : vector<8x128xf32>
    %cst_40 = arith.constant 0.707106769 : f32
    %129 = vector.broadcast %cst_40 : f32 to vector<8x128xf32>
    %130 = arith.mulf %126, %129 : vector<8x128xf32>
    %131 = math.erf %130 : vector<8x128xf32>
    %cst_41 = arith.constant 1.000000e+00 : f32
    %132 = vector.broadcast %cst_41 : f32 to vector<8x128xf32>
    %133 = arith.addf %132, %131 : vector<8x128xf32>
    %134 = arith.mulf %128, %133 : vector<8x128xf32>
    %135 = arith.truncf %134 : vector<8x128xf32> to vector<8x128xbf16>
    %c0_42 = arith.constant 0 : index
    %c0_43 = arith.constant 0 : index
    %136 = vector.load %arg11[%c0_42, %c0_43] : memref<128x32xbf16, #tpu.memory_space<vmem>>, vector<128x32xbf16>
    %cst_44 = arith.constant dense<0.000000e+00> : vector<8x32xf32>
    %137 = tpu.matmul %135, %136, %cst_44 {dimension_numbers = #tpu.dot_dimension_numbers<[1], [0], [0], [1], [0, 0, 1, 1], [], []>} : vector<8x128xbf16>, vector<128x32xbf16>, vector<8x32xf32> -> vector<8x32xf32>
    %c0_45 = arith.constant 0 : index
    %c0_46 = arith.constant 0 : index
    %138 = vector.load %arg12[%c0_45, %c0_46] : memref<1x32xf32, #tpu.memory_space<vmem>>, vector<1x32xf32>
    %139 = vector.shape_cast %138 : vector<1x32xf32> to vector<32xf32>
    %140 = vector.shape_cast %139 : vector<32xf32> to vector<1x32xf32>
    %141 = vector.broadcast %140 : vector<1x32xf32> to vector<8x32xf32>
    %142 = arith.addf %137, %141 : vector<8x32xf32>
    %143 = arith.addf %90, %142 : vector<8x32xf32>
    %c0_47 = arith.constant 0 : index
    %c0_48 = arith.constant 0 : index
    %c0_49 = arith.constant 0 : index
    %144 = vector.load %arg13[%c0_47, %c0_48, %c0_49] : memref<1x8x32xf32, #tpu.memory_space<vmem>>, vector<1x8x32xf32>
    %145 = vector.shape_cast %144 : vector<1x8x32xf32> to vector<8x32xf32>
    %146 = vector.shape_cast %143 : vector<8x32xf32> to vector<1x8x32xf32>
    tpu.vector_store %arg13[%c0_47, %c0_48, %c0_49], %146 {strides = array<i32>} : memref<1x8x32xf32, #tpu.memory_space<vmem>>, vector<1x8x32xf32>,
    return
  }
  func.func @transform_0(%arg0: i32) -> (i32, i32, i32) {
    %c0_i32 = arith.constant 0 : i32
    %c0_i32_0 = arith.constant 0 : i32
    %c0_i32_1 = arith.constant 0 : i32
    return %arg0, %c0_i32, %c0_i32_0 : i32, i32, i32
  }
  func.func @transform_1(%arg0: i32) -> (i32, i32) {
    %c0_i32 = arith.constant 0 : i32
    %c0_i32_0 = arith.constant 0 : i32
    %c0_i32_1 = arith.constant 0 : i32
    return %c0_i32, %c0_i32_0 : i32, i32
  }
  func.func @transform_2(%arg0: i32) -> (i32, i32) {
    %c0_i32 = arith.constant 0 : i32
    %c0_i32_0 = arith.constant 0 : i32
    %c0_i32_1 = arith.constant 0 : i32
    return %c0_i32, %c0_i32_0 : i32, i32
  }
  func.func @transform_3(%arg0: i32) -> (i32, i32) {
    %c0_i32 = arith.constant 0 : i32
    %c0_i32_0 = arith.constant 0 : i32
    %c0_i32_1 = arith.constant 0 : i32
    return %c0_i32, %c0_i32_0 : i32, i32
  }
  func.func @transform_4(%arg0: i32) -> (i32, i32, i32) {
    %c0_i32 = arith.constant 0 : i32
    %c0_i32_0 = arith.constant 0 : i32
    %c0_i32_1 = arith.constant 0 : i32
    %c0_i32_2 = arith.constant 0 : i32
    return %c0_i32, %c0_i32_0, %c0_i32_1 : i32, i32, i32
  }
  func.func @transform_5(%arg0: i32) -> (i32, i32) {
    %c0_i32 = arith.constant 0 : i32
    %c0_i32_0 = arith.constant 0 : i32
    %c0_i32_1 = arith.constant 0 : i32
    return %c0_i32, %c0_i32_0 : i32, i32
  }
  func.func @transform_6(%arg0: i32) -> (i32, i32) {
    %c0_i32 = arith.constant 0 : i32
    %c0_i32_0 = arith.constant 0 : i32
    %c0_i32_1 = arith.constant 0 : i32
    return %c0_i32, %c0_i32_0 : i32, i32
  }
  func.func @transform_7(%arg0: i32) -> (i32, i32) {
    %c0_i32 = arith.constant 0 : i32
    %c0_i32_0 = arith.constant 0 : i32
    %c0_i32_1 = arith.constant 0 : i32
    return %c0_i32, %c0_i32_0 : i32, i32
  }
  func.func @transform_8(%arg0: i32) -> (i32, i32) {
    %c0_i32 = arith.constant 0 : i32
    %c0_i32_0 = arith.constant 0 : i32
    %c0_i32_1 = arith.constant 0 : i32
    return %c0_i32, %c0_i32_0 : i32, i32
  }
  func.func @transform_9(%arg0: i32) -> (i32, i32) {
    %c0_i32 = arith.constant 0 : i32
    %c0_i32_0 = arith.constant 0 : i32
    %c0_i32_1 = arith.constant 0 : i32
    return %c0_i32, %c0_i32_0 : i32, i32
  }
  func.func @transform_10(%arg0: i32) -> (i32, i32) {
    %c0_i32 = arith.constant 0 : i32
    %c0_i32_0 = arith.constant 0 : i32
    %c0_i32_1 = arith.constant 0 : i32
    return %c0_i32, %c0_i32_0 : i32, i32
  }
  func.func @transform_11(%arg0: i32) -> (i32, i32) {
    %c0_i32 = arith.constant 0 : i32
    %c0_i32_0 = arith.constant 0 : i32
    %c0_i32_1 = arith.constant 0 : i32
    return %c0_i32, %c0_i32_0 : i32, i32
  }
  func.func @transform_12(%arg0: i32) -> (i32, i32, i32) {
    %c0_i32 = arith.constant 0 : i32
    %c0_i32_0 = arith.constant 0 : i32
    %c0_i32_1 = arith.constant 0 : i32
    return %arg0, %c0_i32, %c0_i32_0 : i32, i32, i32
  }
}

module attributes {stable_mosaic.version = 11 : i64} {
  func.func @_block_kernel_safe(%arg0: i32, %arg1: memref<1x8x32xf32, #tpu.memory_space<vmem>>, %arg2: memref<1x32xf32, #tpu.memory_space<vmem>>, %arg3: memref<1x32xf32, #tpu.memory_space<vmem>>, %arg4: memref<32x96xf32, #tpu.memory_space<vmem>>, %arg5: memref<32x32xf32, #tpu.memory_space<vmem>>, %arg6: memref<1x32xf32, #tpu.memory_space<vmem>>, %arg7: memref<1x32xf32, #tpu.memory_space<vmem>>, %arg8: memref<1x32xf32, #tpu.memory_space<vmem>>, %arg9: memref<32x128xf32, #tpu.memory_space<vmem>>, %arg10: memref<1x128xf32, #tpu.memory_space<vmem>>, %arg11: memref<128x32xf32, #tpu.memory_space<vmem>>, %arg12: memref<1x32xf32, #tpu.memory_space<vmem>>, %arg13: memref<1x8x32xf32, #tpu.memory_space<vmem>>) attributes {dimension_semantics = [#tpu.dimension_semantics<parallel>], iteration_bounds = array<i64: 2>, scalar_prefetch = 0 : i64, scratch_operands = 0 : i64, tpu.core_type = #tpu.core_type<tc>, window_params = [{transform_indices = @transform_0, window_bounds = array<i64: 1, 8, 32>}, {pipeline_mode = #tpu.pipeline_mode<synchronous>, transform_indices = @transform_1, window_bounds = array<i64: 1, 32>}, {pipeline_mode = #tpu.pipeline_mode<synchronous>, transform_indices = @transform_2, window_bounds = array<i64: 1, 32>}, {pipeline_mode = #tpu.pipeline_mode<synchronous>, transform_indices = @transform_3, window_bounds = array<i64: 32, 96>}, {pipeline_mode = #tpu.pipeline_mode<synchronous>, transform_indices = @transform_4, window_bounds = array<i64: 32, 32>}, {pipeline_mode = #tpu.pipeline_mode<synchronous>, transform_indices = @transform_5, window_bounds = array<i64: 1, 32>}, {pipeline_mode = #tpu.pipeline_mode<synchronous>, transform_indices = @transform_6, window_bounds = array<i64: 1, 32>}, {pipeline_mode = #tpu.pipeline_mode<synchronous>, transform_indices = @transform_7, window_bounds = array<i64: 1, 32>}, {pipeline_mode = #tpu.pipeline_mode<synchronous>, transform_indices = @transform_8, window_bounds = array<i64: 32, 128>}, {pipeline_mode = #tpu.pipeline_mode<synchronous>, transform_indices = @transform_9, window_bounds = array<i64: 1, 128>}, {pipeline_mode = #tpu.pipeline_mode<synchronous>, transform_indices = @transform_10, window_bounds = array<i64: 128, 32>}, {pipeline_mode = #tpu.pipeline_mode<synchronous>, transform_indices = @transform_11, window_bounds = array<i64: 1, 32>}, {transform_indices = @transform_12, window_bounds = array<i64: 1, 8, 32>}]} {
    %c0 = arith.constant 0 : index
    %c0_0 = arith.constant 0 : index
    %c0_1 = arith.constant 0 : index
    %0 = vector.load %arg1[%c0, %c0_0, %c0_1] : memref<1x8x32xf32, #tpu.memory_space<vmem>>, vector<1x8x32xf32>
    %1 = vector.shape_cast %0 : vector<1x8x32xf32> to vector<8x32xf32>
    %c0_2 = arith.constant 0 : index
    %c0_3 = arith.constant 0 : index
    %2 = vector.load %arg2[%c0_2, %c0_3] : memref<1x32xf32, #tpu.memory_space<vmem>>, vector<1x32xf32>
    %3 = vector.shape_cast %2 : vector<1x32xf32> to vector<32xf32>
    %c0_4 = arith.constant 0 : index
    %c0_5 = arith.constant 0 : index
    %4 = vector.load %arg3[%c0_4, %c0_5] : memref<1x32xf32, #tpu.memory_space<vmem>>, vector<1x32xf32>
    %5 = vector.shape_cast %4 : vector<1x32xf32> to vector<32xf32>
    %cst = arith.constant dense<0.000000e+00> : vector<8xf32>
    %6 = vector.multi_reduction <add>, %1, %cst [1] : vector<8x32xf32> to vector<8xf32>
    %7 = vector.shape_cast %6 : vector<8xf32> to vector<8x1xf32>
    %cst_6 = arith.constant 3.200000e+01 : f32
    %8 = vector.broadcast %cst_6 : f32 to vector<8x1xf32>
    %9 = arith.divf %7, %8 : vector<8x1xf32>
    %10 = vector.broadcast %9 : vector<8x1xf32> to vector<8x32xf32>
    %11 = arith.subf %1, %10 : vector<8x32xf32>
    %12 = arith.mulf %11, %11 : vector<8x32xf32>
    %cst_7 = arith.constant dense<0.000000e+00> : vector<8xf32>
    %13 = vector.multi_reduction <add>, %12, %cst_7 [1] : vector<8x32xf32> to vector<8xf32>
    %14 = vector.shape_cast %13 : vector<8xf32> to vector<8x1xf32>
    %cst_8 = arith.constant 3.200000e+01 : f32
    %15 = vector.broadcast %cst_8 : f32 to vector<8x1xf32>
    %16 = arith.divf %14, %15 : vector<8x1xf32>
    %17 = vector.broadcast %9 : vector<8x1xf32> to vector<8x32xf32>
    %18 = arith.subf %1, %17 : vector<8x32xf32>
    %cst_9 = arith.constant 9.99999974E-6 : f32
    %19 = vector.broadcast %cst_9 : f32 to vector<8x1xf32>
    %20 = arith.addf %16, %19 : vector<8x1xf32>
    %21 = math.rsqrt %20 : vector<8x1xf32>
    %22 = vector.broadcast %21 : vector<8x1xf32> to vector<8x32xf32>
    %23 = arith.mulf %18, %22 : vector<8x32xf32>
    %24 = vector.shape_cast %3 : vector<32xf32> to vector<1x32xf32>
    %25 = vector.broadcast %24 : vector<1x32xf32> to vector<8x32xf32>
    %26 = arith.mulf %23, %25 : vector<8x32xf32>
    %27 = vector.shape_cast %5 : vector<32xf32> to vector<1x32xf32>
    %28 = vector.broadcast %27 : vector<1x32xf32> to vector<8x32xf32>
    %29 = arith.addf %26, %28 : vector<8x32xf32>
    %c0_10 = arith.constant 0 : index
    %c0_11 = arith.constant 0 : index
    %30 = vector.load %arg4[%c0_10, %c0_11] : memref<32x96xf32, #tpu.memory_space<vmem>>, vector<32x96xf32>
    %cst_12 = arith.constant dense<0.000000e+00> : vector<8x96xf32>
    %31 = tpu.matmul %29, %30, %cst_12 {dimension_numbers = #tpu.dot_dimension_numbers<[1], [0], [0], [1], [0, 0, 1, 1], [], []>} : vector<8x32xf32>, vector<32x96xf32>, vector<8x96xf32> -> vector<8x96xf32>
    %32 = vector.extract_strided_slice %31 {offsets = [0, 0], sizes = [8, 32], strides = [1, 1]} : vector<8x96xf32> to vector<8x32xf32>
    %33 = vector.extract_strided_slice %31 {offsets = [0, 32], sizes = [8, 32], strides = [1, 1]} : vector<8x96xf32> to vector<8x32xf32>
    %34 = vector.extract_strided_slice %31 {offsets = [0, 64], sizes = [8, 32], strides = [1, 1]} : vector<8x96xf32> to vector<8x32xf32>
    %35 = vector.extract_strided_slice %32 {offsets = [0, 0], sizes = [8, 8], strides = [1, 1]} : vector<8x32xf32> to vector<8x8xf32>
    %36 = vector.extract_strided_slice %33 {offsets = [0, 0], sizes = [8, 8], strides = [1, 1]} : vector<8x32xf32> to vector<8x8xf32>
    %37 = tpu.transpose %36, [1, 0] : vector<8x8xf32> -> vector<8x8xf32>
    %cst_13 = arith.constant dense<0.000000e+00> : vector<8x8xf32>
    %38 = tpu.matmul %35, %37, %cst_13 {dimension_numbers = #tpu.dot_dimension_numbers<[1], [0], [0], [1], [0, 0, 1, 1], [], []>} : vector<8x8xf32>, vector<8x8xf32>, vector<8x8xf32> -> vector<8x8xf32>
    %cst_14 = arith.constant 0.353553385 : f32
    %39 = vector.broadcast %cst_14 : f32 to vector<8x8xf32>
    %40 = arith.mulf %38, %39 : vector<8x8xf32>
    %cst_15 = arith.constant dense<0xFF800000> : vector<8xf32>
    %41 = vector.multi_reduction <maximumf>, %40, %cst_15 [1] : vector<8x8xf32> to vector<8xf32>
    %42 = vector.shape_cast %41 : vector<8xf32> to vector<8x1xf32>
    %43 = vector.broadcast %42 : vector<8x1xf32> to vector<8x8xf32>
    %44 = arith.subf %40, %43 : vector<8x8xf32>
    %45 = math.exp %44 : vector<8x8xf32>
    %cst_16 = arith.constant dense<0.000000e+00> : vector<8xf32>
    %46 = vector.multi_reduction <add>, %45, %cst_16 [1] : vector<8x8xf32> to vector<8xf32>
    %47 = vector.shape_cast %46 : vector<8xf32> to vector<8x1xf32>
    %48 = vector.broadcast %47 : vector<8x1xf32> to vector<8x8xf32>
    %49 = arith.divf %45, %48 : vector<8x8xf32>
    %50 = vector.extract_strided_slice %34 {offsets = [0, 0], sizes = [8, 8], strides = [1, 1]} : vector<8x32xf32> to vector<8x8xf32>
    %cst_17 = arith.constant dense<0.000000e+00> : vector<8x8xf32>
    %51 = tpu.matmul %49, %50, %cst_17 {dimension_numbers = #tpu.dot_dimension_numbers<[1], [0], [0], [1], [0, 0, 1, 1], [], []>} : vector<8x8xf32>, vector<8x8xf32>, vector<8x8xf32> -> vector<8x8xf32>
    %52 = vector.extract_strided_slice %32 {offsets = [0, 8], sizes = [8, 8], strides = [1, 1]} : vector<8x32xf32> to vector<8x8xf32>
    %53 = vector.extract_strided_slice %33 {offsets = [0, 8], sizes = [8, 8], strides = [1, 1]} : vector<8x32xf32> to vector<8x8xf32>
    %54 = tpu.transpose %53, [1, 0] : vector<8x8xf32> -> vector<8x8xf32>
    %cst_18 = arith.constant dense<0.000000e+00> : vector<8x8xf32>
    %55 = tpu.matmul %52, %54, %cst_18 {dimension_numbers = #tpu.dot_dimension_numbers<[1], [0], [0], [1], [0, 0, 1, 1], [], []>} : vector<8x8xf32>, vector<8x8xf32>, vector<8x8xf32> -> vector<8x8xf32>
    %cst_19 = arith.constant 0.353553385 : f32
    %56 = vector.broadcast %cst_19 : f32 to vector<8x8xf32>
    %57 = arith.mulf %55, %56 : vector<8x8xf32>
    %cst_20 = arith.constant dense<0xFF800000> : vector<8xf32>
    %58 = vector.multi_reduction <maximumf>, %57, %cst_20 [1] : vector<8x8xf32> to vector<8xf32>
    %59 = vector.shape_cast %58 : vector<8xf32> to vector<8x1xf32>
    %60 = vector.broadcast %59 : vector<8x1xf32> to vector<8x8xf32>
    %61 = arith.subf %57, %60 : vector<8x8xf32>
    %62 = math.exp %61 : vector<8x8xf32>
    %cst_21 = arith.constant dense<0.000000e+00> : vector<8xf32>
    %63 = vector.multi_reduction <add>, %62, %cst_21 [1] : vector<8x8xf32> to vector<8xf32>
    %64 = vector.shape_cast %63 : vector<8xf32> to vector<8x1xf32>
    %65 = vector.broadcast %64 : vector<8x1xf32> to vector<8x8xf32>
    %66 = arith.divf %62, %65 : vector<8x8xf32>
    %67 = vector.extract_strided_slice %34 {offsets = [0, 8], sizes = [8, 8], strides = [1, 1]} : vector<8x32xf32> to vector<8x8xf32>
    %cst_22 = arith.constant dense<0.000000e+00> : vector<8x8xf32>
    %68 = tpu.matmul %66, %67, %cst_22 {dimension_numbers = #tpu.dot_dimension_numbers<[1], [0], [0], [1], [0, 0, 1, 1], [], []>} : vector<8x8xf32>, vector<8x8xf32>, vector<8x8xf32> -> vector<8x8xf32>
    %69 = vector.extract_strided_slice %32 {offsets = [0, 16], sizes = [8, 8], strides = [1, 1]} : vector<8x32xf32> to vector<8x8xf32>
    %70 = vector.extract_strided_slice %33 {offsets = [0, 16], sizes = [8, 8], strides = [1, 1]} : vector<8x32xf32> to vector<8x8xf32>
    %71 = tpu.transpose %70, [1, 0] : vector<8x8xf32> -> vector<8x8xf32>
    %cst_23 = arith.constant dense<0.000000e+00> : vector<8x8xf32>
    %72 = tpu.matmul %69, %71, %cst_23 {dimension_numbers = #tpu.dot_dimension_numbers<[1], [0], [0], [1], [0, 0, 1, 1], [], []>} : vector<8x8xf32>, vector<8x8xf32>, vector<8x8xf32> -> vector<8x8xf32>
    %cst_24 = arith.constant 0.353553385 : f32
    %73 = vector.broadcast %cst_24 : f32 to vector<8x8xf32>
    %74 = arith.mulf %72, %73 : vector<8x8xf32>
    %cst_25 = arith.constant dense<0xFF800000> : vector<8xf32>
    %75 = vector.multi_reduction <maximumf>, %74, %cst_25 [1] : vector<8x8xf32> to vector<8xf32>
    %76 = vector.shape_cast %75 : vector<8xf32> to vector<8x1xf32>
    %77 = vector.broadcast %76 : vector<8x1xf32> to vector<8x8xf32>
    %78 = arith.subf %74, %77 : vector<8x8xf32>
    %79 = math.exp %78 : vector<8x8xf32>
    %cst_26 = arith.constant dense<0.000000e+00> : vector<8xf32>
    %80 = vector.multi_reduction <add>, %79, %cst_26 [1] : vector<8x8xf32> to vector<8xf32>
    %81 = vector.shape_cast %80 : vector<8xf32> to vector<8x1xf32>
    %82 = vector.broadcast %81 : vector<8x1xf32> to vector<8x8xf32>
    %83 = arith.divf %79, %82 : vector<8x8xf32>
    %84 = vector.extract_strided_slice %34 {offsets = [0, 16], sizes = [8, 8], strides = [1, 1]} : vector<8x32xf32> to vector<8x8xf32>
    %cst_27 = arith.constant dense<0.000000e+00> : vector<8x8xf32>
    %85 = tpu.matmul %83, %84, %cst_27 {dimension_numbers = #tpu.dot_dimension_numbers<[1], [0], [0], [1], [0, 0, 1, 1], [], []>} : vector<8x8xf32>, vector<8x8xf32>, vector<8x8xf32> -> vector<8x8xf32>
    %86 = vector.extract_strided_slice %32 {offsets = [0, 24], sizes = [8, 8], strides = [1, 1]} : vector<8x32xf32> to vector<8x8xf32>
    %87 = vector.extract_strided_slice %33 {offsets = [0, 24], sizes = [8, 8], strides = [1, 1]} : vector<8x32xf32> to vector<8x8xf32>
    %88 = tpu.transpose %87, [1, 0] : vector<8x8xf32> -> vector<8x8xf32>
    %cst_28 = arith.constant dense<0.000000e+00> : vector<8x8xf32>
    %89 = tpu.matmul %86, %88, %cst_28 {dimension_numbers = #tpu.dot_dimension_numbers<[1], [0], [0], [1], [0, 0, 1, 1], [], []>} : vector<8x8xf32>, vector<8x8xf32>, vector<8x8xf32> -> vector<8x8xf32>
    %cst_29 = arith.constant 0.353553385 : f32
    %90 = vector.broadcast %cst_29 : f32 to vector<8x8xf32>
    %91 = arith.mulf %89, %90 : vector<8x8xf32>
    %cst_30 = arith.constant dense<0xFF800000> : vector<8xf32>
    %92 = vector.multi_reduction <maximumf>, %91, %cst_30 [1] : vector<8x8xf32> to vector<8xf32>
    %93 = vector.shape_cast %92 : vector<8xf32> to vector<8x1xf32>
    %94 = vector.broadcast %93 : vector<8x1xf32> to vector<8x8xf32>
    %95 = arith.subf %91, %94 : vector<8x8xf32>
    %96 = math.exp %95 : vector<8x8xf32>
    %cst_31 = arith.constant dense<0.000000e+00> : vector<8xf32>
    %97 = vector.multi_reduction <add>, %96, %cst_31 [1] : vector<8x8xf32> to vector<8xf32>
    %98 = vector.shape_cast %97 : vector<8xf32> to vector<8x1xf32>
    %99 = vector.broadcast %98 : vector<8x1xf32> to vector<8x8xf32>
    %100 = arith.divf %96, %99 : vector<8x8xf32>
    %101 = vector.extract_strided_slice %34 {offsets = [0, 24], sizes = [8, 8], strides = [1, 1]} : vector<8x32xf32> to vector<8x8xf32>
    %cst_32 = arith.constant dense<0.000000e+00> : vector<8x8xf32>
    %102 = tpu.matmul %100, %101, %cst_32 {dimension_numbers = #tpu.dot_dimension_numbers<[1], [0], [0], [1], [0, 0, 1, 1], [], []>} : vector<8x8xf32>, vector<8x8xf32>, vector<8x8xf32> -> vector<8x8xf32>
    %103 = tpu.concatenate %51, %68, %85, %102 in 1 : vector<8x8xf32>, vector<8x8xf32>, vector<8x8xf32>, vector<8x8xf32> -> vector<8x32xf32>
    %c0_33 = arith.constant 0 : index
    %c0_34 = arith.constant 0 : index
    %104 = vector.load %arg5[%c0_33, %c0_34] : memref<32x32xf32, #tpu.memory_space<vmem>>, vector<32x32xf32>
    %cst_35 = arith.constant dense<0.000000e+00> : vector<8x32xf32>
    %105 = tpu.matmul %103, %104, %cst_35 {dimension_numbers = #tpu.dot_dimension_numbers<[1], [0], [0], [1], [0, 0, 1, 1], [], []>} : vector<8x32xf32>, vector<32x32xf32>, vector<8x32xf32> -> vector<8x32xf32>
    %c0_36 = arith.constant 0 : index
    %c0_37 = arith.constant 0 : index
    %106 = vector.load %arg6[%c0_36, %c0_37] : memref<1x32xf32, #tpu.memory_space<vmem>>, vector<1x32xf32>
    %107 = vector.shape_cast %106 : vector<1x32xf32> to vector<32xf32>
    %108 = vector.shape_cast %107 : vector<32xf32> to vector<1x32xf32>
    %109 = vector.broadcast %108 : vector<1x32xf32> to vector<8x32xf32>
    %110 = arith.addf %105, %109 : vector<8x32xf32>
    %111 = arith.addf %1, %110 : vector<8x32xf32>
    %c0_38 = arith.constant 0 : index
    %c0_39 = arith.constant 0 : index
    %112 = vector.load %arg7[%c0_38, %c0_39] : memref<1x32xf32, #tpu.memory_space<vmem>>, vector<1x32xf32>
    %113 = vector.shape_cast %112 : vector<1x32xf32> to vector<32xf32>
    %c0_40 = arith.constant 0 : index
    %c0_41 = arith.constant 0 : index
    %114 = vector.load %arg8[%c0_40, %c0_41] : memref<1x32xf32, #tpu.memory_space<vmem>>, vector<1x32xf32>
    %115 = vector.shape_cast %114 : vector<1x32xf32> to vector<32xf32>
    %cst_42 = arith.constant dense<0.000000e+00> : vector<8xf32>
    %116 = vector.multi_reduction <add>, %111, %cst_42 [1] : vector<8x32xf32> to vector<8xf32>
    %117 = vector.shape_cast %116 : vector<8xf32> to vector<8x1xf32>
    %cst_43 = arith.constant 3.200000e+01 : f32
    %118 = vector.broadcast %cst_43 : f32 to vector<8x1xf32>
    %119 = arith.divf %117, %118 : vector<8x1xf32>
    %120 = vector.broadcast %119 : vector<8x1xf32> to vector<8x32xf32>
    %121 = arith.subf %111, %120 : vector<8x32xf32>
    %122 = arith.mulf %121, %121 : vector<8x32xf32>
    %cst_44 = arith.constant dense<0.000000e+00> : vector<8xf32>
    %123 = vector.multi_reduction <add>, %122, %cst_44 [1] : vector<8x32xf32> to vector<8xf32>
    %124 = vector.shape_cast %123 : vector<8xf32> to vector<8x1xf32>
    %cst_45 = arith.constant 3.200000e+01 : f32
    %125 = vector.broadcast %cst_45 : f32 to vector<8x1xf32>
    %126 = arith.divf %124, %125 : vector<8x1xf32>
    %127 = vector.broadcast %119 : vector<8x1xf32> to vector<8x32xf32>
    %128 = arith.subf %111, %127 : vector<8x32xf32>
    %cst_46 = arith.constant 9.99999974E-6 : f32
    %129 = vector.broadcast %cst_46 : f32 to vector<8x1xf32>
    %130 = arith.addf %126, %129 : vector<8x1xf32>
    %131 = math.rsqrt %130 : vector<8x1xf32>
    %132 = vector.broadcast %131 : vector<8x1xf32> to vector<8x32xf32>
    %133 = arith.mulf %128, %132 : vector<8x32xf32>
    %134 = vector.shape_cast %113 : vector<32xf32> to vector<1x32xf32>
    %135 = vector.broadcast %134 : vector<1x32xf32> to vector<8x32xf32>
    %136 = arith.mulf %133, %135 : vector<8x32xf32>
    %137 = vector.shape_cast %115 : vector<32xf32> to vector<1x32xf32>
    %138 = vector.broadcast %137 : vector<1x32xf32> to vector<8x32xf32>
    %139 = arith.addf %136, %138 : vector<8x32xf32>
    %c0_47 = arith.constant 0 : index
    %c0_48 = arith.constant 0 : index
    %140 = vector.load %arg9[%c0_47, %c0_48] : memref<32x128xf32, #tpu.memory_space<vmem>>, vector<32x128xf32>
    %cst_49 = arith.constant dense<0.000000e+00> : vector<8x128xf32>
    %141 = tpu.matmul %139, %140, %cst_49 {dimension_numbers = #tpu.dot_dimension_numbers<[1], [0], [0], [1], [0, 0, 1, 1], [], []>} : vector<8x32xf32>, vector<32x128xf32>, vector<8x128xf32> -> vector<8x128xf32>
    %c0_50 = arith.constant 0 : index
    %c0_51 = arith.constant 0 : index
    %142 = vector.load %arg10[%c0_50, %c0_51] : memref<1x128xf32, #tpu.memory_space<vmem>>, vector<1x128xf32>
    %143 = vector.shape_cast %142 : vector<1x128xf32> to vector<128xf32>
    %144 = vector.shape_cast %143 : vector<128xf32> to vector<1x128xf32>
    %145 = vector.broadcast %144 : vector<1x128xf32> to vector<8x128xf32>
    %146 = arith.addf %141, %145 : vector<8x128xf32>
    %cst_52 = arith.constant 5.000000e-01 : f32
    %147 = vector.broadcast %cst_52 : f32 to vector<8x128xf32>
    %148 = arith.mulf %147, %146 : vector<8x128xf32>
    %cst_53 = arith.constant 0.707106769 : f32
    %149 = vector.broadcast %cst_53 : f32 to vector<8x128xf32>
    %150 = arith.mulf %146, %149 : vector<8x128xf32>
    %151 = math.erf %150 : vector<8x128xf32>
    %cst_54 = arith.constant 1.000000e+00 : f32
    %152 = vector.broadcast %cst_54 : f32 to vector<8x128xf32>
    %153 = arith.addf %152, %151 : vector<8x128xf32>
    %154 = arith.mulf %148, %153 : vector<8x128xf32>
    %c0_55 = arith.constant 0 : index
    %c0_56 = arith.constant 0 : index
    %155 = vector.load %arg11[%c0_55, %c0_56] : memref<128x32xf32, #tpu.memory_space<vmem>>, vector<128x32xf32>
    %cst_57 = arith.constant dense<0.000000e+00> : vector<8x32xf32>
    %156 = tpu.matmul %154, %155, %cst_57 {dimension_numbers = #tpu.dot_dimension_numbers<[1], [0], [0], [1], [0, 0, 1, 1], [], []>} : vector<8x128xf32>, vector<128x32xf32>, vector<8x32xf32> -> vector<8x32xf32>
    %c0_58 = arith.constant 0 : index
    %c0_59 = arith.constant 0 : index
    %157 = vector.load %arg12[%c0_58, %c0_59] : memref<1x32xf32, #tpu.memory_space<vmem>>, vector<1x32xf32>
    %158 = vector.shape_cast %157 : vector<1x32xf32> to vector<32xf32>
    %159 = vector.shape_cast %158 : vector<32xf32> to vector<1x32xf32>
    %160 = vector.broadcast %159 : vector<1x32xf32> to vector<8x32xf32>
    %161 = arith.addf %156, %160 : vector<8x32xf32>
    %162 = arith.addf %111, %161 : vector<8x32xf32>
    %c0_60 = arith.constant 0 : index
    %c0_61 = arith.constant 0 : index
    %c0_62 = arith.constant 0 : index
    %163 = vector.load %arg13[%c0_60, %c0_61, %c0_62] : memref<1x8x32xf32, #tpu.memory_space<vmem>>, vector<1x8x32xf32>
    %164 = vector.shape_cast %163 : vector<1x8x32xf32> to vector<8x32xf32>
    %165 = vector.shape_cast %162 : vector<8x32xf32> to vector<1x8x32xf32>
    tpu.vector_store %arg13[%c0_60, %c0_61, %c0_62], %165 {strides = array<i32>} : memref<1x8x32xf32, #tpu.memory_space<vmem>>, vector<1x8x32xf32>,
    return
  }
  func.func @transform_0(%arg0: i32) -> (i32, i32, i32) {
    %c0_i32 = arith.constant 0 : i32
    %c0_i32_0 = arith.constant 0 : i32
    %c0_i32_1 = arith.constant 0 : i32
    return %arg0, %c0_i32, %c0_i32_0 : i32, i32, i32
  }
  func.func @transform_1(%arg0: i32) -> (i32, i32) {
    %c0_i32 = arith.constant 0 : i32
    %c0_i32_0 = arith.constant 0 : i32
    %c0_i32_1 = arith.constant 0 : i32
    return %c0_i32, %c0_i32_0 : i32, i32
  }
  func.func @transform_2(%arg0: i32) -> (i32, i32) {
    %c0_i32 = arith.constant 0 : i32
    %c0_i32_0 = arith.constant 0 : i32
    %c0_i32_1 = arith.constant 0 : i32
    return %c0_i32, %c0_i32_0 : i32, i32
  }
  func.func @transform_3(%arg0: i32) -> (i32, i32) {
    %c0_i32 = arith.constant 0 : i32
    %c0_i32_0 = arith.constant 0 : i32
    %c0_i32_1 = arith.constant 0 : i32
    return %c0_i32, %c0_i32_0 : i32, i32
  }
  func.func @transform_4(%arg0: i32) -> (i32, i32) {
    %c0_i32 = arith.constant 0 : i32
    %c0_i32_0 = arith.constant 0 : i32
    %c0_i32_1 = arith.constant 0 : i32
    return %c0_i32, %c0_i32_0 : i32, i32
  }
  func.func @transform_5(%arg0: i32) -> (i32, i32) {
    %c0_i32 = arith.constant 0 : i32
    %c0_i32_0 = arith.constant 0 : i32
    %c0_i32_1 = arith.constant 0 : i32
    return %c0_i32, %c0_i32_0 : i32, i32
  }
  func.func @transform_6(%arg0: i32) -> (i32, i32) {
    %c0_i32 = arith.constant 0 : i32
    %c0_i32_0 = arith.constant 0 : i32
    %c0_i32_1 = arith.constant 0 : i32
    return %c0_i32, %c0_i32_0 : i32, i32
  }
  func.func @transform_7(%arg0: i32) -> (i32, i32) {
    %c0_i32 = arith.constant 0 : i32
    %c0_i32_0 = arith.constant 0 : i32
    %c0_i32_1 = arith.constant 0 : i32
    return %c0_i32, %c0_i32_0 : i32, i32
  }
  func.func @transform_8(%arg0: i32) -> (i32, i32) {
    %c0_i32 = arith.constant 0 : i32
    %c0_i32_0 = arith.constant 0 : i32
    %c0_i32_1 = arith.constant 0 : i32
    return %c0_i32, %c0_i32_0 : i32, i32
  }
  func.func @transform_9(%arg0: i32) -> (i32, i32) {
    %c0_i32 = arith.constant 0 : i32
    %c0_i32_0 = arith.constant 0 : i32
    %c0_i32_1 = arith.constant 0 : i32
    return %c0_i32, %c0_i32_0 : i32, i32
  }
  func.func @transform_10(%arg0: i32) -> (i32, i32) {
    %c0_i32 = arith.constant 0 : i32
    %c0_i32_0 = arith.constant 0 : i32
    %c0_i32_1 = arith.constant 0 : i32
    return %c0_i32, %c0_i32_0 : i32, i32
  }
  func.func @transform_11(%arg0: i32) -> (i32, i32) {
    %c0_i32 = arith.constant 0 : i32
    %c0_i32_0 = arith.constant 0 : i32
    %c0_i32_1 = arith.constant 0 : i32
    return %c0_i32, %c0_i32_0 : i32, i32
  }
  func.func @transform_12(%arg0: i32) -> (i32, i32, i32) {
    %c0_i32 = arith.constant 0 : i32
    %c0_i32_0 = arith.constant 0 : i32
    %c0_i32_1 = arith.constant 0 : i32
    return %arg0, %c0_i32, %c0_i32_0 : i32, i32, i32
  }
}

</mosaic_0001>

<llo_original>
// kernel: tpu_custom_call.1
$region0: #{tpu_custom_call.1}
  #allocation0 [shape = 'u32[]', space=smem, size = 0x4, offset = 0x4, fixed_abs, tag = 'smem constant byte address 0x4 - core index']
  #allocation1 [shape = 'u32[144,128]{1,0:T(1,128)}', space=vmem, size = 0x12000, scoped, tag = 'internal scratch']
  %s0 = inlined_call_operand.vmem [shape: f32[2,8,32], index: 0, kind: input, shape index: {}]
  %s1 = inlined_call_operand.vmem [shape: f32[1,32], index: 1, kind: input, shape index: {}]
  %s2 = inlined_call_operand.vmem [shape: f32[1,32], index: 2, kind: input, shape index: {}]
  %s3 = inlined_call_operand.vmem [shape: bf16[32,96], index: 3, kind: input, shape index: {}]
  %s4 = inlined_call_operand.vmem [shape: bf16[4,8,32], index: 4, kind: input, shape index: {}]
  %s5 = inlined_call_operand.vmem [shape: f32[1,32], index: 5, kind: input, shape index: {}]
  %s6 = inlined_call_operand.vmem [shape: f32[1,32], index: 6, kind: input, shape index: {}]
  %s7 = inlined_call_operand.vmem [shape: f32[1,32], index: 7, kind: input, shape index: {}]
  %s8 = inlined_call_operand.vmem [shape: bf16[32,128], index: 8, kind: input, shape index: {}]
  %s9 = inlined_call_operand.vmem [shape: f32[1,128], index: 9, kind: input, shape index: {}]
  %s10 = inlined_call_operand.vmem [shape: bf16[128,32], index: 10, kind: input, shape index: {}]
  %s11 = inlined_call_operand.vmem [shape: f32[1,32], index: 11, kind: input, shape index: {}]
  %s12 = inlined_call_operand.hbm [shape: f32[2,8,32], index: 12, kind: output, shape index: {}]
  %s13 = sld [smem:[#allocation0]]
  $region81: #{tpu_custom_call.1} parent=0
    _
  %s15 = ssub.s32 1, %s13
  %s16 = scalar_select 0, %s15, %s13
  $region1: #{tpu_custom_call.1} parent=0
    #allocation2 [shape = 'u8[8192]{0}', space=vmem, size = 0x2000, scoped, tag = 'output window, operand 0']
    #allocation3 [shape = 's32[2]{0}', space=sflag, size = 0x8, scoped, tag = 'scoped memory for tpu_custom_call.1']
    %17 = vsyncpa [#allocation3], 0
    %s18 = scalar_lea.sflag [#allocation3], 1
    %19 = vsyncpa %s18, 0
    loop: start=0, step=1, limit=4
    $region2: #{tpu_custom_call.1} parent=1 // loop_pre_header
      _
    $region3: #{tpu_custom_call.1} parent=1 // loop_header
      %s21 = sphi 0, %s25
      %p22 = scmp.ge.s32.totalorder %s21, 4
      %s31 = sphi 0, %s33
      %s34 = sphi 0, %s31
      %s35 = sphi 0, %s34
      %s51 = sphi 0, %s35
      %s55 = sphi 0, %s55
      %s57 = sphi 0, %s55
      %s58 = sphi 0, %s57
      %s72 = sphi 0, %s58
      %s76 = sphi 0, %s76
      %s78 = sphi 0, %s76
      %s79 = sphi 0, %s78
      %s93 = sphi 0, %s79
      %s97 = sphi 0, %s97
      %s99 = sphi 0, %s97
      %s100 = sphi 0, %s99
      %s114 = sphi 0, %s100
      %s118 = sphi 0, %s118
      %s120 = sphi 0, %s118
      %s121 = sphi 0, %s120
      %s135 = sphi 0, %s121
      %s139 = sphi 0, %s139
      %s141 = sphi 0, %s139
      %s142 = sphi 0, %s141
      %s156 = sphi 0, %s142
      %s160 = sphi 0, %s160
      %s162 = sphi 0, %s160
      %s163 = sphi 0, %s162
      %s177 = sphi 0, %s163
      %s181 = sphi 0, %s181
      %s183 = sphi 0, %s181
      %s184 = sphi 0, %s183
      %s198 = sphi 0, %s184
      %s202 = sphi 0, %s202
      %s204 = sphi 0, %s202
      %s205 = sphi 0, %s204
      %s219 = sphi 0, %s205
      %s223 = sphi 0, %s223
      %s225 = sphi 0, %s223
      %s226 = sphi 0, %s225
      %s240 = sphi 0, %s226
      %s244 = sphi 0, %s244
      %s246 = sphi 0, %s244
      %s247 = sphi 0, %s246
      %s261 = sphi 0, %s247
      %s265 = sphi 0, %s265
      %s267 = sphi 0, %s265
      %s268 = sphi 0, %s267
      %s282 = sphi 0, %s268
      %s288 = sphi 0, %s290
      %s291 = sphi 0, %s288
      %s292 = sphi 0, %s291
      %s308 = sphi 0, %s292
    $region4: #{tpu_custom_call.1} parent=1 // loop_header_branch
      %24 = sbr.rel (%p22) target = $region8
    $region5: #{tpu_custom_call.1} parent=1 // loop_body
      %s26 = ssub.s32 %s21, 1
      %s27 = ssub.s32 %s21, 2
      %s28 = sadd.s32 %s21, 1
      %s29 = ssub.s32 %s21, %s28
      %p30 = scmp.eq.s32.totalorder %s29, 0
      %s32 = sadd.s32 %s31, 1
      %s33 = scalar_select %p30, %s31, %s32
      %p36 = pneg %p30
      %p37 = scmp.eq.s32.totalorder %s21, 1
      %p38 = por %p36, %p37
      %p39 = scmp.ne.s32.totalorder %s31, %s34
      %p40 = scmp.eq.s32.totalorder %s21, 0
      %p41 = por %p39, %p40
      %p42 = scmp.ne.s32.totalorder %s31, %s34
      %p43 = scmp.eq.s32.totalorder %s26, 1
      %p44 = por %p42, %p43
      %p45 = scmp.ne.s32.totalorder %s34, %s35
      %p46 = scmp.eq.s32.totalorder %s26, 0
      %p47 = por %p45, %p46
      %p48 = scmp.ne.s32.totalorder %s34, %s35
      %p49 = scmp.eq.s32.totalorder %s27, 1
      %p50 = por %p48, %p49
      %p52 = scmp.ne.s32.totalorder %s35, %s51
      %p53 = scmp.eq.s32.totalorder %s27, 0
      %p54 = por %p52, %p53
      %s56 = sadd.s32 %s55, 1
      %p59 = scmp.eq.s32.totalorder %s21, 1
      %p60 = scmp.ne.s32.totalorder %s55, %s57
      %p61 = scmp.eq.s32.totalorder %s21, 0
      %p62 = por %p60, %p61
      %p63 = scmp.ne.s32.totalorder %s55, %s57
      %p64 = scmp.eq.s32.totalorder %s26, 1
      %p65 = por %p63, %p64
      %p66 = scmp.ne.s32.totalorder %s57, %s58
      %p67 = scmp.eq.s32.totalorder %s26, 0
      %p68 = por %p66, %p67
      %p69 = scmp.ne.s32.totalorder %s57, %s58
      %p70 = scmp.eq.s32.totalorder %s27, 1
      %p71 = por %p69, %p70
      %p73 = scmp.ne.s32.totalorder %s58, %s72
      %p74 = scmp.eq.s32.totalorder %s27, 0
      %p75 = por %p73, %p74
      %s77 = sadd.s32 %s76, 1
      %p80 = scmp.eq.s32.totalorder %s21, 1
      %p81 = scmp.ne.s32.totalorder %s76, %s78
      %p82 = scmp.eq.s32.totalorder %s21, 0
      %p83 = por %p81, %p82
      %p84 = scmp.ne.s32.totalorder %s76, %s78
      %p85 = scmp.eq.s32.totalorder %s26, 1
      %p86 = por %p84, %p85
      %p87 = scmp.ne.s32.totalorder %s78, %s79
      %p88 = scmp.eq.s32.totalorder %s26, 0
      %p89 = por %p87, %p88
      %p90 = scmp.ne.s32.totalorder %s78, %s79
      %p91 = scmp.eq.s32.totalorder %s27, 1
      %p92 = por %p90, %p91
      %p94 = scmp.ne.s32.totalorder %s79, %s93
      %p95 = scmp.eq.s32.totalorder %s27, 0
      %p96 = por %p94, %p95
      %s98 = sadd.s32 %s97, 1
      %p101 = scmp.eq.s32.totalorder %s21, 1
      %p102 = scmp.ne.s32.totalorder %s97, %s99
      %p103 = scmp.eq.s32.totalorder %s21, 0
      %p104 = por %p102, %p103
      %p105 = scmp.ne.s32.totalorder %s97, %s99
      %p106 = scmp.eq.s32.totalorder %s26, 1
      %p107 = por %p105, %p106
      %p108 = scmp.ne.s32.totalorder %s99, %s100
      %p109 = scmp.eq.s32.totalorder %s26, 0
      %p110 = por %p108, %p109
      %p111 = scmp.ne.s32.totalorder %s99, %s100
      %p112 = scmp.eq.s32.totalorder %s27, 1
      %p113 = por %p111, %p112
      %p115 = scmp.ne.s32.totalorder %s100, %s114
      %p116 = scmp.eq.s32.totalorder %s27, 0
      %p117 = por %p115, %p116
      %s119 = sadd.s32 %s118, 1
      %p122 = scmp.eq.s32.totalorder %s21, 1
      %p123 = scmp.ne.s32.totalorder %s118, %s120
      %p124 = scmp.eq.s32.totalorder %s21, 0
      %p125 = por %p123, %p124
      %p126 = scmp.ne.s32.totalorder %s118, %s120
      %p127 = scmp.eq.s32.totalorder %s26, 1
      %p128 = por %p126, %p127
      %p129 = scmp.ne.s32.totalorder %s120, %s121
      %p130 = scmp.eq.s32.totalorder %s26, 0
      %p131 = por %p129, %p130
      %p132 = scmp.ne.s32.totalorder %s120, %s121
      %p133 = scmp.eq.s32.totalorder %s27, 1
      %p134 = por %p132, %p133
      %p136 = scmp.ne.s32.totalorder %s121, %s135
      %p137 = scmp.eq.s32.totalorder %s27, 0
      %p138 = por %p136, %p137
      %s140 = sadd.s32 %s139, 1
      %p143 = scmp.eq.s32.totalorder %s21, 1
      %p144 = scmp.ne.s32.totalorder %s139, %s141
      %p145 = scmp.eq.s32.totalorder %s21, 0
      %p146 = por %p144, %p145
      %p147 = scmp.ne.s32.totalorder %s139, %s141
      %p148 = scmp.eq.s32.totalorder %s26, 1
      %p149 = por %p147, %p148
      %p150 = scmp.ne.s32.totalorder %s141, %s142
      %p151 = scmp.eq.s32.totalorder %s26, 0
      %p152 = por %p150, %p151
      %p153 = scmp.ne.s32.totalorder %s141, %s142
      %p154 = scmp.eq.s32.totalorder %s27, 1
      %p155 = por %p153, %p154
      %p157 = scmp.ne.s32.totalorder %s142, %s156
      %p158 = scmp.eq.s32.totalorder %s27, 0
      %p159 = por %p157, %p158
      %s161 = sadd.s32 %s160, 1
      %p164 = scmp.eq.s32.totalorder %s21, 1
      %p165 = scmp.ne.s32.totalorder %s160, %s162
      %p166 = scmp.eq.s32.totalorder %s21, 0
      %p167 = por %p165, %p166
      %p168 = scmp.ne.s32.totalorder %s160, %s162
      %p169 = scmp.eq.s32.totalorder %s26, 1
      %p170 = por %p168, %p169
      %p171 = scmp.ne.s32.totalorder %s162, %s163
      %p172 = scmp.eq.s32.totalorder %s26, 0
      %p173 = por %p171, %p172
      %p174 = scmp.ne.s32.totalorder %s162, %s163
      %p175 = scmp.eq.s32.totalorder %s27, 1
      %p176 = por %p174, %p175
      %p178 = scmp.ne.s32.totalorder %s163, %s177
      %p179 = scmp.eq.s32.totalorder %s27, 0
      %p180 = por %p178, %p179
      %s182 = sadd.s32 %s181, 1
      %p185 = scmp.eq.s32.totalorder %s21, 1
      %p186 = scmp.ne.s32.totalorder %s181, %s183
      %p187 = scmp.eq.s32.totalorder %s21, 0
      %p188 = por %p186, %p187
      %p189 = scmp.ne.s32.totalorder %s181, %s183
      %p190 = scmp.eq.s32.totalorder %s26, 1
      %p191 = por %p189, %p190
      %p192 = scmp.ne.s32.totalorder %s183, %s184
      %p193 = scmp.eq.s32.totalorder %s26, 0
      %p194 = por %p192, %p193
      %p195 = scmp.ne.s32.totalorder %s183, %s184
      %p196 = scmp.eq.s32.totalorder %s27, 1
      %p197 = por %p195, %p196
      %p199 = scmp.ne.s32.totalorder %s184, %s198
      %p200 = scmp.eq.s32.totalorder %s27, 0
      %p201 = por %p199, %p200
      %s203 = sadd.s32 %s202, 1
      %p206 = scmp.eq.s32.totalorder %s21, 1
      %p207 = scmp.ne.s32.totalorder %s202, %s204
      %p208 = scmp.eq.s32.totalorder %s21, 0
      %p209 = por %p207, %p208
      %p210 = scmp.ne.s32.totalorder %s202, %s204
      %p211 = scmp.eq.s32.totalorder %s26, 1
      %p212 = por %p210, %p211
      %p213 = scmp.ne.s32.totalorder %s204, %s205
      %p214 = scmp.eq.s32.totalorder %s26, 0
      %p215 = por %p213, %p214
      %p216 = scmp.ne.s32.totalorder %s204, %s205
      %p217 = scmp.eq.s32.totalorder %s27, 1
      %p218 = por %p216, %p217
      %p220 = scmp.ne.s32.totalorder %s205, %s219
      %p221 = scmp.eq.s32.totalorder %s27, 0
      %p222 = por %p220, %p221
      %s224 = sadd.s32 %s223, 1
      %p227 = scmp.eq.s32.totalorder %s21, 1
      %p228 = scmp.ne.s32.totalorder %s223, %s225
      %p229 = scmp.eq.s32.totalorder %s21, 0
      %p230 = por %p228, %p229
      %p231 = scmp.ne.s32.totalorder %s223, %s225
      %p232 = scmp.eq.s32.totalorder %s26, 1
      %p233 = por %p231, %p232
      %p234 = scmp.ne.s32.totalorder %s225, %s226
      %p235 = scmp.eq.s32.totalorder %s26, 0
      %p236 = por %p234, %p235
      %p237 = scmp.ne.s32.totalorder %s225, %s226
      %p238 = scmp.eq.s32.totalorder %s27, 1
      %p239 = por %p237, %p238
      %p241 = scmp.ne.s32.totalorder %s226, %s240
      %p242 = scmp.eq.s32.totalorder %s27, 0
      %p243 = por %p241, %p242
      %s245 = sadd.s32 %s244, 1
      %p248 = scmp.eq.s32.totalorder %s21, 1
      %p249 = scmp.ne.s32.totalorder %s244, %s246
      %p250 = scmp.eq.s32.totalorder %s21, 0
      %p251 = por %p249, %p250
      %p252 = scmp.ne.s32.totalorder %s244, %s246
      %p253 = scmp.eq.s32.totalorder %s26, 1
      %p254 = por %p252, %p253
      %p255 = scmp.ne.s32.totalorder %s246, %s247
      %p256 = scmp.eq.s32.totalorder %s26, 0
      %p257 = por %p255, %p256
      %p258 = scmp.ne.s32.totalorder %s246, %s247
      %p259 = scmp.eq.s32.totalorder %s27, 1
      %p260 = por %p258, %p259
      %p262 = scmp.ne.s32.totalorder %s247, %s261
      %p263 = scmp.eq.s32.totalorder %s27, 0
      %p264 = por %p262, %p263
      %s266 = sadd.s32 %s265, 1
      %p269 = scmp.eq.s32.totalorder %s21, 1
      %p270 = scmp.ne.s32.totalorder %s265, %s267
      %p271 = scmp.eq.s32.totalorder %s21, 0
      %p272 = por %p270, %p271
      %p273 = scmp.ne.s32.totalorder %s265, %s267
      %p274 = scmp.eq.s32.totalorder %s26, 1
      %p275 = por %p273, %p274
      %p276 = scmp.ne.s32.totalorder %s267, %s268
      %p277 = scmp.eq.s32.totalorder %s26, 0
      %p278 = por %p276, %p277
      %p279 = scmp.ne.s32.totalorder %s267, %s268
      %p280 = scmp.eq.s32.totalorder %s27, 1
      %p281 = por %p279, %p280
      %p283 = scmp.ne.s32.totalorder %s268, %s282
      %p284 = scmp.eq.s32.totalorder %s27, 0
      %p285 = por %p283, %p284
      %s286 = ssub.s32 %s21, %s28
      %p287 = scmp.eq.s32.totalorder %s286, 0
      %s289 = sadd.s32 %s288, 1
      %s290 = scalar_select %p287, %s288, %s289
      %p293 = pneg %p287
      %p294 = scmp.eq.s32.totalorder %s21, 1
      %p295 = por %p293, %p294
      %p296 = scmp.ne.s32.totalorder %s288, %s291
      %p297 = scmp.eq.s32.totalorder %s21, 0
      %p298 = por %p296, %p297
      %p299 = scmp.ne.s32.totalorder %s288, %s291
      %p300 = scmp.eq.s32.totalorder %s26, 1
      %p301 = por %p299, %p300
      %p302 = scmp.ne.s32.totalorder %s291, %s292
      %p303 = scmp.eq.s32.totalorder %s26, 0
      %p304 = por %p302, %p303
      %p305 = scmp.ne.s32.totalorder %s291, %s292
      %p306 = scmp.eq.s32.totalorder %s27, 1
      %p307 = por %p305, %p306
      %p309 = scmp.ne.s32.totalorder %s292, %s308
      %p310 = scmp.eq.s32.totalorder %s27, 0
      %p311 = por %p309, %p310
      %p312 = scmp.le.s32.totalorder 1, %s21
      %p313 = scmp.lt.s32.totalorder %s21, 3
      %p314 = pnand %p312, %p313
      %p315 = pneg %p314
      // Predicated region
      $region9: #{tpu_custom_call.1} parent=5 // pred_check
        _
      $region10: #{tpu_custom_call.1} parent=5 // pred_check_branch
        %317 = sbr.rel (%p314) target = $region12
      $region11: #{tpu_custom_call.1} parent=5 // pred_region
        %s318 = ssub.s32 %s21, 1
        // Predicated region
        $region13: #{tpu_custom_call.1} parent=11 // pred_check
          %p319 = pneg %p68
        $region14: #{tpu_custom_call.1} parent=11 // pred_check_branch
          %321 = sbr.rel (%p319) target = $region16
        $region15: #{tpu_custom_call.1} parent=11 // pred_region
          _
        $region16: #{tpu_custom_call.1} parent=11 // pred_fallthru
          _
        // Predicated region
        $region17: #{tpu_custom_call.1} parent=11 // pred_check
          %p322 = pneg %p89
        $region18: #{tpu_custom_call.1} parent=11 // pred_check_branch
          %324 = sbr.rel (%p322) target = $region20
        $region19: #{tpu_custom_call.1} parent=11 // pred_region
          _
        $region20: #{tpu_custom_call.1} parent=11 // pred_fallthru
          _
        // Predicated region
        $region21: #{tpu_custom_call.1} parent=11 // pred_check
          %p325 = pneg %p110
        $region22: #{tpu_custom_call.1} parent=11 // pred_check_branch
          %327 = sbr.rel (%p325) target = $region24
        $region23: #{tpu_custom_call.1} parent=11 // pred_region
          _
        $region24: #{tpu_custom_call.1} parent=11 // pred_fallthru
          _
        // Predicated region
        $region25: #{tpu_custom_call.1} parent=11 // pred_check
          %p328 = pneg %p131
        $region26: #{tpu_custom_call.1} parent=11 // pred_check_branch
          %330 = sbr.rel (%p328) target = $region28
        $region27: #{tpu_custom_call.1} parent=11 // pred_region
          _
        $region28: #{tpu_custom_call.1} parent=11 // pred_fallthru
          _
        // Predicated region
        $region29: #{tpu_custom_call.1} parent=11 // pred_check
          %p331 = pneg %p152
        $region30: #{tpu_custom_call.1} parent=11 // pred_check_branch
          %333 = sbr.rel (%p331) target = $region32
        $region31: #{tpu_custom_call.1} parent=11 // pred_region
          _
        $region32: #{tpu_custom_call.1} parent=11 // pred_fallthru
          _
        // Predicated region
        $region33: #{tpu_custom_call.1} parent=11 // pred_check
          %p334 = pneg %p173
        $region34: #{tpu_custom_call.1} parent=11 // pred_check_branch
          %336 = sbr.rel (%p334) target = $region36
        $region35: #{tpu_custom_call.1} parent=11 // pred_region
          _
        $region36: #{tpu_custom_call.1} parent=11 // pred_fallthru
          _
        // Predicated region
        $region37: #{tpu_custom_call.1} parent=11 // pred_check
          %p337 = pneg %p194
        $region38: #{tpu_custom_call.1} parent=11 // pred_check_branch
          %339 = sbr.rel (%p337) target = $region40
        $region39: #{tpu_custom_call.1} parent=11 // pred_region
          _
        $region40: #{tpu_custom_call.1} parent=11 // pred_fallthru
          _
        // Predicated region
        $region41: #{tpu_custom_call.1} parent=11 // pred_check
          %p340 = pneg %p215
        $region42: #{tpu_custom_call.1} parent=11 // pred_check_branch
          %342 = sbr.rel (%p340) target = $region44
        $region43: #{tpu_custom_call.1} parent=11 // pred_region
          _
        $region44: #{tpu_custom_call.1} parent=11 // pred_fallthru
          _
        // Predicated region
        $region45: #{tpu_custom_call.1} parent=11 // pred_check
          %p343 = pneg %p236
        $region46: #{tpu_custom_call.1} parent=11 // pred_check_branch
          %345 = sbr.rel (%p343) target = $region48
        $region47: #{tpu_custom_call.1} parent=11 // pred_region
          _
        $region48: #{tpu_custom_call.1} parent=11 // pred_fallthru
          _
        // Predicated region
        $region49: #{tpu_custom_call.1} parent=11 // pred_check
          %p346 = pneg %p257
        $region50: #{tpu_custom_call.1} parent=11 // pred_check_branch
          %348 = sbr.rel (%p346) target = $region52
        $region51: #{tpu_custom_call.1} parent=11 // pred_region
          _
        $region52: #{tpu_custom_call.1} parent=11 // pred_fallthru
          _
        // Predicated region
        $region53: #{tpu_custom_call.1} parent=11 // pred_check
          %p349 = pneg %p278
        $region54: #{tpu_custom_call.1} parent=11 // pred_check_branch
          %351 = sbr.rel (%p349) target = $region56
        $region55: #{tpu_custom_call.1} parent=11 // pred_region
          _
        $region56: #{tpu_custom_call.1} parent=11 // pred_fallthru
          _
      $region12: #{tpu_custom_call.1} parent=5 // pred_fallthru
        _
      %p352 = scmp.lt.s32.totalorder %s21, 2
      // Predicated region
      $region57: #{tpu_custom_call.1} parent=5 // pred_check
        %p353 = pneg %p352
      $region58: #{tpu_custom_call.1} parent=5 // pred_check_branch
        %355 = sbr.rel (%p353) target = $region60
      $region59: #{tpu_custom_call.1} parent=5 // pred_region
        // Predicated region
        $region61: #{tpu_custom_call.1} parent=59 // pred_check
          %p356 = pneg %p41
        $region62: #{tpu_custom_call.1} parent=59 // pred_check_branch
          %358 = sbr.rel (%p356) target = $region64
        $region63: #{tpu_custom_call.1} parent=59 // pred_region
          %p359 = scmp.lt.s32.totalorder %s21, 1
          %s360 = scalar_select %p359, %s21, 1
          %s361 = smul.addr %s360, 8
          %s362 = scalar_lea.vmem %s0, %s361
        $region64: #{tpu_custom_call.1} parent=59 // pred_fallthru
          _
      $region60: #{tpu_custom_call.1} parent=5 // pred_fallthru
        _
      %p363 = scmp.le.s32.totalorder 1, %s21
      %p364 = scmp.lt.s32.totalorder %s21, 3
      %p365 = pnand %p363, %p364
      %p366 = pneg %p365
      // Predicated region
      $region65: #{tpu_custom_call.1} parent=5 // pred_check
        _
      $region66: #{tpu_custom_call.1} parent=5 // pred_check_branch
        %368 = sbr.rel (%p365) target = $region68
      $region67: #{tpu_custom_call.1} parent=5 // pred_region
        %s369 = ssub.s32 %s21, 1
        %p370 = scmp.lt.s32.totalorder %s26, 1
        %s371 = scalar_select %p370, %s26, 1
        %s372 = smul.addr %s371, 8
        %s373 = scalar_lea.vmem %s0, %s372
        %p374 = pneg %p47
        %p375 = pneg %p44
        %p376 = pneg %p68
        %p377 = pneg %p65
        %p378 = pneg %p89
        %p379 = pneg %p86
        %p380 = pneg %p110
        %p381 = pneg %p107
        %p382 = pneg %p131
        %p383 = pneg %p128
        %p384 = pneg %p152
        %p385 = pneg %p149
        %p386 = pneg %p173
        %p387 = pneg %p170
        %p388 = pneg %p194
        %p389 = pneg %p191
        %p390 = pneg %p215
        %p391 = pneg %p212
        %p392 = pneg %p236
        %p393 = pneg %p233
        %p394 = pneg %p257
        %p395 = pneg %p254
        %p396 = pneg %p278
        %p397 = pneg %p275
        %p398 = pneg %p304
        %p399 = pneg %p301
        %s400 = sand.u32 %s291, 1
        %s401 = scalar_lea.sflag [#allocation3], %s400
        %s402 = sand.u32 %s291, 1
        %s403 = smul.addr %s402, 8
        %s404 = scalar_lea.vmem [#allocation2], %s403
        %p405 = scmp.lt.s32.totalorder %s26, 1
        %s406 = scalar_select %p405, %s26, 1
        %s407 = smul.addr %s406, 8
        %s408 = scalar_lea.vmem %s0, %s407
        %v410 = vld [vmem:[%s408] sm:$0xff]
        %v411 = vld [vmem:[%s1] sm:$0x1]
        %v412 = vld [vmem:[%s2] sm:$0x1]
        %vm413 = vcmask 261120
        %v414 = vsel %vm413, %v410, 0.0
        %415 = vadd.xlane.f32.xlu0 %v414
        %v416 = vpop.xlane.xlu0 %415
        %v417 = vrcp.pop 32.0
        %v418 = vmul.f32 %v416, %v417
        %v419 = vsub.f32 %v410, %v418
        %v420 = vmul.f32 %v419, %v419
        %v421 = vsel %vm413, %v420, 0.0
        %422 = vadd.xlane.f32.xlu0 %v421
        %v423 = vpop.xlane.xlu0 %422
        %v424 = vmul.f32 %v423, %v417
        %v425 = vadd.f32 %v424, 1e-05
        %v426 = vrsqrt.pop %v425
        %v427 = vmul.f32 %v419, %v426
        %v429 = vlaneseq
        %v430 = vshrl.u32 %v429, 7
        %v431 = vsub.s32 0, %v430
        %v432 = vrot.slane %v411, %v431
        %v434 = vmul.f32 %v427, %v432
        %v436 = vlaneseq
        %v437 = vshrl.u32 %v436, 7
        %v438 = vsub.s32 0, %v437
        %v439 = vrot.slane %v412, %v438
        %v441 = vadd.f32 %v434, %v439
        %v442 = vpack.c.bf16 %v441, %v441
        %v443 = vld [vmem:[%s3] sm:$0xf]
        %v444 = vld [vmem:[%s3 + $0x4] sm:$0xf]
        %v445 = vld [vmem:[%s3 + $0x8] sm:$0xf]
        %v446 = vld [vmem:[%s3 + $0xc] sm:$0xf]
        %v451 = vunpack.c.l.b16 %v443
        %v452 = vunpack.c.l.b16 %v444
        %v453 = vunpack.c.l.b16 %v445
        %v454 = vunpack.c.l.b16 %v446
        %v455 = vpack.c.b16 %v452, %v451
        %v456 = vpack.c.b16 %v454, %v453
        %v460 = vsel %vm413, %v442, 0
        %462 = vmatprep.subr.bf16.mxu0 0
        %463 = vmatpush1.bf16.msra.mxu0 %v455
        %464 = vmatprep.subr.bf16.mxu0 0
        %465 = vmatpush1.bf16.msra.mxu0 %v456
        %466 = vmatprep.subr.bf16.mxu0 0
        %467 = vmatpush1.bf16.msra.mxu0 0
        %468 = vmatprep.subr.bf16.mxu0 0
        %469 = vmatpush1.bf16.msra.mxu0 0
        %470 = vmatprep.subr.bf16.mxu0 0
        %471 = vmatpush1.bf16.msra.mxu0 0
        %472 = vmatprep.subr.bf16.mxu0 0
        %473 = vmatpush1.bf16.msra.mxu0 0
        %474 = vmatprep.subr.bf16.mxu0 0
        %475 = vmatpush1.bf16.msra.mxu0 0
        %476 = vmatprep.subr.bf16.mxu0 0
        %477 = vmatpush1.bf16.msra.mxu0 0
        %478 = vmatprep.subr.bf16.mxu0 0
        %479 = vmatpush1.bf16.msra.mxu0 0
        %480 = vmatprep.subr.bf16.mxu0 0
        %481 = vmatpush1.bf16.msra.mxu0 0
        %482 = vmatprep.subr.bf16.mxu0 0
        %483 = vmatpush1.bf16.msra.mxu0 0
        %484 = vmatprep.subr.bf16.mxu0 0
        %485 = vmatpush1.bf16.msra.mxu0 0
        %486 = vmatprep.subr.bf16.mxu0 0
        %487 = vmatpush1.bf16.msra.mxu0 0
        %488 = vmatprep.subr.bf16.mxu0 0
        %489 = vmatpush1.bf16.msra.mxu0 0
        %490 = vmatprep.subr.bf16.mxu0 0
        %491 = vmatpush1.bf16.msra.mxu0 0
        %492 = vmatprep.subr.bf16.mxu0 0
        %493 = vmatpush1.bf16.msra.mxu0 0
        %494 = vmatprep.mubr.bf16.mxu0 0
        %495 = vmatmul.mubr.bf16.gmra.mrb[0].mxu0 %v460
        %v496 = vpop.f32.mrb[0].mxu0
        %v497 = vadd.f32 0.0, %v496
        %v498 = vpop.f32.mrb[0].mxu0
        %v499 = vpop.f32.mrb[0].mxu0
        %v500 = vpop.f32.mrb[0].mxu0
        %501 = vdwg.mxu0
        %v502 = vmul.f32 %v497, 0.35355338
        %504 = vrot.lane.b32.xlu0 %v502, 120
        %v505 = vpop.permute.xlu0 %504
        %507 = vrot.lane.b32.xlu0 %v502, 112
        %v508 = vpop.permute.xlu0 %507
        %510 = vrot.lane.b32.xlu0 %v502, 104
        %v511 = vpop.permute.xlu0 %510
        %v513 = vpack.c.bf16 %v502, %v502
        %v514 = vpack.c.bf16 %v505, %v505
        %v515 = vpack.c.bf16 %v508, %v508
        %v516 = vpack.c.bf16 %v511, %v511
        %518 = vrot.lane.b32.xlu0 %v497, 120
        %v519 = vpop.permute.xlu0 %518
        %521 = vrot.lane.b32.xlu0 %v497, 112
        %v522 = vpop.permute.xlu0 %521
        %524 = vrot.lane.b32.xlu0 %v497, 104
        %v525 = vpop.permute.xlu0 %524
        %v527 = vpack.c.bf16 %v497, %v497
        %v528 = vpack.c.bf16 %v519, %v519
        %v529 = vpack.c.bf16 %v522, %v522
        %v530 = vpack.c.bf16 %v525, %v525
        %532 = vrot.lane.b32.xlu0 %v527, 96
        %v533 = vpop.permute.xlu0 %532
        %vm534 = vcmask 64512
        %v536 = vsel %vm534, %v513, 0
        %v539 = vsel %vm534, %v533, 0
        %541 = vmatprep.subr.bf16.mxu0 0
        %542 = vmatpush1.bf16.xpose.msra.mxu0 %v539
        %543 = vmatprep.subr.bf16.mxu0 0
        %544 = vmatpush1.bf16.xpose.msra.mxu0 0
        %545 = vmatprep.subr.bf16.mxu0 0
        %546 = vmatpush1.bf16.xpose.msra.mxu0 0
        %547 = vmatprep.subr.bf16.mxu0 0
        %548 = vmatpush1.bf16.xpose.msra.mxu0 0
        %549 = vmatprep.subr.bf16.mxu0 0
        %550 = vmatpush1.bf16.xpose.msra.mxu0 0
        %551 = vmatprep.subr.bf16.mxu0 0
        %552 = vmatpush1.bf16.xpose.msra.mxu0 0
        %553 = vmatprep.subr.bf16.mxu0 0
        %554 = vmatpush1.bf16.xpose.msra.mxu0 0
        %555 = vmatprep.subr.bf16.mxu0 0
        %556 = vmatpush1.bf16.xpose.msra.mxu0 0
        %557 = vmatprep.subr.bf16.mxu0 0
        %558 = vmatpush1.bf16.xpose.msra.mxu0 0
        %559 = vmatprep.subr.bf16.mxu0 0
        %560 = vmatpush1.bf16.xpose.msra.mxu0 0
        %561 = vmatprep.subr.bf16.mxu0 0
        %562 = vmatpush1.bf16.xpose.msra.mxu0 0
        %563 = vmatprep.subr.bf16.mxu0 0
        %564 = vmatpush1.bf16.xpose.msra.mxu0 0
        %565 = vmatprep.subr.bf16.mxu0 0
        %566 = vmatpush1.bf16.xpose.msra.mxu0 0
        %567 = vmatprep.subr.bf16.mxu0 0
        %568 = vmatpush1.bf16.xpose.msra.mxu0 0
        %569 = vmatprep.subr.bf16.mxu0 0
        %570 = vmatpush1.bf16.xpose.msra.mxu0 0
        %571 = vmatprep.subr.bf16.mxu0 0
        %572 = vmatpush1.bf16.xpose.msra.mxu0 0
        %573 = vmatprep.mubr.bf16.mxu0 0
        %574 = vmatmul.mubr.bf16.gmra.mrb[0].mxu0 %v536
        %v575 = vpop.f32.mrb[0].mxu0
        %v576 = vadd.f32 0.0, %v575
        %v577 = vpop.f32.mrb[0].mxu0
        %v578 = vpop.f32.mrb[0].mxu0
        %v579 = vpop.f32.mrb[0].mxu0
        %580 = vdwg.mxu0
        %582 = vrot.lane.b32.xlu0 %v528, 96
        %v583 = vpop.permute.xlu0 %582
        %v585 = vsel %vm534, %v514, 0
        %v588 = vsel %vm534, %v583, 0
        %590 = vmatprep.subr.bf16.mxu0 0
        %591 = vmatpush1.bf16.xpose.msra.mxu0 %v588
        %592 = vmatprep.subr.bf16.mxu0 0
        %593 = vmatpush1.bf16.xpose.msra.mxu0 0
        %594 = vmatprep.subr.bf16.mxu0 0
        %595 = vmatpush1.bf16.xpose.msra.mxu0 0
        %596 = vmatprep.subr.bf16.mxu0 0
        %597 = vmatpush1.bf16.xpose.msra.mxu0 0
        %598 = vmatprep.subr.bf16.mxu0 0
        %599 = vmatpush1.bf16.xpose.msra.mxu0 0
        %600 = vmatprep.subr.bf16.mxu0 0
        %601 = vmatpush1.bf16.xpose.msra.mxu0 0
        %602 = vmatprep.subr.bf16.mxu0 0
        %603 = vmatpush1.bf16.xpose.msra.mxu0 0
        %604 = vmatprep.subr.bf16.mxu0 0
        %605 = vmatpush1.bf16.xpose.msra.mxu0 0
        %606 = vmatprep.subr.bf16.mxu0 0
        %607 = vmatpush1.bf16.xpose.msra.mxu0 0
        %608 = vmatprep.subr.bf16.mxu0 0
        %609 = vmatpush1.bf16.xpose.msra.mxu0 0
        %610 = vmatprep.subr.bf16.mxu0 0
        %611 = vmatpush1.bf16.xpose.msra.mxu0 0
        %612 = vmatprep.subr.bf16.mxu0 0
        %613 = vmatpush1.bf16.xpose.msra.mxu0 0
        %614 = vmatprep.subr.bf16.mxu0 0
        %615 = vmatpush1.bf16.xpose.msra.mxu0 0
        %616 = vmatprep.subr.bf16.mxu0 0
        %617 = vmatpush1.bf16.xpose.msra.mxu0 0
        %618 = vmatprep.subr.bf16.mxu0 0
        %619 = vmatpush1.bf16.xpose.msra.mxu0 0
        %620 = vmatprep.subr.bf16.mxu0 0
        %621 = vmatpush1.bf16.xpose.msra.mxu0 0
        %622 = vmatprep.mubr.bf16.mxu0 0
        %623 = vmatmul.mubr.bf16.gmra.mrb[0].mxu0 %v585
        %v624 = vpop.f32.mrb[0].mxu0
        %v625 = vadd.f32 0.0, %v624
        %v626 = vpop.f32.mrb[0].mxu0
        %v627 = vpop.f32.mrb[0].mxu0
        %v628 = vpop.f32.mrb[0].mxu0
        %629 = vdwg.mxu0
        %631 = vrot.lane.b32.xlu0 %v529, 96
        %v632 = vpop.permute.xlu0 %631
        %v634 = vsel %vm534, %v515, 0
        %v637 = vsel %vm534, %v632, 0
        %639 = vmatprep.subr.bf16.mxu0 0
        %640 = vmatpush1.bf16.xpose.msra.mxu0 %v637
        %641 = vmatprep.subr.bf16.mxu0 0
        %642 = vmatpush1.bf16.xpose.msra.mxu0 0
        %643 = vmatprep.subr.bf16.mxu0 0
        %644 = vmatpush1.bf16.xpose.msra.mxu0 0
        %645 = vmatprep.subr.bf16.mxu0 0
        %646 = vmatpush1.bf16.xpose.msra.mxu0 0
        %647 = vmatprep.subr.bf16.mxu0 0
        %648 = vmatpush1.bf16.xpose.msra.mxu0 0
        %649 = vmatprep.subr.bf16.mxu0 0
        %650 = vmatpush1.bf16.xpose.msra.mxu0 0
        %651 = vmatprep.subr.bf16.mxu0 0
        %652 = vmatpush1.bf16.xpose.msra.mxu0 0
        %653 = vmatprep.subr.bf16.mxu0 0
        %654 = vmatpush1.bf16.xpose.msra.mxu0 0
        %655 = vmatprep.subr.bf16.mxu0 0
        %656 = vmatpush1.bf16.xpose.msra.mxu0 0
        %657 = vmatprep.subr.bf16.mxu0 0
        %658 = vmatpush1.bf16.xpose.msra.mxu0 0
        %659 = vmatprep.subr.bf16.mxu0 0
        %660 = vmatpush1.bf16.xpose.msra.mxu0 0
        %661 = vmatprep.subr.bf16.mxu0 0
        %662 = vmatpush1.bf16.xpose.msra.mxu0 0
        %663 = vmatprep.subr.bf16.mxu0 0
        %664 = vmatpush1.bf16.xpose.msra.mxu0 0
        %665 = vmatprep.subr.bf16.mxu0 0
        %666 = vmatpush1.bf16.xpose.msra.mxu0 0
        %667 = vmatprep.subr.bf16.mxu0 0
        %668 = vmatpush1.bf16.xpose.msra.mxu0 0
        %669 = vmatprep.subr.bf16.mxu0 0
        %670 = vmatpush1.bf16.xpose.msra.mxu0 0
        %671 = vmatprep.mubr.bf16.mxu0 0
        %672 = vmatmul.mubr.bf16.gmra.mrb[0].mxu0 %v634
        %v673 = vpop.f32.mrb[0].mxu0
        %v674 = vadd.f32 0.0, %v673
        %v675 = vpop.f32.mrb[0].mxu0
        %v676 = vpop.f32.mrb[0].mxu0
        %v677 = vpop.f32.mrb[0].mxu0
        %678 = vdwg.mxu0
        %680 = vrot.lane.b32.xlu0 %v530, 96
        %v681 = vpop.permute.xlu0 %680
        %v683 = vsel %vm534, %v516, 0
        %v686 = vsel %vm534, %v681, 0
        %688 = vmatprep.subr.bf16.mxu0 0
        %689 = vmatpush1.bf16.xpose.msra.mxu0 %v686
        %690 = vmatprep.subr.bf16.mxu0 0
        %691 = vmatpush1.bf16.xpose.msra.mxu0 0
        %692 = vmatprep.subr.bf16.mxu0 0
        %693 = vmatpush1.bf16.xpose.msra.mxu0 0
        %694 = vmatprep.subr.bf16.mxu0 0
        %695 = vmatpush1.bf16.xpose.msra.mxu0 0
        %696 = vmatprep.subr.bf16.mxu0 0
        %697 = vmatpush1.bf16.xpose.msra.mxu0 0
        %698 = vmatprep.subr.bf16.mxu0 0
        %699 = vmatpush1.bf16.xpose.msra.mxu0 0
        %700 = vmatprep.subr.bf16.mxu0 0
        %701 = vmatpush1.bf16.xpose.msra.mxu0 0
        %702 = vmatprep.subr.bf16.mxu0 0
        %703 = vmatpush1.bf16.xpose.msra.mxu0 0
        %704 = vmatprep.subr.bf16.mxu0 0
        %705 = vmatpush1.bf16.xpose.msra.mxu0 0
        %706 = vmatprep.subr.bf16.mxu0 0
        %707 = vmatpush1.bf16.xpose.msra.mxu0 0
        %708 = vmatprep.subr.bf16.mxu0 0
        %709 = vmatpush1.bf16.xpose.msra.mxu0 0
        %710 = vmatprep.subr.bf16.mxu0 0
        %711 = vmatpush1.bf16.xpose.msra.mxu0 0
        %712 = vmatprep.subr.bf16.mxu0 0
        %713 = vmatpush1.bf16.xpose.msra.mxu0 0
        %714 = vmatprep.subr.bf16.mxu0 0
        %715 = vmatpush1.bf16.xpose.msra.mxu0 0
        %716 = vmatprep.subr.bf16.mxu0 0
        %717 = vmatpush1.bf16.xpose.msra.mxu0 0
        %718 = vmatprep.subr.bf16.mxu0 0
        %719 = vmatpush1.bf16.xpose.msra.mxu0 0
        %720 = vmatprep.mubr.bf16.mxu0 0
        %721 = vmatmul.mubr.bf16.gmra.mrb[0].mxu0 %v683
        %v722 = vpop.f32.mrb[0].mxu0
        %v723 = vadd.f32 0.0, %v722
        %v724 = vpop.f32.mrb[0].mxu0
        %v725 = vpop.f32.mrb[0].mxu0
        %v726 = vpop.f32.mrb[0].mxu0
        %727 = vdwg.mxu0
        %v728 = vsel %vm534, %v576, -inf
        %729 = vmax.xlane.f32.xlu0 %v728
        %v730 = vpop.xlane.xlu0 %729
        %v731 = vsel %vm534, %v625, -inf
        %732 = vmax.xlane.f32.xlu0 %v731
        %v733 = vpop.xlane.xlu0 %732
        %v734 = vsel %vm534, %v674, -inf
        %735 = vmax.xlane.f32.xlu0 %v734
        %v736 = vpop.xlane.xlu0 %735
        %v737 = vsel %vm534, %v723, -inf
        %738 = vmax.xlane.f32.xlu0 %v737
        %v739 = vpop.xlane.xlu0 %738
        %v740 = vsub.f32 %v576, %v730
        %v741 = vsub.f32 %v625, %v733
        %v742 = vsub.f32 %v674, %v736
        %v743 = vsub.f32 %v723, %v739
        %v744 = vmul.f32 %v740, 1.442695
        %v745 = vpow.pop %v744
        %v746 = vmul.f32 %v741, 1.442695
        %v747 = vpow.pop %v746
        %v748 = vmul.f32 %v742, 1.442695
        %v749 = vpow.pop %v748
        %v750 = vmul.f32 %v743, 1.442695
        %v751 = vpow.pop %v750
        %v752 = vsel %vm534, %v745, 0.0
        %753 = vadd.xlane.f32.xlu0 %v752
        %v754 = vpop.xlane.xlu0 %753
        %v755 = vsel %vm534, %v747, 0.0
        %756 = vadd.xlane.f32.xlu0 %v755
        %v757 = vpop.xlane.xlu0 %756
        %v758 = vsel %vm534, %v749, 0.0
        %759 = vadd.xlane.f32.xlu0 %v758
        %v760 = vpop.xlane.xlu0 %759
        %v761 = vsel %vm534, %v751, 0.0
        %762 = vadd.xlane.f32.xlu0 %v761
        %v763 = vpop.xlane.xlu0 %762
        %v764 = vrcp.pop %v754
        %v765 = vrcp.pop %v757
        %v766 = vrcp.pop %v760
        %v767 = vrcp.pop %v763
        %v768 = vmul.f32 %v745, %v764
        %v769 = vmul.f32 %v747, %v765
        %v770 = vmul.f32 %v749, %v766
        %v771 = vmul.f32 %v751, %v767
        %v772 = vpack.c.bf16 %v768, %v768
        %v773 = vpack.c.bf16 %v769, %v769
        %v774 = vpack.c.bf16 %v770, %v770
        %v775 = vpack.c.bf16 %v771, %v771
        %776 = vrot.lane.b32.xlu0 %v527, 64
        %v777 = vpop.permute.xlu0 %776
        %v779 = vsel %vm534, %v772, 0
        %vm781 = vcmask 1043456
        %v783 = vsel %vm781, %v777, 0
        %785 = vmatprep.subr.bf16.mxu0 0
        %786 = vmatpush1.bf16.msra.mxu0 %v783
        %787 = vmatprep.subr.bf16.mxu0 0
        %788 = vmatpush1.bf16.msra.mxu0 0
        %789 = vmatprep.subr.bf16.mxu0 0
        %790 = vmatpush1.bf16.msra.mxu0 0
        %791 = vmatprep.subr.bf16.mxu0 0
        %792 = vmatpush1.bf16.msra.mxu0 0
        %793 = vmatprep.subr.bf16.mxu0 0
        %794 = vmatpush1.bf16.msra.mxu0 0
        %795 = vmatprep.subr.bf16.mxu0 0
        %796 = vmatpush1.bf16.msra.mxu0 0
        %797 = vmatprep.subr.bf16.mxu0 0
        %798 = vmatpush1.bf16.msra.mxu0 0
        %799 = vmatprep.subr.bf16.mxu0 0
        %800 = vmatpush1.bf16.msra.mxu0 0
        %801 = vmatprep.subr.bf16.mxu0 0
        %802 = vmatpush1.bf16.msra.mxu0 0
        %803 = vmatprep.subr.bf16.mxu0 0
        %804 = vmatpush1.bf16.msra.mxu0 0
        %805 = vmatprep.subr.bf16.mxu0 0
        %806 = vmatpush1.bf16.msra.mxu0 0
        %807 = vmatprep.subr.bf16.mxu0 0
        %808 = vmatpush1.bf16.msra.mxu0 0
        %809 = vmatprep.subr.bf16.mxu0 0
        %810 = vmatpush1.bf16.msra.mxu0 0
        %811 = vmatprep.subr.bf16.mxu0 0
        %812 = vmatpush1.bf16.msra.mxu0 0
        %813 = vmatprep.subr.bf16.mxu0 0
        %814 = vmatpush1.bf16.msra.mxu0 0
        %815 = vmatprep.subr.bf16.mxu0 0
        %816 = vmatpush1.bf16.msra.mxu0 0
        %817 = vmatprep.mubr.bf16.mxu0 0
        %818 = vmatmul.mubr.bf16.gmra.mrb[0].mxu0 %v779
        %v819 = vpop.f32.mrb[0].mxu0
        %v820 = vadd.f32 0.0, %v819
        %v821 = vpop.f32.mrb[0].mxu0
        %v822 = vpop.f32.mrb[0].mxu0
        %v823 = vpop.f32.mrb[0].mxu0
        %824 = vdwg.mxu0
        %825 = vrot.lane.b32.xlu0 %v528, 64
        %v826 = vpop.permute.xlu0 %825
        %v828 = vsel %vm534, %v773, 0
        %v831 = vsel %vm781, %v826, 0
        %833 = vmatprep.subr.bf16.mxu0 0
        %834 = vmatpush1.bf16.msra.mxu0 %v831
        %835 = vmatprep.subr.bf16.mxu0 0
        %836 = vmatpush1.bf16.msra.mxu0 0
        %837 = vmatprep.subr.bf16.mxu0 0
        %838 = vmatpush1.bf16.msra.mxu0 0
        %839 = vmatprep.subr.bf16.mxu0 0
        %840 = vmatpush1.bf16.msra.mxu0 0
        %841 = vmatprep.subr.bf16.mxu0 0
        %842 = vmatpush1.bf16.msra.mxu0 0
        %843 = vmatprep.subr.bf16.mxu0 0
        %844 = vmatpush1.bf16.msra.mxu0 0
        %845 = vmatprep.subr.bf16.mxu0 0
        %846 = vmatpush1.bf16.msra.mxu0 0
        %847 = vmatprep.subr.bf16.mxu0 0
        %848 = vmatpush1.bf16.msra.mxu0 0
        %849 = vmatprep.subr.bf16.mxu0 0
        %850 = vmatpush1.bf16.msra.mxu0 0
        %851 = vmatprep.subr.bf16.mxu0 0
        %852 = vmatpush1.bf16.msra.mxu0 0
        %853 = vmatprep.subr.bf16.mxu0 0
        %854 = vmatpush1.bf16.msra.mxu0 0
        %855 = vmatprep.subr.bf16.mxu0 0
        %856 = vmatpush1.bf16.msra.mxu0 0
        %857 = vmatprep.subr.bf16.mxu0 0
        %858 = vmatpush1.bf16.msra.mxu0 0
        %859 = vmatprep.subr.bf16.mxu0 0
        %860 = vmatpush1.bf16.msra.mxu0 0
        %861 = vmatprep.subr.bf16.mxu0 0
        %862 = vmatpush1.bf16.msra.mxu0 0
        %863 = vmatprep.subr.bf16.mxu0 0
        %864 = vmatpush1.bf16.msra.mxu0 0
        %865 = vmatprep.mubr.bf16.mxu0 0
        %866 = vmatmul.mubr.bf16.gmra.mrb[0].mxu0 %v828
        %v867 = vpop.f32.mrb[0].mxu0
        %v868 = vadd.f32 0.0, %v867
        %v869 = vpop.f32.mrb[0].mxu0
        %v870 = vpop.f32.mrb[0].mxu0
        %v871 = vpop.f32.mrb[0].mxu0
        %872 = vdwg.mxu0
        %873 = vrot.lane.b32.xlu0 %v529, 64
        %v874 = vpop.permute.xlu0 %873
        %v876 = vsel %vm534, %v774, 0
        %v879 = vsel %vm781, %v874, 0
        %881 = vmatprep.subr.bf16.mxu0 0
        %882 = vmatpush1.bf16.msra.mxu0 %v879
        %883 = vmatprep.subr.bf16.mxu0 0
        %884 = vmatpush1.bf16.msra.mxu0 0
        %885 = vmatprep.subr.bf16.mxu0 0
        %886 = vmatpush1.bf16.msra.mxu0 0
        %887 = vmatprep.subr.bf16.mxu0 0
        %888 = vmatpush1.bf16.msra.mxu0 0
        %889 = vmatprep.subr.bf16.mxu0 0
        %890 = vmatpush1.bf16.msra.mxu0 0
        %891 = vmatprep.subr.bf16.mxu0 0
        %892 = vmatpush1.bf16.msra.mxu0 0
        %893 = vmatprep.subr.bf16.mxu0 0
        %894 = vmatpush1.bf16.msra.mxu0 0
        %895 = vmatprep.subr.bf16.mxu0 0
        %896 = vmatpush1.bf16.msra.mxu0 0
        %897 = vmatprep.subr.bf16.mxu0 0
        %898 = vmatpush1.bf16.msra.mxu0 0
        %899 = vmatprep.subr.bf16.mxu0 0
        %900 = vmatpush1.bf16.msra.mxu0 0
        %901 = vmatprep.subr.bf16.mxu0 0
        %902 = vmatpush1.bf16.msra.mxu0 0
        %903 = vmatprep.subr.bf16.mxu0 0
        %904 = vmatpush1.bf16.msra.mxu0 0
        %905 = vmatprep.subr.bf16.mxu0 0
        %906 = vmatpush1.bf16.msra.mxu0 0
        %907 = vmatprep.subr.bf16.mxu0 0
        %908 = vmatpush1.bf16.msra.mxu0 0
        %909 = vmatprep.subr.bf16.mxu0 0
        %910 = vmatpush1.bf16.msra.mxu0 0
        %911 = vmatprep.subr.bf16.mxu0 0
        %912 = vmatpush1.bf16.msra.mxu0 0
        %913 = vmatprep.mubr.bf16.mxu0 0
        %914 = vmatmul.mubr.bf16.gmra.mrb[0].mxu0 %v876
        %v915 = vpop.f32.mrb[0].mxu0
        %v916 = vadd.f32 0.0, %v915
        %v917 = vpop.f32.mrb[0].mxu0
        %v918 = vpop.f32.mrb[0].mxu0
        %v919 = vpop.f32.mrb[0].mxu0
        %920 = vdwg.mxu0
        %921 = vrot.lane.b32.xlu0 %v530, 64
        %v922 = vpop.permute.xlu0 %921
        %v924 = vsel %vm534, %v775, 0
        %v927 = vsel %vm781, %v922, 0
        %929 = vmatprep.subr.bf16.mxu0 0
        %930 = vmatpush1.bf16.msra.mxu0 %v927
        %931 = vmatprep.subr.bf16.mxu0 0
        %932 = vmatpush1.bf16.msra.mxu0 0
        %933 = vmatprep.subr.bf16.mxu0 0
        %934 = vmatpush1.bf16.msra.mxu0 0
        %935 = vmatprep.subr.bf16.mxu0 0
        %936 = vmatpush1.bf16.msra.mxu0 0
        %937 = vmatprep.subr.bf16.mxu0 0
        %938 = vmatpush1.bf16.msra.mxu0 0
        %939 = vmatprep.subr.bf16.mxu0 0
        %940 = vmatpush1.bf16.msra.mxu0 0
        %941 = vmatprep.subr.bf16.mxu0 0
        %942 = vmatpush1.bf16.msra.mxu0 0
        %943 = vmatprep.subr.bf16.mxu0 0
        %944 = vmatpush1.bf16.msra.mxu0 0
        %945 = vmatprep.subr.bf16.mxu0 0
        %946 = vmatpush1.bf16.msra.mxu0 0
        %947 = vmatprep.subr.bf16.mxu0 0
        %948 = vmatpush1.bf16.msra.mxu0 0
        %949 = vmatprep.subr.bf16.mxu0 0
        %950 = vmatpush1.bf16.msra.mxu0 0
        %951 = vmatprep.subr.bf16.mxu0 0
        %952 = vmatpush1.bf16.msra.mxu0 0
        %953 = vmatprep.subr.bf16.mxu0 0
        %954 = vmatpush1.bf16.msra.mxu0 0
        %955 = vmatprep.subr.bf16.mxu0 0
        %956 = vmatpush1.bf16.msra.mxu0 0
        %957 = vmatprep.subr.bf16.mxu0 0
        %958 = vmatpush1.bf16.msra.mxu0 0
        %959 = vmatprep.subr.bf16.mxu0 0
        %960 = vmatpush1.bf16.msra.mxu0 0
        %961 = vmatprep.mubr.bf16.mxu0 0
        %962 = vmatmul.mubr.bf16.gmra.mrb[0].mxu0 %v924
        %v963 = vpop.f32.mrb[0].mxu0
        %v964 = vadd.f32 0.0, %v963
        %v965 = vpop.f32.mrb[0].mxu0
        %v966 = vpop.f32.mrb[0].mxu0
        %v967 = vpop.f32.mrb[0].mxu0
        %968 = vdwg.mxu0
        %v969 = vpack.c.bf16 %v820, %v820
        %v970 = vpack.c.bf16 %v868, %v868
        %v971 = vpack.c.bf16 %v916, %v916
        %v972 = vpack.c.bf16 %v964, %v964
        %v973 = vld [vmem:[%s4] sm:$0xf]
        %v974 = vld [vmem:[%s4 + $0x4] sm:$0xf]
        %v975 = vld [vmem:[%s4 + $0x8] sm:$0xf]
        %v976 = vld [vmem:[%s4 + $0xc] sm:$0xf]
        %v978 = vsel %vm534, %v969, 0
        %v981 = vsel %vm781, %v973, 0
        %983 = vmatprep.subr.bf16.mxu0 0
        %984 = vmatpush1.bf16.msra.mxu0 %v981
        %985 = vmatprep.subr.bf16.mxu0 0
        %986 = vmatpush1.bf16.msra.mxu0 0
        %987 = vmatprep.subr.bf16.mxu0 0
        %988 = vmatpush1.bf16.msra.mxu0 0
        %989 = vmatprep.subr.bf16.mxu0 0
        %990 = vmatpush1.bf16.msra.mxu0 0
        %991 = vmatprep.subr.bf16.mxu0 0
        %992 = vmatpush1.bf16.msra.mxu0 0
        %993 = vmatprep.subr.bf16.mxu0 0
        %994 = vmatpush1.bf16.msra.mxu0 0
        %995 = vmatprep.subr.bf16.mxu0 0
        %996 = vmatpush1.bf16.msra.mxu0 0
        %997 = vmatprep.subr.bf16.mxu0 0
        %998 = vmatpush1.bf16.msra.mxu0 0
        %999 = vmatprep.subr.bf16.mxu0 0
        %1000 = vmatpush1.bf16.msra.mxu0 0
        %1001 = vmatprep.subr.bf16.mxu0 0
        %1002 = vmatpush1.bf16.msra.mxu0 0
        %1003 = vmatprep.subr.bf16.mxu0 0
        %1004 = vmatpush1.bf16.msra.mxu0 0
        %1005 = vmatprep.subr.bf16.mxu0 0
        %1006 = vmatpush1.bf16.msra.mxu0 0
        %1007 = vmatprep.subr.bf16.mxu0 0
        %1008 = vmatpush1.bf16.msra.mxu0 0
        %1009 = vmatprep.subr.bf16.mxu0 0
        %1010 = vmatpush1.bf16.msra.mxu0 0
        %1011 = vmatprep.subr.bf16.mxu0 0
        %1012 = vmatpush1.bf16.msra.mxu0 0
        %1013 = vmatprep.subr.bf16.mxu0 0
        %1014 = vmatpush1.bf16.msra.mxu0 0
        %1015 = vmatprep.mubr.bf16.mxu0 0
        %1016 = vmatmul.mubr.bf16.gmra.mrb[0].mxu0 %v978
        %v1017 = vpop.f32.mrb[0].mxu0
        %v1018 = vadd.f32 0.0, %v1017
        %v1019 = vpop.f32.mrb[0].mxu0
        %v1020 = vpop.f32.mrb[0].mxu0
        %v1021 = vpop.f32.mrb[0].mxu0
        %1022 = vdwg.mxu0
        %v1024 = vsel %vm534, %v970, 0
        %v1027 = vsel %vm781, %v974, 0
        %1029 = vmatprep.subr.bf16.mxu0 0
        %1030 = vmatpush1.bf16.msra.mxu0 %v1027
        %1031 = vmatprep.subr.bf16.mxu0 0
        %1032 = vmatpush1.bf16.msra.mxu0 0
        %1033 = vmatprep.subr.bf16.mxu0 0
        %1034 = vmatpush1.bf16.msra.mxu0 0
        %1035 = vmatprep.subr.bf16.mxu0 0
        %1036 = vmatpush1.bf16.msra.mxu0 0
        %1037 = vmatprep.subr.bf16.mxu0 0
        %1038 = vmatpush1.bf16.msra.mxu0 0
        %1039 = vmatprep.subr.bf16.mxu0 0
        %1040 = vmatpush1.bf16.msra.mxu0 0
        %1041 = vmatprep.subr.bf16.mxu0 0
        %1042 = vmatpush1.bf16.msra.mxu0 0
        %1043 = vmatprep.subr.bf16.mxu0 0
        %1044 = vmatpush1.bf16.msra.mxu0 0
        %1045 = vmatprep.subr.bf16.mxu0 0
        %1046 = vmatpush1.bf16.msra.mxu0 0
        %1047 = vmatprep.subr.bf16.mxu0 0
        %1048 = vmatpush1.bf16.msra.mxu0 0
        %1049 = vmatprep.subr.bf16.mxu0 0
        %1050 = vmatpush1.bf16.msra.mxu0 0
        %1051 = vmatprep.subr.bf16.mxu0 0
        %1052 = vmatpush1.bf16.msra.mxu0 0
        %1053 = vmatprep.subr.bf16.mxu0 0
        %1054 = vmatpush1.bf16.msra.mxu0 0
        %1055 = vmatprep.subr.bf16.mxu0 0
        %1056 = vmatpush1.bf16.msra.mxu0 0
        %1057 = vmatprep.subr.bf16.mxu0 0
        %1058 = vmatpush1.bf16.msra.mxu0 0
        %1059 = vmatprep.subr.bf16.mxu0 0
        %1060 = vmatpush1.bf16.msra.mxu0 0
        %1061 = vmatprep.mubr.bf16.mxu0 0
        %1062 = vmatmul.mubr.bf16.gmra.mrb[0].mxu0 %v1024
        %v1063 = vpop.f32.mrb[0].mxu0
        %v1064 = vadd.f32 0.0, %v1063
        %v1065 = vpop.f32.mrb[0].mxu0
        %v1066 = vpop.f32.mrb[0].mxu0
        %v1067 = vpop.f32.mrb[0].mxu0
        %1068 = vdwg.mxu0
        %v1070 = vsel %vm534, %v971, 0
        %v1073 = vsel %vm781, %v975, 0
        %1075 = vmatprep.subr.bf16.mxu0 0
        %1076 = vmatpush1.bf16.msra.mxu0 %v1073
        %1077 = vmatprep.subr.bf16.mxu0 0
        %1078 = vmatpush1.bf16.msra.mxu0 0
        %1079 = vmatprep.subr.bf16.mxu0 0
        %1080 = vmatpush1.bf16.msra.mxu0 0
        %1081 = vmatprep.subr.bf16.mxu0 0
        %1082 = vmatpush1.bf16.msra.mxu0 0
        %1083 = vmatprep.subr.bf16.mxu0 0
        %1084 = vmatpush1.bf16.msra.mxu0 0
        %1085 = vmatprep.subr.bf16.mxu0 0
        %1086 = vmatpush1.bf16.msra.mxu0 0
        %1087 = vmatprep.subr.bf16.mxu0 0
        %1088 = vmatpush1.bf16.msra.mxu0 0
        %1089 = vmatprep.subr.bf16.mxu0 0
        %1090 = vmatpush1.bf16.msra.mxu0 0
        %1091 = vmatprep.subr.bf16.mxu0 0
        %1092 = vmatpush1.bf16.msra.mxu0 0
        %1093 = vmatprep.subr.bf16.mxu0 0
        %1094 = vmatpush1.bf16.msra.mxu0 0
        %1095 = vmatprep.subr.bf16.mxu0 0
        %1096 = vmatpush1.bf16.msra.mxu0 0
        %1097 = vmatprep.subr.bf16.mxu0 0
        %1098 = vmatpush1.bf16.msra.mxu0 0
        %1099 = vmatprep.subr.bf16.mxu0 0
        %1100 = vmatpush1.bf16.msra.mxu0 0
        %1101 = vmatprep.subr.bf16.mxu0 0
        %1102 = vmatpush1.bf16.msra.mxu0 0
        %1103 = vmatprep.subr.bf16.mxu0 0
        %1104 = vmatpush1.bf16.msra.mxu0 0
        %1105 = vmatprep.subr.bf16.mxu0 0
        %1106 = vmatpush1.bf16.msra.mxu0 0
        %1107 = vmatprep.mubr.bf16.mxu0 0
        %1108 = vmatmul.mubr.bf16.gmra.mrb[0].mxu0 %v1070
        %v1109 = vpop.f32.mrb[0].mxu0
        %v1110 = vadd.f32 0.0, %v1109
        %v1111 = vpop.f32.mrb[0].mxu0
        %v1112 = vpop.f32.mrb[0].mxu0
        %v1113 = vpop.f32.mrb[0].mxu0
        %1114 = vdwg.mxu0
        %v1116 = vsel %vm534, %v972, 0
        %v1119 = vsel %vm781, %v976, 0
        %1121 = vmatprep.subr.bf16.mxu0 0
        %1122 = vmatpush1.bf16.msra.mxu0 %v1119
        %1123 = vmatprep.subr.bf16.mxu0 0
        %1124 = vmatpush1.bf16.msra.mxu0 0
        %1125 = vmatprep.subr.bf16.mxu0 0
        %1126 = vmatpush1.bf16.msra.mxu0 0
        %1127 = vmatprep.subr.bf16.mxu0 0
        %1128 = vmatpush1.bf16.msra.mxu0 0
        %1129 = vmatprep.subr.bf16.mxu0 0
        %1130 = vmatpush1.bf16.msra.mxu0 0
        %1131 = vmatprep.subr.bf16.mxu0 0
        %1132 = vmatpush1.bf16.msra.mxu0 0
        %1133 = vmatprep.subr.bf16.mxu0 0
        %1134 = vmatpush1.bf16.msra.mxu0 0
        %1135 = vmatprep.subr.bf16.mxu0 0
        %1136 = vmatpush1.bf16.msra.mxu0 0
        %1137 = vmatprep.subr.bf16.mxu0 0
        %1138 = vmatpush1.bf16.msra.mxu0 0
        %1139 = vmatprep.subr.bf16.mxu0 0
        %1140 = vmatpush1.bf16.msra.mxu0 0
        %1141 = vmatprep.subr.bf16.mxu0 0
        %1142 = vmatpush1.bf16.msra.mxu0 0
        %1143 = vmatprep.subr.bf16.mxu0 0
        %1144 = vmatpush1.bf16.msra.mxu0 0
        %1145 = vmatprep.subr.bf16.mxu0 0
        %1146 = vmatpush1.bf16.msra.mxu0 0
        %1147 = vmatprep.subr.bf16.mxu0 0
        %1148 = vmatpush1.bf16.msra.mxu0 0
        %1149 = vmatprep.subr.bf16.mxu0 0
        %1150 = vmatpush1.bf16.msra.mxu0 0
        %1151 = vmatprep.subr.bf16.mxu0 0
        %1152 = vmatpush1.bf16.msra.mxu0 0
        %1153 = vmatprep.mubr.bf16.mxu0 0
        %1154 = vmatmul.mubr.bf16.gmra.mrb[0].mxu0 %v1116
        %v1155 = vpop.f32.mrb[0].mxu0
        %v1156 = vadd.f32 0.0, %v1155
        %v1157 = vpop.f32.mrb[0].mxu0
        %v1158 = vpop.f32.mrb[0].mxu0
        %v1159 = vpop.f32.mrb[0].mxu0
        %1160 = vdwg.mxu0
        %v1161 = vsel %vm413, %v1018, 0.0
        %v1162 = vsel %vm413, %v1064, 0.0
        %v1163 = vadd.f32 %v1161, %v1162
        %v1164 = vsel %vm413, %v1110, 0.0
        %v1165 = vadd.f32 %v1163, %v1164
        %v1166 = vsel %vm413, %v1156, 0.0
        %v1167 = vadd.f32 %v1165, %v1166
        %v1168 = vld [vmem:[%s5] sm:$0x1]
        %v1170 = vlaneseq
        %v1171 = vshrl.u32 %v1170, 7
        %v1172 = vsub.s32 0, %v1171
        %v1173 = vrot.slane %v1168, %v1172
        %v1175 = vadd.f32 %v1167, %v1173
        %v1176 = vadd.f32 %v410, %v1175
        %v1177 = vld [vmem:[%s6] sm:$0x1]
        %v1178 = vld [vmem:[%s7] sm:$0x1]
        %v1179 = vsel %vm413, %v1176, 0.0
        %1180 = vadd.xlane.f32.xlu0 %v1179
        %v1181 = vpop.xlane.xlu0 %1180
        %v1182 = vmul.f32 %v1181, %v417
        %v1183 = vsub.f32 %v1176, %v1182
        %v1184 = vmul.f32 %v1183, %v1183
        %v1185 = vsel %vm413, %v1184, 0.0
        %1186 = vadd.xlane.f32.xlu0 %v1185
        %v1187 = vpop.xlane.xlu0 %1186
        %v1188 = vmul.f32 %v1187, %v417
        %v1189 = vadd.f32 %v1188, 1e-05
        %v1190 = vrsqrt.pop %v1189
        %v1191 = vmul.f32 %v1183, %v1190
        %v1193 = vlaneseq
        %v1194 = vshrl.u32 %v1193, 7
        %v1195 = vsub.s32 0, %v1194
        %v1196 = vrot.slane %v1177, %v1195
        %v1198 = vmul.f32 %v1191, %v1196
        %v1200 = vlaneseq
        %v1201 = vshrl.u32 %v1200, 7
        %v1202 = vsub.s32 0, %v1201
        %v1203 = vrot.slane %v1178, %v1202
        %v1205 = vadd.f32 %v1198, %v1203
        %v1206 = vpack.c.bf16 %v1205, %v1205
        %v1207 = vld [vmem:[%s8] sm:$0xf]
        %v1208 = vld [vmem:[%s8 + $0x4] sm:$0xf]
        %v1209 = vld [vmem:[%s8 + $0x8] sm:$0xf]
        %v1210 = vld [vmem:[%s8 + $0xc] sm:$0xf]
        %v1211 = vld [vmem:[%s9] sm:$0x1]
        %v1213 = vlaneseq
        %v1214 = vshrl.u32 %v1213, 7
        %v1215 = vsub.s32 0, %v1214
        %v1216 = vrot.slane %v1211, %v1215
        %v1222 = vunpack.c.l.b16 %v1207
        %v1223 = vunpack.c.l.b16 %v1208
        %v1224 = vunpack.c.l.b16 %v1209
        %v1225 = vunpack.c.l.b16 %v1210
        %v1226 = vpack.c.b16 %v1223, %v1222
        %v1227 = vpack.c.b16 %v1225, %v1224
        %v1231 = vsel %vm413, %v1206, 0
        %1233 = vmatprep.subr.bf16.mxu0 0
        %1234 = vmatpush1.bf16.msra.mxu0 %v1226
        %1235 = vmatprep.subr.bf16.mxu0 0
        %1236 = vmatpush1.bf16.msra.mxu0 %v1227
        %1237 = vmatprep.subr.bf16.mxu0 0
        %1238 = vmatpush1.bf16.msra.mxu0 0
        %1239 = vmatprep.subr.bf16.mxu0 0
        %1240 = vmatpush1.bf16.msra.mxu0 0
        %1241 = vmatprep.subr.bf16.mxu0 0
        %1242 = vmatpush1.bf16.msra.mxu0 0
        %1243 = vmatprep.subr.bf16.mxu0 0
        %1244 = vmatpush1.bf16.msra.mxu0 0
        %1245 = vmatprep.subr.bf16.mxu0 0
        %1246 = vmatpush1.bf16.msra.mxu0 0
        %1247 = vmatprep.subr.bf16.mxu0 0
        %1248 = vmatpush1.bf16.msra.mxu0 0
        %1249 = vmatprep.subr.bf16.mxu0 0
        %1250 = vmatpush1.bf16.msra.mxu0 0
        %1251 = vmatprep.subr.bf16.mxu0 0
        %1252 = vmatpush1.bf16.msra.mxu0 0
        %1253 = vmatprep.subr.bf16.mxu0 0
        %1254 = vmatpush1.bf16.msra.mxu0 0
        %1255 = vmatprep.subr.bf16.mxu0 0
        %1256 = vmatpush1.bf16.msra.mxu0 0
        %1257 = vmatprep.subr.bf16.mxu0 0
        %1258 = vmatpush1.bf16.msra.mxu0 0
        %1259 = vmatprep.subr.bf16.mxu0 0
        %1260 = vmatpush1.bf16.msra.mxu0 0
        %1261 = vmatprep.subr.bf16.mxu0 0
        %1262 = vmatpush1.bf16.msra.mxu0 0
        %1263 = vmatprep.subr.bf16.mxu0 0
        %1264 = vmatpush1.bf16.msra.mxu0 0
        %1265 = vmatprep.mubr.bf16.mxu0 0
        %1266 = vmatmul.mubr.bf16.gmra.mrb[0].mxu0 %v1231
        %v1267 = vpop.f32.mrb[0].mxu0
        %v1268 = vadd.f32 %v1216, %v1267
        %v1269 = vpop.f32.mrb[0].mxu0
        %v1270 = vpop.f32.mrb[0].mxu0
        %v1271 = vpop.f32.mrb[0].mxu0
        %1272 = vdwg.mxu0
        %v1273 = vmul.f32 %v1268, 0.5
        %v1274 = vmul.f32 %v1268, 0.70710677
        %v1275 = verf.f32.pop %v1274
        %v1276 = vadd.f32 %v1275, 1.0
        %v1277 = vmul.f32 %v1273, %v1276
        %v1278 = vpack.c.bf16 %v1277, %v1277
        %v1279 = vld [vmem:[%s10] sm:$0xf]
        %v1280 = vld [vmem:[%s10 + $0x4] sm:$0xf]
        %v1281 = vld [vmem:[%s10 + $0x8] sm:$0xf]
        %v1282 = vld [vmem:[%s10 + $0xc] sm:$0xf]
        %v1283 = vld [vmem:[%s10 + $0x10] sm:$0xf]
        %v1284 = vld [vmem:[%s10 + $0x14] sm:$0xf]
        %v1285 = vld [vmem:[%s10 + $0x18] sm:$0xf]
        %v1286 = vld [vmem:[%s10 + $0x1c] sm:$0xf]
        %v1287 = vld [vmem:[%s10 + $0x20] sm:$0xf]
        %v1288 = vld [vmem:[%s10 + $0x24] sm:$0xf]
        %v1289 = vld [vmem:[%s10 + $0x28] sm:$0xf]
        %v1290 = vld [vmem:[%s10 + $0x2c] sm:$0xf]
        %v1291 = vld [vmem:[%s10 + $0x30] sm:$0xf]
        %v1292 = vld [vmem:[%s10 + $0x34] sm:$0xf]
        %v1293 = vld [vmem:[%s10 + $0x38] sm:$0xf]
        %v1294 = vld [vmem:[%s10 + $0x3c] sm:$0xf]
        %v1295 = vld [vmem:[%s11] sm:$0x1]
        %v1297 = vlaneseq
        %v1298 = vshrl.u32 %v1297, 7
        %v1299 = vsub.s32 0, %v1298
        %v1300 = vrot.slane %v1295, %v1299
        %v1318 = vunpack.c.l.b16 %v1279
        %v1319 = vunpack.c.l.b16 %v1280
        %v1320 = vunpack.c.l.b16 %v1281
        %v1321 = vunpack.c.l.b16 %v1282
        %v1322 = vunpack.c.l.b16 %v1283
        %v1323 = vunpack.c.l.b16 %v1284
        %v1324 = vunpack.c.l.b16 %v1285
        %v1325 = vunpack.c.l.b16 %v1286
        %v1326 = vunpack.c.l.b16 %v1287
        %v1327 = vunpack.c.l.b16 %v1288
        %v1328 = vunpack.c.l.b16 %v1289
        %v1329 = vunpack.c.l.b16 %v1290
        %v1330 = vunpack.c.l.b16 %v1291
        %v1331 = vunpack.c.l.b16 %v1292
        %v1332 = vunpack.c.l.b16 %v1293
        %v1333 = vunpack.c.l.b16 %v1294
        %v1334 = vpack.c.b16 %v1319, %v1318
        %v1335 = vpack.c.b16 %v1321, %v1320
        %v1336 = vpack.c.b16 %v1323, %v1322
        %v1337 = vpack.c.b16 %v1325, %v1324
        %v1338 = vpack.c.b16 %v1327, %v1326
        %v1339 = vpack.c.b16 %v1329, %v1328
        %v1340 = vpack.c.b16 %v1331, %v1330
        %v1341 = vpack.c.b16 %v1333, %v1332
        %1350 = vmatprep.subr.bf16.mxu0 0
        %1351 = vmatpush1.bf16.msra.mxu0 %v1334
        %1352 = vmatprep.subr.bf16.mxu0 0
        %1353 = vmatpush1.bf16.msra.mxu0 %v1335
        %1354 = vmatprep.subr.bf16.mxu0 0
        %1355 = vmatpush1.bf16.msra.mxu0 %v1336
        %1356 = vmatprep.subr.bf16.mxu0 0
        %1357 = vmatpush1.bf16.msra.mxu0 %v1337
        %1358 = vmatprep.subr.bf16.mxu0 0
        %1359 = vmatpush1.bf16.msra.mxu0 %v1338
        %1360 = vmatprep.subr.bf16.mxu0 0
        %1361 = vmatpush1.bf16.msra.mxu0 %v1339
        %1362 = vmatprep.subr.bf16.mxu0 0
        %1363 = vmatpush1.bf16.msra.mxu0 %v1340
        %1364 = vmatprep.subr.bf16.mxu0 0
        %1365 = vmatpush1.bf16.msra.mxu0 %v1341
        %1366 = vmatprep.subr.bf16.mxu0 0
        %1367 = vmatpush1.bf16.msra.mxu0 0
        %1368 = vmatprep.subr.bf16.mxu0 0
        %1369 = vmatpush1.bf16.msra.mxu0 0
        %1370 = vmatprep.subr.bf16.mxu0 0
        %1371 = vmatpush1.bf16.msra.mxu0 0
        %1372 = vmatprep.subr.bf16.mxu0 0
        %1373 = vmatpush1.bf16.msra.mxu0 0
        %1374 = vmatprep.subr.bf16.mxu0 0
        %1375 = vmatpush1.bf16.msra.mxu0 0
        %1376 = vmatprep.subr.bf16.mxu0 0
        %1377 = vmatpush1.bf16.msra.mxu0 0
        %1378 = vmatprep.subr.bf16.mxu0 0
        %1379 = vmatpush1.bf16.msra.mxu0 0
        %1380 = vmatprep.subr.bf16.mxu0 0
        %1381 = vmatpush1.bf16.msra.mxu0 0
        %1382 = vmatprep.mubr.bf16.mxu0 0
        %1383 = vmatmul.mubr.bf16.gmra.mrb[0].mxu0 %v1278
        %v1384 = vpop.f32.mrb[0].mxu0
        %v1385 = vadd.f32 %v1300, %v1384
        %v1386 = vpop.f32.mrb[0].mxu0
        %v1387 = vpop.f32.mrb[0].mxu0
        %v1388 = vpop.f32.mrb[0].mxu0
        %1389 = vdwg.mxu0
        %v1390 = vadd.f32 %v1176, %v1385
        %1391 = vst.msk [vmem:[%s404] sm:$0xff] %vm413, %v1390
        %s1392 = sand.u32 %s291, 1
        %s1393 = scalar_lea.sflag [#allocation3], %s1392
        %s1394 = sand.u32 %s291, 1
        %s1395 = smul.addr %s1394, 8
        %s1396 = scalar_lea.vmem [#allocation2], %s1395
        // Predicated region
        $region69: #{tpu_custom_call.1} parent=67 // pred_check
          %p1397 = pneg %p301
        $region70: #{tpu_custom_call.1} parent=67 // pred_check_branch
          %1399 = sbr.rel (%p1397) target = $region72
        $region71: #{tpu_custom_call.1} parent=67 // pred_region
          %s1401 = ssub.s32 128, 128
          %1402 = vsyncadd %s1393, %s1401
          %s1403 = smul.addr %s26, 128
          %s1404 = scalar_lea.hbm %s12, %s1403
          %s1406 = sshll.u32 %s1396, 4
          %s1407 = int_to_ptr.vmem [resolvable:$true] %s1406
          %1409 = dma.vmem_to_hbm [thread:$0]  %s1407, 128, %s1404, %s1393
        $region72: #{tpu_custom_call.1} parent=67 // pred_fallthru
          _
      $region68: #{tpu_custom_call.1} parent=5 // pred_fallthru
        _
      %p1410 = scmp.le.s32.totalorder 2, %s21
      // Predicated region
      $region73: #{tpu_custom_call.1} parent=5 // pred_check
        %p1411 = pneg %p1410
      $region74: #{tpu_custom_call.1} parent=5 // pred_check_branch
        %1413 = sbr.rel (%p1411) target = $region76
      $region75: #{tpu_custom_call.1} parent=5 // pred_region
        %s1414 = ssub.s32 %s21, 2
        // Predicated region
        $region77: #{tpu_custom_call.1} parent=75 // pred_check
          %p1415 = pneg %p307
        $region78: #{tpu_custom_call.1} parent=75 // pred_check_branch
          %1417 = sbr.rel (%p1415) target = $region80
        $region79: #{tpu_custom_call.1} parent=75 // pred_region
          %s1418 = sand.u32 %s292, 1
          %s1419 = scalar_lea.sflag [#allocation3], %s1418
          %s1420 = sand.u32 %s292, 1
          %s1421 = smul.addr %s1420, 8
          %s1422 = scalar_lea.vmem [#allocation2], %s1421
          %1423 = dma.done %s1419, 128
        $region80: #{tpu_custom_call.1} parent=75 // pred_fallthru
          _
      $region76: #{tpu_custom_call.1} parent=5 // pred_fallthru
        _
    $region6: #{tpu_custom_call.1} parent=1 // loop_footer
      %s25 = sadd.s32 1, %s21
    $region7: #{tpu_custom_call.1} parent=1 // loop_footer_branch
      %20 = sbr.rel target = $region3
    $region8: #{tpu_custom_call.1} parent=1 // loop_exit
      _
    %1424 = vsyncpa [#allocation3], 1
    %s1425 = scalar_lea.sflag [#allocation3], 1
    %1426 = vsyncpa %s1425, 1

// kernel: tpu_custom_call.1
$region0: #{tpu_custom_call.1}
  #allocation0 [shape = 'u32[]', space=smem, size = 0x4, offset = 0x4, fixed_abs, tag = 'smem constant byte address 0x4 - core index']
  #allocation1 [shape = 'u32[144,128]{1,0:T(1,128)}', space=vmem, size = 0x12000, scoped, tag = 'internal scratch']
  %s0 = inlined_call_operand.vmem [shape: f32[2,8,32], index: 0, kind: input, shape index: {}]
  %s1 = inlined_call_operand.vmem [shape: f32[1,32], index: 1, kind: input, shape index: {}]
  %s2 = inlined_call_operand.vmem [shape: f32[1,32], index: 2, kind: input, shape index: {}]
  %s3 = inlined_call_operand.vmem [shape: f32[32,96], index: 3, kind: input, shape index: {}]
  %s4 = inlined_call_operand.vmem [shape: f32[32,32], index: 4, kind: input, shape index: {}]
  %s5 = inlined_call_operand.vmem [shape: f32[1,32], index: 5, kind: input, shape index: {}]
  %s6 = inlined_call_operand.vmem [shape: f32[1,32], index: 6, kind: input, shape index: {}]
  %s7 = inlined_call_operand.vmem [shape: f32[1,32], index: 7, kind: input, shape index: {}]
  %s8 = inlined_call_operand.vmem [shape: f32[32,128], index: 8, kind: input, shape index: {}]
  %s9 = inlined_call_operand.vmem [shape: f32[1,128], index: 9, kind: input, shape index: {}]
  %s10 = inlined_call_operand.vmem [shape: f32[128,32], index: 10, kind: input, shape index: {}]
  %s11 = inlined_call_operand.vmem [shape: f32[1,32], index: 11, kind: input, shape index: {}]
  %s12 = inlined_call_operand.hbm [shape: f32[2,8,32], index: 12, kind: output, shape index: {}]
  %s13 = sld [smem:[#allocation0]]
  $region81: #{tpu_custom_call.1} parent=0
    _
  %s15 = ssub.s32 1, %s13
  %s16 = scalar_select 0, %s15, %s13
  $region1: #{tpu_custom_call.1} parent=0
    #allocation2 [shape = 'u8[8192]{0}', space=vmem, size = 0x2000, scoped, tag = 'output window, operand 0']
    #allocation3 [shape = 's32[2]{0}', space=sflag, size = 0x8, scoped, tag = 'scoped memory for tpu_custom_call.1']
    %17 = vsyncpa [#allocation3], 0
    %s18 = scalar_lea.sflag [#allocation3], 1
    %19 = vsyncpa %s18, 0
    loop: start=0, step=1, limit=4
    $region2: #{tpu_custom_call.1} parent=1 // loop_pre_header
      _
    $region3: #{tpu_custom_call.1} parent=1 // loop_header
      %s21 = sphi 0, %s25
      %p22 = scmp.ge.s32.totalorder %s21, 4
      %s31 = sphi 0, %s33
      %s34 = sphi 0, %s31
      %s35 = sphi 0, %s34
      %s51 = sphi 0, %s35
      %s55 = sphi 0, %s55
      %s57 = sphi 0, %s55
      %s58 = sphi 0, %s57
      %s72 = sphi 0, %s58
      %s76 = sphi 0, %s76
      %s78 = sphi 0, %s76
      %s79 = sphi 0, %s78
      %s93 = sphi 0, %s79
      %s97 = sphi 0, %s97
      %s99 = sphi 0, %s97
      %s100 = sphi 0, %s99
      %s114 = sphi 0, %s100
      %s118 = sphi 0, %s118
      %s120 = sphi 0, %s118
      %s121 = sphi 0, %s120
      %s135 = sphi 0, %s121
      %s139 = sphi 0, %s139
      %s141 = sphi 0, %s139
      %s142 = sphi 0, %s141
      %s156 = sphi 0, %s142
      %s160 = sphi 0, %s160
      %s162 = sphi 0, %s160
      %s163 = sphi 0, %s162
      %s177 = sphi 0, %s163
      %s181 = sphi 0, %s181
      %s183 = sphi 0, %s181
      %s184 = sphi 0, %s183
      %s198 = sphi 0, %s184
      %s202 = sphi 0, %s202
      %s204 = sphi 0, %s202
      %s205 = sphi 0, %s204
      %s219 = sphi 0, %s205
      %s223 = sphi 0, %s223
      %s225 = sphi 0, %s223
      %s226 = sphi 0, %s225
      %s240 = sphi 0, %s226
      %s244 = sphi 0, %s244
      %s246 = sphi 0, %s244
      %s247 = sphi 0, %s246
      %s261 = sphi 0, %s247
      %s265 = sphi 0, %s265
      %s267 = sphi 0, %s265
      %s268 = sphi 0, %s267
      %s282 = sphi 0, %s268
      %s288 = sphi 0, %s290
      %s291 = sphi 0, %s288
      %s292 = sphi 0, %s291
      %s308 = sphi 0, %s292
    $region4: #{tpu_custom_call.1} parent=1 // loop_header_branch
      %24 = sbr.rel (%p22) target = $region8
    $region5: #{tpu_custom_call.1} parent=1 // loop_body
      %s26 = ssub.s32 %s21, 1
      %s27 = ssub.s32 %s21, 2
      %s28 = sadd.s32 %s21, 1
      %s29 = ssub.s32 %s21, %s28
      %p30 = scmp.eq.s32.totalorder %s29, 0
      %s32 = sadd.s32 %s31, 1
      %s33 = scalar_select %p30, %s31, %s32
      %p36 = pneg %p30
      %p37 = scmp.eq.s32.totalorder %s21, 1
      %p38 = por %p36, %p37
      %p39 = scmp.ne.s32.totalorder %s31, %s34
      %p40 = scmp.eq.s32.totalorder %s21, 0
      %p41 = por %p39, %p40
      %p42 = scmp.ne.s32.totalorder %s31, %s34
      %p43 = scmp.eq.s32.totalorder %s26, 1
      %p44 = por %p42, %p43
      %p45 = scmp.ne.s32.totalorder %s34, %s35
      %p46 = scmp.eq.s32.totalorder %s26, 0
      %p47 = por %p45, %p46
      %p48 = scmp.ne.s32.totalorder %s34, %s35
      %p49 = scmp.eq.s32.totalorder %s27, 1
      %p50 = por %p48, %p49
      %p52 = scmp.ne.s32.totalorder %s35, %s51
      %p53 = scmp.eq.s32.totalorder %s27, 0
      %p54 = por %p52, %p53
      %s56 = sadd.s32 %s55, 1
      %p59 = scmp.eq.s32.totalorder %s21, 1
      %p60 = scmp.ne.s32.totalorder %s55, %s57
      %p61 = scmp.eq.s32.totalorder %s21, 0
      %p62 = por %p60, %p61
      %p63 = scmp.ne.s32.totalorder %s55, %s57
      %p64 = scmp.eq.s32.totalorder %s26, 1
      %p65 = por %p63, %p64
      %p66 = scmp.ne.s32.totalorder %s57, %s58
      %p67 = scmp.eq.s32.totalorder %s26, 0
      %p68 = por %p66, %p67
      %p69 = scmp.ne.s32.totalorder %s57, %s58
      %p70 = scmp.eq.s32.totalorder %s27, 1
      %p71 = por %p69, %p70
      %p73 = scmp.ne.s32.totalorder %s58, %s72
      %p74 = scmp.eq.s32.totalorder %s27, 0
      %p75 = por %p73, %p74
      %s77 = sadd.s32 %s76, 1
      %p80 = scmp.eq.s32.totalorder %s21, 1
      %p81 = scmp.ne.s32.totalorder %s76, %s78
      %p82 = scmp.eq.s32.totalorder %s21, 0
      %p83 = por %p81, %p82
      %p84 = scmp.ne.s32.totalorder %s76, %s78
      %p85 = scmp.eq.s32.totalorder %s26, 1
      %p86 = por %p84, %p85
      %p87 = scmp.ne.s32.totalorder %s78, %s79
      %p88 = scmp.eq.s32.totalorder %s26, 0
      %p89 = por %p87, %p88
      %p90 = scmp.ne.s32.totalorder %s78, %s79
      %p91 = scmp.eq.s32.totalorder %s27, 1
      %p92 = por %p90, %p91
      %p94 = scmp.ne.s32.totalorder %s79, %s93
      %p95 = scmp.eq.s32.totalorder %s27, 0
      %p96 = por %p94, %p95
      %s98 = sadd.s32 %s97, 1
      %p101 = scmp.eq.s32.totalorder %s21, 1
      %p102 = scmp.ne.s32.totalorder %s97, %s99
      %p103 = scmp.eq.s32.totalorder %s21, 0
      %p104 = por %p102, %p103
      %p105 = scmp.ne.s32.totalorder %s97, %s99
      %p106 = scmp.eq.s32.totalorder %s26, 1
      %p107 = por %p105, %p106
      %p108 = scmp.ne.s32.totalorder %s99, %s100
      %p109 = scmp.eq.s32.totalorder %s26, 0
      %p110 = por %p108, %p109
      %p111 = scmp.ne.s32.totalorder %s99, %s100
      %p112 = scmp.eq.s32.totalorder %s27, 1
      %p113 = por %p111, %p112
      %p115 = scmp.ne.s32.totalorder %s100, %s114
      %p116 = scmp.eq.s32.totalorder %s27, 0
      %p117 = por %p115, %p116
      %s119 = sadd.s32 %s118, 1
      %p122 = scmp.eq.s32.totalorder %s21, 1
      %p123 = scmp.ne.s32.totalorder %s118, %s120
      %p124 = scmp.eq.s32.totalorder %s21, 0
      %p125 = por %p123, %p124
      %p126 = scmp.ne.s32.totalorder %s118, %s120
      %p127 = scmp.eq.s32.totalorder %s26, 1
      %p128 = por %p126, %p127
      %p129 = scmp.ne.s32.totalorder %s120, %s121
      %p130 = scmp.eq.s32.totalorder %s26, 0
      %p131 = por %p129, %p130
      %p132 = scmp.ne.s32.totalorder %s120, %s121
      %p133 = scmp.eq.s32.totalorder %s27, 1
      %p134 = por %p132, %p133
      %p136 = scmp.ne.s32.totalorder %s121, %s135
      %p137 = scmp.eq.s32.totalorder %s27, 0
      %p138 = por %p136, %p137
      %s140 = sadd.s32 %s139, 1
      %p143 = scmp.eq.s32.totalorder %s21, 1
      %p144 = scmp.ne.s32.totalorder %s139, %s141
      %p145 = scmp.eq.s32.totalorder %s21, 0
      %p146 = por %p144, %p145
      %p147 = scmp.ne.s32.totalorder %s139, %s141
      %p148 = scmp.eq.s32.totalorder %s26, 1
      %p149 = por %p147, %p148
      %p150 = scmp.ne.s32.totalorder %s141, %s142
      %p151 = scmp.eq.s32.totalorder %s26, 0
      %p152 = por %p150, %p151
      %p153 = scmp.ne.s32.totalorder %s141, %s142
      %p154 = scmp.eq.s32.totalorder %s27, 1
      %p155 = por %p153, %p154
      %p157 = scmp.ne.s32.totalorder %s142, %s156
      %p158 = scmp.eq.s32.totalorder %s27, 0
      %p159 = por %p157, %p158
      %s161 = sadd.s32 %s160, 1
      %p164 = scmp.eq.s32.totalorder %s21, 1
      %p165 = scmp.ne.s32.totalorder %s160, %s162
      %p166 = scmp.eq.s32.totalorder %s21, 0
      %p167 = por %p165, %p166
      %p168 = scmp.ne.s32.totalorder %s160, %s162
      %p169 = scmp.eq.s32.totalorder %s26, 1
      %p170 = por %p168, %p169
      %p171 = scmp.ne.s32.totalorder %s162, %s163
      %p172 = scmp.eq.s32.totalorder %s26, 0
      %p173 = por %p171, %p172
      %p174 = scmp.ne.s32.totalorder %s162, %s163
      %p175 = scmp.eq.s32.totalorder %s27, 1
      %p176 = por %p174, %p175
      %p178 = scmp.ne.s32.totalorder %s163, %s177
      %p179 = scmp.eq.s32.totalorder %s27, 0
      %p180 = por %p178, %p179
      %s182 = sadd.s32 %s181, 1
      %p185 = scmp.eq.s32.totalorder %s21, 1
      %p186 = scmp.ne.s32.totalorder %s181, %s183
      %p187 = scmp.eq.s32.totalorder %s21, 0
      %p188 = por %p186, %p187
      %p189 = scmp.ne.s32.totalorder %s181, %s183
      %p190 = scmp.eq.s32.totalorder %s26, 1
      %p191 = por %p189, %p190
      %p192 = scmp.ne.s32.totalorder %s183, %s184
      %p193 = scmp.eq.s32.totalorder %s26, 0
      %p194 = por %p192, %p193
      %p195 = scmp.ne.s32.totalorder %s183, %s184
      %p196 = scmp.eq.s32.totalorder %s27, 1
      %p197 = por %p195, %p196
      %p199 = scmp.ne.s32.totalorder %s184, %s198
      %p200 = scmp.eq.s32.totalorder %s27, 0
      %p201 = por %p199, %p200
      %s203 = sadd.s32 %s202, 1
      %p206 = scmp.eq.s32.totalorder %s21, 1
      %p207 = scmp.ne.s32.totalorder %s202, %s204
      %p208 = scmp.eq.s32.totalorder %s21, 0
      %p209 = por %p207, %p208
      %p210 = scmp.ne.s32.totalorder %s202, %s204
      %p211 = scmp.eq.s32.totalorder %s26, 1
      %p212 = por %p210, %p211
      %p213 = scmp.ne.s32.totalorder %s204, %s205
      %p214 = scmp.eq.s32.totalorder %s26, 0
      %p215 = por %p213, %p214
      %p216 = scmp.ne.s32.totalorder %s204, %s205
      %p217 = scmp.eq.s32.totalorder %s27, 1
      %p218 = por %p216, %p217
      %p220 = scmp.ne.s32.totalorder %s205, %s219
      %p221 = scmp.eq.s32.totalorder %s27, 0
      %p222 = por %p220, %p221
      %s224 = sadd.s32 %s223, 1
      %p227 = scmp.eq.s32.totalorder %s21, 1
      %p228 = scmp.ne.s32.totalorder %s223, %s225
      %p229 = scmp.eq.s32.totalorder %s21, 0
      %p230 = por %p228, %p229
      %p231 = scmp.ne.s32.totalorder %s223, %s225
      %p232 = scmp.eq.s32.totalorder %s26, 1
      %p233 = por %p231, %p232
      %p234 = scmp.ne.s32.totalorder %s225, %s226
      %p235 = scmp.eq.s32.totalorder %s26, 0
      %p236 = por %p234, %p235
      %p237 = scmp.ne.s32.totalorder %s225, %s226
      %p238 = scmp.eq.s32.totalorder %s27, 1
      %p239 = por %p237, %p238
      %p241 = scmp.ne.s32.totalorder %s226, %s240
      %p242 = scmp.eq.s32.totalorder %s27, 0
      %p243 = por %p241, %p242
      %s245 = sadd.s32 %s244, 1
      %p248 = scmp.eq.s32.totalorder %s21, 1
      %p249 = scmp.ne.s32.totalorder %s244, %s246
      %p250 = scmp.eq.s32.totalorder %s21, 0
      %p251 = por %p249, %p250
      %p252 = scmp.ne.s32.totalorder %s244, %s246
      %p253 = scmp.eq.s32.totalorder %s26, 1
      %p254 = por %p252, %p253
      %p255 = scmp.ne.s32.totalorder %s246, %s247
      %p256 = scmp.eq.s32.totalorder %s26, 0
      %p257 = por %p255, %p256
      %p258 = scmp.ne.s32.totalorder %s246, %s247
      %p259 = scmp.eq.s32.totalorder %s27, 1
      %p260 = por %p258, %p259
      %p262 = scmp.ne.s32.totalorder %s247, %s261
      %p263 = scmp.eq.s32.totalorder %s27, 0
      %p264 = por %p262, %p263
      %s266 = sadd.s32 %s265, 1
      %p269 = scmp.eq.s32.totalorder %s21, 1
      %p270 = scmp.ne.s32.totalorder %s265, %s267
      %p271 = scmp.eq.s32.totalorder %s21, 0
      %p272 = por %p270, %p271
      %p273 = scmp.ne.s32.totalorder %s265, %s267
      %p274 = scmp.eq.s32.totalorder %s26, 1
      %p275 = por %p273, %p274
      %p276 = scmp.ne.s32.totalorder %s267, %s268
      %p277 = scmp.eq.s32.totalorder %s26, 0
      %p278 = por %p276, %p277
      %p279 = scmp.ne.s32.totalorder %s267, %s268
      %p280 = scmp.eq.s32.totalorder %s27, 1
      %p281 = por %p279, %p280
      %p283 = scmp.ne.s32.totalorder %s268, %s282
      %p284 = scmp.eq.s32.totalorder %s27, 0
      %p285 = por %p283, %p284
      %s286 = ssub.s32 %s21, %s28
      %p287 = scmp.eq.s32.totalorder %s286, 0
      %s289 = sadd.s32 %s288, 1
      %s290 = scalar_select %p287, %s288, %s289
      %p293 = pneg %p287
      %p294 = scmp.eq.s32.totalorder %s21, 1
      %p295 = por %p293, %p294
      %p296 = scmp.ne.s32.totalorder %s288, %s291
      %p297 = scmp.eq.s32.totalorder %s21, 0
      %p298 = por %p296, %p297
      %p299 = scmp.ne.s32.totalorder %s288, %s291
      %p300 = scmp.eq.s32.totalorder %s26, 1
      %p301 = por %p299, %p300
      %p302 = scmp.ne.s32.totalorder %s291, %s292
      %p303 = scmp.eq.s32.totalorder %s26, 0
      %p304 = por %p302, %p303
      %p305 = scmp.ne.s32.totalorder %s291, %s292
      %p306 = scmp.eq.s32.totalorder %s27, 1
      %p307 = por %p305, %p306
      %p309 = scmp.ne.s32.totalorder %s292, %s308
      %p310 = scmp.eq.s32.totalorder %s27, 0
      %p311 = por %p309, %p310
      %p312 = scmp.le.s32.totalorder 1, %s21
      %p313 = scmp.lt.s32.totalorder %s21, 3
      %p314 = pnand %p312, %p313
      %p315 = pneg %p314
      // Predicated region
      $region9: #{tpu_custom_call.1} parent=5 // pred_check
        _
      $region10: #{tpu_custom_call.1} parent=5 // pred_check_branch
        %317 = sbr.rel (%p314) target = $region12
      $region11: #{tpu_custom_call.1} parent=5 // pred_region
        %s318 = ssub.s32 %s21, 1
        // Predicated region
        $region13: #{tpu_custom_call.1} parent=11 // pred_check
          %p319 = pneg %p68
        $region14: #{tpu_custom_call.1} parent=11 // pred_check_branch
          %321 = sbr.rel (%p319) target = $region16
        $region15: #{tpu_custom_call.1} parent=11 // pred_region
          _
        $region16: #{tpu_custom_call.1} parent=11 // pred_fallthru
          _
        // Predicated region
        $region17: #{tpu_custom_call.1} parent=11 // pred_check
          %p322 = pneg %p89
        $region18: #{tpu_custom_call.1} parent=11 // pred_check_branch
          %324 = sbr.rel (%p322) target = $region20
        $region19: #{tpu_custom_call.1} parent=11 // pred_region
          _
        $region20: #{tpu_custom_call.1} parent=11 // pred_fallthru
          _
        // Predicated region
        $region21: #{tpu_custom_call.1} parent=11 // pred_check
          %p325 = pneg %p110
        $region22: #{tpu_custom_call.1} parent=11 // pred_check_branch
          %327 = sbr.rel (%p325) target = $region24
        $region23: #{tpu_custom_call.1} parent=11 // pred_region
          _
        $region24: #{tpu_custom_call.1} parent=11 // pred_fallthru
          _
        // Predicated region
        $region25: #{tpu_custom_call.1} parent=11 // pred_check
          %p328 = pneg %p131
        $region26: #{tpu_custom_call.1} parent=11 // pred_check_branch
          %330 = sbr.rel (%p328) target = $region28
        $region27: #{tpu_custom_call.1} parent=11 // pred_region
          _
        $region28: #{tpu_custom_call.1} parent=11 // pred_fallthru
          _
        // Predicated region
        $region29: #{tpu_custom_call.1} parent=11 // pred_check
          %p331 = pneg %p152
        $region30: #{tpu_custom_call.1} parent=11 // pred_check_branch
          %333 = sbr.rel (%p331) target = $region32
        $region31: #{tpu_custom_call.1} parent=11 // pred_region
          _
        $region32: #{tpu_custom_call.1} parent=11 // pred_fallthru
          _
        // Predicated region
        $region33: #{tpu_custom_call.1} parent=11 // pred_check
          %p334 = pneg %p173
        $region34: #{tpu_custom_call.1} parent=11 // pred_check_branch
          %336 = sbr.rel (%p334) target = $region36
        $region35: #{tpu_custom_call.1} parent=11 // pred_region
          _
        $region36: #{tpu_custom_call.1} parent=11 // pred_fallthru
          _
        // Predicated region
        $region37: #{tpu_custom_call.1} parent=11 // pred_check
          %p337 = pneg %p194
        $region38: #{tpu_custom_call.1} parent=11 // pred_check_branch
          %339 = sbr.rel (%p337) target = $region40
        $region39: #{tpu_custom_call.1} parent=11 // pred_region
          _
        $region40: #{tpu_custom_call.1} parent=11 // pred_fallthru
          _
        // Predicated region
        $region41: #{tpu_custom_call.1} parent=11 // pred_check
          %p340 = pneg %p215
        $region42: #{tpu_custom_call.1} parent=11 // pred_check_branch
          %342 = sbr.rel (%p340) target = $region44
        $region43: #{tpu_custom_call.1} parent=11 // pred_region
          _
        $region44: #{tpu_custom_call.1} parent=11 // pred_fallthru
          _
        // Predicated region
        $region45: #{tpu_custom_call.1} parent=11 // pred_check
          %p343 = pneg %p236
        $region46: #{tpu_custom_call.1} parent=11 // pred_check_branch
          %345 = sbr.rel (%p343) target = $region48
        $region47: #{tpu_custom_call.1} parent=11 // pred_region
          _
        $region48: #{tpu_custom_call.1} parent=11 // pred_fallthru
          _
        // Predicated region
        $region49: #{tpu_custom_call.1} parent=11 // pred_check
          %p346 = pneg %p257
        $region50: #{tpu_custom_call.1} parent=11 // pred_check_branch
          %348 = sbr.rel (%p346) target = $region52
        $region51: #{tpu_custom_call.1} parent=11 // pred_region
          _
        $region52: #{tpu_custom_call.1} parent=11 // pred_fallthru
          _
        // Predicated region
        $region53: #{tpu_custom_call.1} parent=11 // pred_check
          %p349 = pneg %p278
        $region54: #{tpu_custom_call.1} parent=11 // pred_check_branch
          %351 = sbr.rel (%p349) target = $region56
        $region55: #{tpu_custom_call.1} parent=11 // pred_region
          _
        $region56: #{tpu_custom_call.1} parent=11 // pred_fallthru
          _
      $region12: #{tpu_custom_call.1} parent=5 // pred_fallthru
        _
      %p352 = scmp.lt.s32.totalorder %s21, 2
      // Predicated region
      $region57: #{tpu_custom_call.1} parent=5 // pred_check
        %p353 = pneg %p352
      $region58: #{tpu_custom_call.1} parent=5 // pred_check_branch
        %355 = sbr.rel (%p353) target = $region60
      $region59: #{tpu_custom_call.1} parent=5 // pred_region
        // Predicated region
        $region61: #{tpu_custom_call.1} parent=59 // pred_check
          %p356 = pneg %p41
        $region62: #{tpu_custom_call.1} parent=59 // pred_check_branch
          %358 = sbr.rel (%p356) target = $region64
        $region63: #{tpu_custom_call.1} parent=59 // pred_region
          %p359 = scmp.lt.s32.totalorder %s21, 1
          %s360 = scalar_select %p359, %s21, 1
          %s361 = smul.addr %s360, 8
          %s362 = scalar_lea.vmem %s0, %s361
        $region64: #{tpu_custom_call.1} parent=59 // pred_fallthru
          _
      $region60: #{tpu_custom_call.1} parent=5 // pred_fallthru
        _
      %p363 = scmp.le.s32.totalorder 1, %s21
      %p364 = scmp.lt.s32.totalorder %s21, 3
      %p365 = pnand %p363, %p364
      %p366 = pneg %p365
      // Predicated region
      $region65: #{tpu_custom_call.1} parent=5 // pred_check
        _
      $region66: #{tpu_custom_call.1} parent=5 // pred_check_branch
        %368 = sbr.rel (%p365) target = $region68
      $region67: #{tpu_custom_call.1} parent=5 // pred_region
        %s369 = ssub.s32 %s21, 1
        %p370 = scmp.lt.s32.totalorder %s26, 1
        %s371 = scalar_select %p370, %s26, 1
        %s372 = smul.addr %s371, 8
        %s373 = scalar_lea.vmem %s0, %s372
        %p374 = pneg %p47
        %p375 = pneg %p44
        %p376 = pneg %p68
        %p377 = pneg %p65
        %p378 = pneg %p89
        %p379 = pneg %p86
        %p380 = pneg %p110
        %p381 = pneg %p107
        %p382 = pneg %p131
        %p383 = pneg %p128
        %p384 = pneg %p152
        %p385 = pneg %p149
        %p386 = pneg %p173
        %p387 = pneg %p170
        %p388 = pneg %p194
        %p389 = pneg %p191
        %p390 = pneg %p215
        %p391 = pneg %p212
        %p392 = pneg %p236
        %p393 = pneg %p233
        %p394 = pneg %p257
        %p395 = pneg %p254
        %p396 = pneg %p278
        %p397 = pneg %p275
        %p398 = pneg %p304
        %p399 = pneg %p301
        %s400 = sand.u32 %s291, 1
        %s401 = scalar_lea.sflag [#allocation3], %s400
        %s402 = sand.u32 %s291, 1
        %s403 = smul.addr %s402, 8
        %s404 = scalar_lea.vmem [#allocation2], %s403
        %p405 = scmp.lt.s32.totalorder %s26, 1
        %s406 = scalar_select %p405, %s26, 1
        %s407 = smul.addr %s406, 8
        %s408 = scalar_lea.vmem %s0, %s407
        %v409 = vld [vmem:[%s408] sm:$0xff]
        %v410 = vld [vmem:[%s1] sm:$0x1]
        %v411 = vld [vmem:[%s2] sm:$0x1]
        %vm412 = vcmask 261120
        %v413 = vsel %vm412, %v409, 0.0
        %414 = vadd.xlane.f32.xlu0 %v413
        %v415 = vpop.xlane.xlu0 %414
        %v416 = vrcp.pop 32.0
        %v417 = vmul.f32 %v415, %v416
        %v418 = vsub.f32 %v409, %v417
        %v419 = vmul.f32 %v418, %v418
        %v420 = vsel %vm412, %v419, 0.0
        %421 = vadd.xlane.f32.xlu0 %v420
        %v422 = vpop.xlane.xlu0 %421
        %v423 = vmul.f32 %v422, %v416
        %v424 = vadd.f32 %v423, 1e-05
        %v425 = vrsqrt.pop %v424
        %v426 = vmul.f32 %v418, %v425
        %v428 = vlaneseq
        %v429 = vshrl.u32 %v428, 7
        %v430 = vsub.s32 0, %v429
        %v431 = vrot.slane %v410, %v430
        %v433 = vmul.f32 %v426, %v431
        %v435 = vlaneseq
        %v436 = vshrl.u32 %v435, 7
        %v437 = vsub.s32 0, %v436
        %v438 = vrot.slane %v411, %v437
        %v440 = vadd.f32 %v433, %v438
        %v441 = vld [vmem:[%s3] sm:$0xff]
        %v442 = vld [vmem:[%s3 + $0x8] sm:$0xff]
        %v443 = vld [vmem:[%s3 + $0x10] sm:$0xff]
        %v444 = vld [vmem:[%s3 + $0x18] sm:$0xff]
        %v446 = vsel %vm412, %v440, 0
        %448 = vmatprep.subr.mxu0 0.0
        %449 = vmatpush1.msra.mxu0 %v441
        %450 = vmatprep.subr.mxu0 0.0
        %451 = vmatpush1.msra.mxu0 %v442
        %452 = vmatprep.subr.mxu0 0.0
        %453 = vmatpush1.msra.mxu0 %v443
        %454 = vmatprep.subr.mxu0 0.0
        %455 = vmatpush1.msra.mxu0 %v444
        %456 = vmatprep.subr.mxu0 0.0
        %457 = vmatpush1.msra.mxu0 0.0
        %458 = vmatprep.subr.mxu0 0.0
        %459 = vmatpush1.msra.mxu0 0.0
        %460 = vmatprep.subr.mxu0 0.0
        %461 = vmatpush1.msra.mxu0 0.0
        %462 = vmatprep.subr.mxu0 0.0
        %463 = vmatpush1.msra.mxu0 0.0
        %464 = vmatprep.subr.mxu0 0.0
        %465 = vmatpush1.msra.mxu0 0.0
        %466 = vmatprep.subr.mxu0 0.0
        %467 = vmatpush1.msra.mxu0 0.0
        %468 = vmatprep.subr.mxu0 0.0
        %469 = vmatpush1.msra.mxu0 0.0
        %470 = vmatprep.subr.mxu0 0.0
        %471 = vmatpush1.msra.mxu0 0.0
        %472 = vmatprep.subr.mxu0 0.0
        %473 = vmatpush1.msra.mxu0 0.0
        %474 = vmatprep.subr.mxu0 0.0
        %475 = vmatpush1.msra.mxu0 0.0
        %476 = vmatprep.subr.mxu0 0.0
        %477 = vmatpush1.msra.mxu0 0.0
        %478 = vmatprep.subr.mxu0 0.0
        %479 = vmatpush1.msra.mxu0 0.0
        %480 = vmatprep.subr.mxu0 0.0
        %481 = vmatpush1.msra.mxu0 0.0
        %482 = vmatprep.subr.mxu0 0.0
        %483 = vmatpush1.msra.mxu0 0.0
        %484 = vmatprep.subr.mxu0 0.0
        %485 = vmatpush1.msra.mxu0 0.0
        %486 = vmatprep.subr.mxu0 0.0
        %487 = vmatpush1.msra.mxu0 0.0
        %488 = vmatprep.subr.mxu0 0.0
        %489 = vmatpush1.msra.mxu0 0.0
        %490 = vmatprep.subr.mxu0 0.0
        %491 = vmatpush1.msra.mxu0 0.0
        %492 = vmatprep.subr.mxu0 0.0
        %493 = vmatpush1.msra.mxu0 0.0
        %494 = vmatprep.subr.mxu0 0.0
        %495 = vmatpush1.msra.mxu0 0.0
        %496 = vmatprep.subr.mxu0 0.0
        %497 = vmatpush1.msra.mxu0 0.0
        %498 = vmatprep.subr.mxu0 0.0
        %499 = vmatpush1.msra.mxu0 0.0
        %500 = vmatprep.subr.mxu0 0.0
        %501 = vmatpush1.msra.mxu0 0.0
        %502 = vmatprep.subr.mxu0 0.0
        %503 = vmatpush1.msra.mxu0 0.0
        %504 = vmatprep.subr.mxu0 0.0
        %505 = vmatpush1.msra.mxu0 0.0
        %506 = vmatprep.subr.mxu0 0.0
        %507 = vmatpush1.msra.mxu0 0.0
        %508 = vmatprep.subr.mxu0 0.0
        %509 = vmatpush1.msra.mxu0 0.0
        %510 = vmatprep.subr.mxu0 0.0
        %511 = vmatpush1.msra.mxu0 0.0
        %512 = vmatprep.mubr.f32.mxu0 0.0
        %513 = vmatmul.mubr.f32.gmra.mrb[0].mxu0 %v446
        %v514 = vpop.f32.mrb[0].mxu0
        %v515 = vadd.f32 0.0, %v514
        %v516 = vpop.f32.mrb[0].mxu0
        %517 = vdwg.mxu0
        %519 = vrot.lane.b32.xlu0 %v515, 96
        %v520 = vpop.permute.xlu0 %519
        %vm521 = vcmask 64512
        %v522 = vsel %vm521, %v515, 0
        %v524 = vsel %vm521, %v520, 0
        %526 = vmatprep.subr.mxu0 0.0
        %527 = vmatpush1.xpose.msra.mxu0 %v524
        %528 = vmatprep.subr.mxu0 0.0
        %529 = vmatpush1.xpose.msra.mxu0 0.0
        %530 = vmatprep.subr.mxu0 0.0
        %531 = vmatpush1.xpose.msra.mxu0 0.0
        %532 = vmatprep.subr.mxu0 0.0
        %533 = vmatpush1.xpose.msra.mxu0 0.0
        %534 = vmatprep.subr.mxu0 0.0
        %535 = vmatpush1.xpose.msra.mxu0 0.0
        %536 = vmatprep.subr.mxu0 0.0
        %537 = vmatpush1.xpose.msra.mxu0 0.0
        %538 = vmatprep.subr.mxu0 0.0
        %539 = vmatpush1.xpose.msra.mxu0 0.0
        %540 = vmatprep.subr.mxu0 0.0
        %541 = vmatpush1.xpose.msra.mxu0 0.0
        %542 = vmatprep.subr.mxu0 0.0
        %543 = vmatpush1.xpose.msra.mxu0 0.0
        %544 = vmatprep.subr.mxu0 0.0
        %545 = vmatpush1.xpose.msra.mxu0 0.0
        %546 = vmatprep.subr.mxu0 0.0
        %547 = vmatpush1.xpose.msra.mxu0 0.0
        %548 = vmatprep.subr.mxu0 0.0
        %549 = vmatpush1.xpose.msra.mxu0 0.0
        %550 = vmatprep.subr.mxu0 0.0
        %551 = vmatpush1.xpose.msra.mxu0 0.0
        %552 = vmatprep.subr.mxu0 0.0
        %553 = vmatpush1.xpose.msra.mxu0 0.0
        %554 = vmatprep.subr.mxu0 0.0
        %555 = vmatpush1.xpose.msra.mxu0 0.0
        %556 = vmatprep.subr.mxu0 0.0
        %557 = vmatpush1.xpose.msra.mxu0 0.0
        %558 = vmatprep.subr.mxu0 0.0
        %559 = vmatpush1.xpose.msra.mxu0 0.0
        %560 = vmatprep.subr.mxu0 0.0
        %561 = vmatpush1.xpose.msra.mxu0 0.0
        %562 = vmatprep.subr.mxu0 0.0
        %563 = vmatpush1.xpose.msra.mxu0 0.0
        %564 = vmatprep.subr.mxu0 0.0
        %565 = vmatpush1.xpose.msra.mxu0 0.0
        %566 = vmatprep.subr.mxu0 0.0
        %567 = vmatpush1.xpose.msra.mxu0 0.0
        %568 = vmatprep.subr.mxu0 0.0
        %569 = vmatpush1.xpose.msra.mxu0 0.0
        %570 = vmatprep.subr.mxu0 0.0
        %571 = vmatpush1.xpose.msra.mxu0 0.0
        %572 = vmatprep.subr.mxu0 0.0
        %573 = vmatpush1.xpose.msra.mxu0 0.0
        %574 = vmatprep.subr.mxu0 0.0
        %575 = vmatpush1.xpose.msra.mxu0 0.0
        %576 = vmatprep.subr.mxu0 0.0
        %577 = vmatpush1.xpose.msra.mxu0 0.0
        %578 = vmatprep.subr.mxu0 0.0
        %579 = vmatpush1.xpose.msra.mxu0 0.0
        %580 = vmatprep.subr.mxu0 0.0
        %581 = vmatpush1.xpose.msra.mxu0 0.0
        %582 = vmatprep.subr.mxu0 0.0
        %583 = vmatpush1.xpose.msra.mxu0 0.0
        %584 = vmatprep.subr.mxu0 0.0
        %585 = vmatpush1.xpose.msra.mxu0 0.0
        %586 = vmatprep.subr.mxu0 0.0
        %587 = vmatpush1.xpose.msra.mxu0 0.0
        %588 = vmatprep.subr.mxu0 0.0
        %589 = vmatpush1.xpose.msra.mxu0 0.0
        %590 = vmatprep.mubr.f32.mxu0 0.0
        %591 = vmatmul.mubr.f32.gmra.mrb[0].mxu0 %v522
        %v592 = vpop.f32.mrb[0].mxu0
        %v593 = vadd.f32 0.0, %v592
        %v594 = vpop.f32.mrb[0].mxu0
        %595 = vdwg.mxu0
        %v596 = vmul.f32 %v593, 0.35355338
        %v597 = vsel %vm521, %v596, -inf
        %598 = vmax.xlane.f32.xlu0 %v597
        %v599 = vpop.xlane.xlu0 %598
        %v600 = vsub.f32 %v596, %v599
        %v601 = vmul.f32 %v600, 1.442695
        %v602 = vpow.pop %v601
        %v603 = vsel %vm521, %v602, 0.0
        %604 = vadd.xlane.f32.xlu0 %v603
        %v605 = vpop.xlane.xlu0 %604
        %v606 = vrcp.pop %v605
        %v607 = vmul.f32 %v602, %v606
        %608 = vrot.lane.b32.xlu0 %v515, 64
        %v609 = vpop.permute.xlu0 %608
        %v612 = vsel %vm521, %v607, 0
        %614 = vmatprep.subr.mxu0 0.0
        %615 = vmatpush1.msra.mxu0 %v609
        %616 = vmatprep.subr.mxu0 0.0
        %617 = vmatpush1.msra.mxu0 0.0
        %618 = vmatprep.subr.mxu0 0.0
        %619 = vmatpush1.msra.mxu0 0.0
        %620 = vmatprep.subr.mxu0 0.0
        %621 = vmatpush1.msra.mxu0 0.0
        %622 = vmatprep.subr.mxu0 0.0
        %623 = vmatpush1.msra.mxu0 0.0
        %624 = vmatprep.subr.mxu0 0.0
        %625 = vmatpush1.msra.mxu0 0.0
        %626 = vmatprep.subr.mxu0 0.0
        %627 = vmatpush1.msra.mxu0 0.0
        %628 = vmatprep.subr.mxu0 0.0
        %629 = vmatpush1.msra.mxu0 0.0
        %630 = vmatprep.subr.mxu0 0.0
        %631 = vmatpush1.msra.mxu0 0.0
        %632 = vmatprep.subr.mxu0 0.0
        %633 = vmatpush1.msra.mxu0 0.0
        %634 = vmatprep.subr.mxu0 0.0
        %635 = vmatpush1.msra.mxu0 0.0
        %636 = vmatprep.subr.mxu0 0.0
        %637 = vmatpush1.msra.mxu0 0.0
        %638 = vmatprep.subr.mxu0 0.0
        %639 = vmatpush1.msra.mxu0 0.0
        %640 = vmatprep.subr.mxu0 0.0
        %641 = vmatpush1.msra.mxu0 0.0
        %642 = vmatprep.subr.mxu0 0.0
        %643 = vmatpush1.msra.mxu0 0.0
        %644 = vmatprep.subr.mxu0 0.0
        %645 = vmatpush1.msra.mxu0 0.0
        %646 = vmatprep.subr.mxu0 0.0
        %647 = vmatpush1.msra.mxu0 0.0
        %648 = vmatprep.subr.mxu0 0.0
        %649 = vmatpush1.msra.mxu0 0.0
        %650 = vmatprep.subr.mxu0 0.0
        %651 = vmatpush1.msra.mxu0 0.0
        %652 = vmatprep.subr.mxu0 0.0
        %653 = vmatpush1.msra.mxu0 0.0
        %654 = vmatprep.subr.mxu0 0.0
        %655 = vmatpush1.msra.mxu0 0.0
        %656 = vmatprep.subr.mxu0 0.0
        %657 = vmatpush1.msra.mxu0 0.0
        %658 = vmatprep.subr.mxu0 0.0
        %659 = vmatpush1.msra.mxu0 0.0
        %660 = vmatprep.subr.mxu0 0.0
        %661 = vmatpush1.msra.mxu0 0.0
        %662 = vmatprep.subr.mxu0 0.0
        %663 = vmatpush1.msra.mxu0 0.0
        %664 = vmatprep.subr.mxu0 0.0
        %665 = vmatpush1.msra.mxu0 0.0
        %666 = vmatprep.subr.mxu0 0.0
        %667 = vmatpush1.msra.mxu0 0.0
        %668 = vmatprep.subr.mxu0 0.0
        %669 = vmatpush1.msra.mxu0 0.0
        %670 = vmatprep.subr.mxu0 0.0
        %671 = vmatpush1.msra.mxu0 0.0
        %672 = vmatprep.subr.mxu0 0.0
        %673 = vmatpush1.msra.mxu0 0.0
        %674 = vmatprep.subr.mxu0 0.0
        %675 = vmatpush1.msra.mxu0 0.0
        %676 = vmatprep.subr.mxu0 0.0
        %677 = vmatpush1.msra.mxu0 0.0
        %678 = vmatprep.mubr.f32.mxu0 0.0
        %679 = vmatmul.mubr.f32.gmra.mrb[0].mxu0 %v612
        %v680 = vpop.f32.mrb[0].mxu0
        %v681 = vadd.f32 0.0, %v680
        %v682 = vpop.f32.mrb[0].mxu0
        %683 = vdwg.mxu0
        %684 = vrot.lane.b32.xlu0 %v515, 120
        %v685 = vpop.permute.xlu0 %684
        %686 = vrot.lane.b32.xlu0 %v515, 88
        %v687 = vpop.permute.xlu0 %686
        %v688 = vsel %vm521, %v685, 0
        %v690 = vsel %vm521, %v687, 0
        %692 = vmatprep.subr.mxu0 0.0
        %693 = vmatpush1.xpose.msra.mxu0 %v690
        %694 = vmatprep.subr.mxu0 0.0
        %695 = vmatpush1.xpose.msra.mxu0 0.0
        %696 = vmatprep.subr.mxu0 0.0
        %697 = vmatpush1.xpose.msra.mxu0 0.0
        %698 = vmatprep.subr.mxu0 0.0
        %699 = vmatpush1.xpose.msra.mxu0 0.0
        %700 = vmatprep.subr.mxu0 0.0
        %701 = vmatpush1.xpose.msra.mxu0 0.0
        %702 = vmatprep.subr.mxu0 0.0
        %703 = vmatpush1.xpose.msra.mxu0 0.0
        %704 = vmatprep.subr.mxu0 0.0
        %705 = vmatpush1.xpose.msra.mxu0 0.0
        %706 = vmatprep.subr.mxu0 0.0
        %707 = vmatpush1.xpose.msra.mxu0 0.0
        %708 = vmatprep.subr.mxu0 0.0
        %709 = vmatpush1.xpose.msra.mxu0 0.0
        %710 = vmatprep.subr.mxu0 0.0
        %711 = vmatpush1.xpose.msra.mxu0 0.0
        %712 = vmatprep.subr.mxu0 0.0
        %713 = vmatpush1.xpose.msra.mxu0 0.0
        %714 = vmatprep.subr.mxu0 0.0
        %715 = vmatpush1.xpose.msra.mxu0 0.0
        %716 = vmatprep.subr.mxu0 0.0
        %717 = vmatpush1.xpose.msra.mxu0 0.0
        %718 = vmatprep.subr.mxu0 0.0
        %719 = vmatpush1.xpose.msra.mxu0 0.0
        %720 = vmatprep.subr.mxu0 0.0
        %721 = vmatpush1.xpose.msra.mxu0 0.0
        %722 = vmatprep.subr.mxu0 0.0
        %723 = vmatpush1.xpose.msra.mxu0 0.0
        %724 = vmatprep.subr.mxu0 0.0
        %725 = vmatpush1.xpose.msra.mxu0 0.0
        %726 = vmatprep.subr.mxu0 0.0
        %727 = vmatpush1.xpose.msra.mxu0 0.0
        %728 = vmatprep.subr.mxu0 0.0
        %729 = vmatpush1.xpose.msra.mxu0 0.0
        %730 = vmatprep.subr.mxu0 0.0
        %731 = vmatpush1.xpose.msra.mxu0 0.0
        %732 = vmatprep.subr.mxu0 0.0
        %733 = vmatpush1.xpose.msra.mxu0 0.0
        %734 = vmatprep.subr.mxu0 0.0
        %735 = vmatpush1.xpose.msra.mxu0 0.0
        %736 = vmatprep.subr.mxu0 0.0
        %737 = vmatpush1.xpose.msra.mxu0 0.0
        %738 = vmatprep.subr.mxu0 0.0
        %739 = vmatpush1.xpose.msra.mxu0 0.0
        %740 = vmatprep.subr.mxu0 0.0
        %741 = vmatpush1.xpose.msra.mxu0 0.0
        %742 = vmatprep.subr.mxu0 0.0
        %743 = vmatpush1.xpose.msra.mxu0 0.0
        %744 = vmatprep.subr.mxu0 0.0
        %745 = vmatpush1.xpose.msra.mxu0 0.0
        %746 = vmatprep.subr.mxu0 0.0
        %747 = vmatpush1.xpose.msra.mxu0 0.0
        %748 = vmatprep.subr.mxu0 0.0
        %749 = vmatpush1.xpose.msra.mxu0 0.0
        %750 = vmatprep.subr.mxu0 0.0
        %751 = vmatpush1.xpose.msra.mxu0 0.0
        %752 = vmatprep.subr.mxu0 0.0
        %753 = vmatpush1.xpose.msra.mxu0 0.0
        %754 = vmatprep.subr.mxu0 0.0
        %755 = vmatpush1.xpose.msra.mxu0 0.0
        %756 = vmatprep.mubr.f32.mxu0 0.0
        %757 = vmatmul.mubr.f32.gmra.mrb[0].mxu0 %v688
        %v758 = vpop.f32.mrb[0].mxu0
        %v759 = vadd.f32 0.0, %v758
        %v760 = vpop.f32.mrb[0].mxu0
        %761 = vdwg.mxu0
        %v762 = vmul.f32 %v759, 0.35355338
        %v763 = vsel %vm521, %v762, -inf
        %764 = vmax.xlane.f32.xlu0 %v763
        %v765 = vpop.xlane.xlu0 %764
        %v766 = vsub.f32 %v762, %v765
        %v767 = vmul.f32 %v766, 1.442695
        %v768 = vpow.pop %v767
        %v769 = vsel %vm521, %v768, 0.0
        %770 = vadd.xlane.f32.xlu0 %v769
        %v771 = vpop.xlane.xlu0 %770
        %v772 = vrcp.pop %v771
        %v773 = vmul.f32 %v768, %v772
        %774 = vrot.lane.b32.xlu0 %v515, 56
        %v775 = vpop.permute.xlu0 %774
        %v778 = vsel %vm521, %v773, 0
        %780 = vmatprep.subr.mxu0 0.0
        %781 = vmatpush1.msra.mxu0 %v775
        %782 = vmatprep.subr.mxu0 0.0
        %783 = vmatpush1.msra.mxu0 0.0
        %784 = vmatprep.subr.mxu0 0.0
        %785 = vmatpush1.msra.mxu0 0.0
        %786 = vmatprep.subr.mxu0 0.0
        %787 = vmatpush1.msra.mxu0 0.0
        %788 = vmatprep.subr.mxu0 0.0
        %789 = vmatpush1.msra.mxu0 0.0
        %790 = vmatprep.subr.mxu0 0.0
        %791 = vmatpush1.msra.mxu0 0.0
        %792 = vmatprep.subr.mxu0 0.0
        %793 = vmatpush1.msra.mxu0 0.0
        %794 = vmatprep.subr.mxu0 0.0
        %795 = vmatpush1.msra.mxu0 0.0
        %796 = vmatprep.subr.mxu0 0.0
        %797 = vmatpush1.msra.mxu0 0.0
        %798 = vmatprep.subr.mxu0 0.0
        %799 = vmatpush1.msra.mxu0 0.0
        %800 = vmatprep.subr.mxu0 0.0
        %801 = vmatpush1.msra.mxu0 0.0
        %802 = vmatprep.subr.mxu0 0.0
        %803 = vmatpush1.msra.mxu0 0.0
        %804 = vmatprep.subr.mxu0 0.0
        %805 = vmatpush1.msra.mxu0 0.0
        %806 = vmatprep.subr.mxu0 0.0
        %807 = vmatpush1.msra.mxu0 0.0
        %808 = vmatprep.subr.mxu0 0.0
        %809 = vmatpush1.msra.mxu0 0.0
        %810 = vmatprep.subr.mxu0 0.0
        %811 = vmatpush1.msra.mxu0 0.0
        %812 = vmatprep.subr.mxu0 0.0
        %813 = vmatpush1.msra.mxu0 0.0
        %814 = vmatprep.subr.mxu0 0.0
        %815 = vmatpush1.msra.mxu0 0.0
        %816 = vmatprep.subr.mxu0 0.0
        %817 = vmatpush1.msra.mxu0 0.0
        %818 = vmatprep.subr.mxu0 0.0
        %819 = vmatpush1.msra.mxu0 0.0
        %820 = vmatprep.subr.mxu0 0.0
        %821 = vmatpush1.msra.mxu0 0.0
        %822 = vmatprep.subr.mxu0 0.0
        %823 = vmatpush1.msra.mxu0 0.0
        %824 = vmatprep.subr.mxu0 0.0
        %825 = vmatpush1.msra.mxu0 0.0
        %826 = vmatprep.subr.mxu0 0.0
        %827 = vmatpush1.msra.mxu0 0.0
        %828 = vmatprep.subr.mxu0 0.0
        %829 = vmatpush1.msra.mxu0 0.0
        %830 = vmatprep.subr.mxu0 0.0
        %831 = vmatpush1.msra.mxu0 0.0
        %832 = vmatprep.subr.mxu0 0.0
        %833 = vmatpush1.msra.mxu0 0.0
        %834 = vmatprep.subr.mxu0 0.0
        %835 = vmatpush1.msra.mxu0 0.0
        %836 = vmatprep.subr.mxu0 0.0
        %837 = vmatpush1.msra.mxu0 0.0
        %838 = vmatprep.subr.mxu0 0.0
        %839 = vmatpush1.msra.mxu0 0.0
        %840 = vmatprep.subr.mxu0 0.0
        %841 = vmatpush1.msra.mxu0 0.0
        %842 = vmatprep.subr.mxu0 0.0
        %843 = vmatpush1.msra.mxu0 0.0
        %844 = vmatprep.mubr.f32.mxu0 0.0
        %845 = vmatmul.mubr.f32.gmra.mrb[0].mxu0 %v778
        %v846 = vpop.f32.mrb[0].mxu0
        %v847 = vadd.f32 0.0, %v846
        %v848 = vpop.f32.mrb[0].mxu0
        %849 = vdwg.mxu0
        %850 = vrot.lane.b32.xlu0 %v515, 112
        %v851 = vpop.permute.xlu0 %850
        %852 = vrot.lane.b32.xlu0 %v515, 80
        %v853 = vpop.permute.xlu0 %852
        %v854 = vsel %vm521, %v851, 0
        %v856 = vsel %vm521, %v853, 0
        %858 = vmatprep.subr.mxu0 0.0
        %859 = vmatpush1.xpose.msra.mxu0 %v856
        %860 = vmatprep.subr.mxu0 0.0
        %861 = vmatpush1.xpose.msra.mxu0 0.0
        %862 = vmatprep.subr.mxu0 0.0
        %863 = vmatpush1.xpose.msra.mxu0 0.0
        %864 = vmatprep.subr.mxu0 0.0
        %865 = vmatpush1.xpose.msra.mxu0 0.0
        %866 = vmatprep.subr.mxu0 0.0
        %867 = vmatpush1.xpose.msra.mxu0 0.0
        %868 = vmatprep.subr.mxu0 0.0
        %869 = vmatpush1.xpose.msra.mxu0 0.0
        %870 = vmatprep.subr.mxu0 0.0
        %871 = vmatpush1.xpose.msra.mxu0 0.0
        %872 = vmatprep.subr.mxu0 0.0
        %873 = vmatpush1.xpose.msra.mxu0 0.0
        %874 = vmatprep.subr.mxu0 0.0
        %875 = vmatpush1.xpose.msra.mxu0 0.0
        %876 = vmatprep.subr.mxu0 0.0
        %877 = vmatpush1.xpose.msra.mxu0 0.0
        %878 = vmatprep.subr.mxu0 0.0
        %879 = vmatpush1.xpose.msra.mxu0 0.0
        %880 = vmatprep.subr.mxu0 0.0
        %881 = vmatpush1.xpose.msra.mxu0 0.0
        %882 = vmatprep.subr.mxu0 0.0
        %883 = vmatpush1.xpose.msra.mxu0 0.0
        %884 = vmatprep.subr.mxu0 0.0
        %885 = vmatpush1.xpose.msra.mxu0 0.0
        %886 = vmatprep.subr.mxu0 0.0
        %887 = vmatpush1.xpose.msra.mxu0 0.0
        %888 = vmatprep.subr.mxu0 0.0
        %889 = vmatpush1.xpose.msra.mxu0 0.0
        %890 = vmatprep.subr.mxu0 0.0
        %891 = vmatpush1.xpose.msra.mxu0 0.0
        %892 = vmatprep.subr.mxu0 0.0
        %893 = vmatpush1.xpose.msra.mxu0 0.0
        %894 = vmatprep.subr.mxu0 0.0
        %895 = vmatpush1.xpose.msra.mxu0 0.0
        %896 = vmatprep.subr.mxu0 0.0
        %897 = vmatpush1.xpose.msra.mxu0 0.0
        %898 = vmatprep.subr.mxu0 0.0
        %899 = vmatpush1.xpose.msra.mxu0 0.0
        %900 = vmatprep.subr.mxu0 0.0
        %901 = vmatpush1.xpose.msra.mxu0 0.0
        %902 = vmatprep.subr.mxu0 0.0
        %903 = vmatpush1.xpose.msra.mxu0 0.0
        %904 = vmatprep.subr.mxu0 0.0
        %905 = vmatpush1.xpose.msra.mxu0 0.0
        %906 = vmatprep.subr.mxu0 0.0
        %907 = vmatpush1.xpose.msra.mxu0 0.0
        %908 = vmatprep.subr.mxu0 0.0
        %909 = vmatpush1.xpose.msra.mxu0 0.0
        %910 = vmatprep.subr.mxu0 0.0
        %911 = vmatpush1.xpose.msra.mxu0 0.0
        %912 = vmatprep.subr.mxu0 0.0
        %913 = vmatpush1.xpose.msra.mxu0 0.0
        %914 = vmatprep.subr.mxu0 0.0
        %915 = vmatpush1.xpose.msra.mxu0 0.0
        %916 = vmatprep.subr.mxu0 0.0
        %917 = vmatpush1.xpose.msra.mxu0 0.0
        %918 = vmatprep.subr.mxu0 0.0
        %919 = vmatpush1.xpose.msra.mxu0 0.0
        %920 = vmatprep.subr.mxu0 0.0
        %921 = vmatpush1.xpose.msra.mxu0 0.0
        %922 = vmatprep.mubr.f32.mxu0 0.0
        %923 = vmatmul.mubr.f32.gmra.mrb[0].mxu0 %v854
        %v924 = vpop.f32.mrb[0].mxu0
        %v925 = vadd.f32 0.0, %v924
        %v926 = vpop.f32.mrb[0].mxu0
        %927 = vdwg.mxu0
        %v928 = vmul.f32 %v925, 0.35355338
        %v929 = vsel %vm521, %v928, -inf
        %930 = vmax.xlane.f32.xlu0 %v929
        %v931 = vpop.xlane.xlu0 %930
        %v932 = vsub.f32 %v928, %v931
        %v933 = vmul.f32 %v932, 1.442695
        %v934 = vpow.pop %v933
        %v935 = vsel %vm521, %v934, 0.0
        %936 = vadd.xlane.f32.xlu0 %v935
        %v937 = vpop.xlane.xlu0 %936
        %v938 = vrcp.pop %v937
        %v939 = vmul.f32 %v934, %v938
        %940 = vrot.lane.b32.xlu0 %v515, 48
        %v941 = vpop.permute.xlu0 %940
        %v944 = vsel %vm521, %v939, 0
        %946 = vmatprep.subr.mxu0 0.0
        %947 = vmatpush1.msra.mxu0 %v941
        %948 = vmatprep.subr.mxu0 0.0
        %949 = vmatpush1.msra.mxu0 0.0
        %950 = vmatprep.subr.mxu0 0.0
        %951 = vmatpush1.msra.mxu0 0.0
        %952 = vmatprep.subr.mxu0 0.0
        %953 = vmatpush1.msra.mxu0 0.0
        %954 = vmatprep.subr.mxu0 0.0
        %955 = vmatpush1.msra.mxu0 0.0
        %956 = vmatprep.subr.mxu0 0.0
        %957 = vmatpush1.msra.mxu0 0.0
        %958 = vmatprep.subr.mxu0 0.0
        %959 = vmatpush1.msra.mxu0 0.0
        %960 = vmatprep.subr.mxu0 0.0
        %961 = vmatpush1.msra.mxu0 0.0
        %962 = vmatprep.subr.mxu0 0.0
        %963 = vmatpush1.msra.mxu0 0.0
        %964 = vmatprep.subr.mxu0 0.0
        %965 = vmatpush1.msra.mxu0 0.0
        %966 = vmatprep.subr.mxu0 0.0
        %967 = vmatpush1.msra.mxu0 0.0
        %968 = vmatprep.subr.mxu0 0.0
        %969 = vmatpush1.msra.mxu0 0.0
        %970 = vmatprep.subr.mxu0 0.0
        %971 = vmatpush1.msra.mxu0 0.0
        %972 = vmatprep.subr.mxu0 0.0
        %973 = vmatpush1.msra.mxu0 0.0
        %974 = vmatprep.subr.mxu0 0.0
        %975 = vmatpush1.msra.mxu0 0.0
        %976 = vmatprep.subr.mxu0 0.0
        %977 = vmatpush1.msra.mxu0 0.0
        %978 = vmatprep.subr.mxu0 0.0
        %979 = vmatpush1.msra.mxu0 0.0
        %980 = vmatprep.subr.mxu0 0.0
        %981 = vmatpush1.msra.mxu0 0.0
        %982 = vmatprep.subr.mxu0 0.0
        %983 = vmatpush1.msra.mxu0 0.0
        %984 = vmatprep.subr.mxu0 0.0
        %985 = vmatpush1.msra.mxu0 0.0
        %986 = vmatprep.subr.mxu0 0.0
        %987 = vmatpush1.msra.mxu0 0.0
        %988 = vmatprep.subr.mxu0 0.0
        %989 = vmatpush1.msra.mxu0 0.0
        %990 = vmatprep.subr.mxu0 0.0
        %991 = vmatpush1.msra.mxu0 0.0
        %992 = vmatprep.subr.mxu0 0.0
        %993 = vmatpush1.msra.mxu0 0.0
        %994 = vmatprep.subr.mxu0 0.0
        %995 = vmatpush1.msra.mxu0 0.0
        %996 = vmatprep.subr.mxu0 0.0
        %997 = vmatpush1.msra.mxu0 0.0
        %998 = vmatprep.subr.mxu0 0.0
        %999 = vmatpush1.msra.mxu0 0.0
        %1000 = vmatprep.subr.mxu0 0.0
        %1001 = vmatpush1.msra.mxu0 0.0
        %1002 = vmatprep.subr.mxu0 0.0
        %1003 = vmatpush1.msra.mxu0 0.0
        %1004 = vmatprep.subr.mxu0 0.0
        %1005 = vmatpush1.msra.mxu0 0.0
        %1006 = vmatprep.subr.mxu0 0.0
        %1007 = vmatpush1.msra.mxu0 0.0
        %1008 = vmatprep.subr.mxu0 0.0
        %1009 = vmatpush1.msra.mxu0 0.0
        %1010 = vmatprep.mubr.f32.mxu0 0.0
        %1011 = vmatmul.mubr.f32.gmra.mrb[0].mxu0 %v944
        %v1012 = vpop.f32.mrb[0].mxu0
        %v1013 = vadd.f32 0.0, %v1012
        %v1014 = vpop.f32.mrb[0].mxu0
        %1015 = vdwg.mxu0
        %1016 = vrot.lane.b32.xlu0 %v515, 104
        %v1017 = vpop.permute.xlu0 %1016
        %1018 = vrot.lane.b32.xlu0 %v515, 72
        %v1019 = vpop.permute.xlu0 %1018
        %v1020 = vsel %vm521, %v1017, 0
        %v1022 = vsel %vm521, %v1019, 0
        %1024 = vmatprep.subr.mxu0 0.0
        %1025 = vmatpush1.xpose.msra.mxu0 %v1022
        %1026 = vmatprep.subr.mxu0 0.0
        %1027 = vmatpush1.xpose.msra.mxu0 0.0
        %1028 = vmatprep.subr.mxu0 0.0
        %1029 = vmatpush1.xpose.msra.mxu0 0.0
        %1030 = vmatprep.subr.mxu0 0.0
        %1031 = vmatpush1.xpose.msra.mxu0 0.0
        %1032 = vmatprep.subr.mxu0 0.0
        %1033 = vmatpush1.xpose.msra.mxu0 0.0
        %1034 = vmatprep.subr.mxu0 0.0
        %1035 = vmatpush1.xpose.msra.mxu0 0.0
        %1036 = vmatprep.subr.mxu0 0.0
        %1037 = vmatpush1.xpose.msra.mxu0 0.0
        %1038 = vmatprep.subr.mxu0 0.0
        %1039 = vmatpush1.xpose.msra.mxu0 0.0
        %1040 = vmatprep.subr.mxu0 0.0
        %1041 = vmatpush1.xpose.msra.mxu0 0.0
        %1042 = vmatprep.subr.mxu0 0.0
        %1043 = vmatpush1.xpose.msra.mxu0 0.0
        %1044 = vmatprep.subr.mxu0 0.0
        %1045 = vmatpush1.xpose.msra.mxu0 0.0
        %1046 = vmatprep.subr.mxu0 0.0
        %1047 = vmatpush1.xpose.msra.mxu0 0.0
        %1048 = vmatprep.subr.mxu0 0.0
        %1049 = vmatpush1.xpose.msra.mxu0 0.0
        %1050 = vmatprep.subr.mxu0 0.0
        %1051 = vmatpush1.xpose.msra.mxu0 0.0
        %1052 = vmatprep.subr.mxu0 0.0
        %1053 = vmatpush1.xpose.msra.mxu0 0.0
        %1054 = vmatprep.subr.mxu0 0.0
        %1055 = vmatpush1.xpose.msra.mxu0 0.0
        %1056 = vmatprep.subr.mxu0 0.0
        %1057 = vmatpush1.xpose.msra.mxu0 0.0
        %1058 = vmatprep.subr.mxu0 0.0
        %1059 = vmatpush1.xpose.msra.mxu0 0.0
        %1060 = vmatprep.subr.mxu0 0.0
        %1061 = vmatpush1.xpose.msra.mxu0 0.0
        %1062 = vmatprep.subr.mxu0 0.0
        %1063 = vmatpush1.xpose.msra.mxu0 0.0
        %1064 = vmatprep.subr.mxu0 0.0
        %1065 = vmatpush1.xpose.msra.mxu0 0.0
        %1066 = vmatprep.subr.mxu0 0.0
        %1067 = vmatpush1.xpose.msra.mxu0 0.0
        %1068 = vmatprep.subr.mxu0 0.0
        %1069 = vmatpush1.xpose.msra.mxu0 0.0
        %1070 = vmatprep.subr.mxu0 0.0
        %1071 = vmatpush1.xpose.msra.mxu0 0.0
        %1072 = vmatprep.subr.mxu0 0.0
        %1073 = vmatpush1.xpose.msra.mxu0 0.0
        %1074 = vmatprep.subr.mxu0 0.0
        %1075 = vmatpush1.xpose.msra.mxu0 0.0
        %1076 = vmatprep.subr.mxu0 0.0
        %1077 = vmatpush1.xpose.msra.mxu0 0.0
        %1078 = vmatprep.subr.mxu0 0.0
        %1079 = vmatpush1.xpose.msra.mxu0 0.0
        %1080 = vmatprep.subr.mxu0 0.0
        %1081 = vmatpush1.xpose.msra.mxu0 0.0
        %1082 = vmatprep.subr.mxu0 0.0
        %1083 = vmatpush1.xpose.msra.mxu0 0.0
        %1084 = vmatprep.subr.mxu0 0.0
        %1085 = vmatpush1.xpose.msra.mxu0 0.0
        %1086 = vmatprep.subr.mxu0 0.0
        %1087 = vmatpush1.xpose.msra.mxu0 0.0
        %1088 = vmatprep.mubr.f32.mxu0 0.0
        %1089 = vmatmul.mubr.f32.gmra.mrb[0].mxu0 %v1020
        %v1090 = vpop.f32.mrb[0].mxu0
        %v1091 = vadd.f32 0.0, %v1090
        %v1092 = vpop.f32.mrb[0].mxu0
        %1093 = vdwg.mxu0
        %v1094 = vmul.f32 %v1091, 0.35355338
        %v1095 = vsel %vm521, %v1094, -inf
        %1096 = vmax.xlane.f32.xlu0 %v1095
        %v1097 = vpop.xlane.xlu0 %1096
        %v1098 = vsub.f32 %v1094, %v1097
        %v1099 = vmul.f32 %v1098, 1.442695
        %v1100 = vpow.pop %v1099
        %v1101 = vsel %vm521, %v1100, 0.0
        %1102 = vadd.xlane.f32.xlu0 %v1101
        %v1103 = vpop.xlane.xlu0 %1102
        %v1104 = vrcp.pop %v1103
        %v1105 = vmul.f32 %v1100, %v1104
        %1106 = vrot.lane.b32.xlu0 %v515, 40
        %v1107 = vpop.permute.xlu0 %1106
        %v1110 = vsel %vm521, %v1105, 0
        %1112 = vmatprep.subr.mxu0 0.0
        %1113 = vmatpush1.msra.mxu0 %v1107
        %1114 = vmatprep.subr.mxu0 0.0
        %1115 = vmatpush1.msra.mxu0 0.0
        %1116 = vmatprep.subr.mxu0 0.0
        %1117 = vmatpush1.msra.mxu0 0.0
        %1118 = vmatprep.subr.mxu0 0.0
        %1119 = vmatpush1.msra.mxu0 0.0
        %1120 = vmatprep.subr.mxu0 0.0
        %1121 = vmatpush1.msra.mxu0 0.0
        %1122 = vmatprep.subr.mxu0 0.0
        %1123 = vmatpush1.msra.mxu0 0.0
        %1124 = vmatprep.subr.mxu0 0.0
        %1125 = vmatpush1.msra.mxu0 0.0
        %1126 = vmatprep.subr.mxu0 0.0
        %1127 = vmatpush1.msra.mxu0 0.0
        %1128 = vmatprep.subr.mxu0 0.0
        %1129 = vmatpush1.msra.mxu0 0.0
        %1130 = vmatprep.subr.mxu0 0.0
        %1131 = vmatpush1.msra.mxu0 0.0
        %1132 = vmatprep.subr.mxu0 0.0
        %1133 = vmatpush1.msra.mxu0 0.0
        %1134 = vmatprep.subr.mxu0 0.0
        %1135 = vmatpush1.msra.mxu0 0.0
        %1136 = vmatprep.subr.mxu0 0.0
        %1137 = vmatpush1.msra.mxu0 0.0
        %1138 = vmatprep.subr.mxu0 0.0
        %1139 = vmatpush1.msra.mxu0 0.0
        %1140 = vmatprep.subr.mxu0 0.0
        %1141 = vmatpush1.msra.mxu0 0.0
        %1142 = vmatprep.subr.mxu0 0.0
        %1143 = vmatpush1.msra.mxu0 0.0
        %1144 = vmatprep.subr.mxu0 0.0
        %1145 = vmatpush1.msra.mxu0 0.0
        %1146 = vmatprep.subr.mxu0 0.0
        %1147 = vmatpush1.msra.mxu0 0.0
        %1148 = vmatprep.subr.mxu0 0.0
        %1149 = vmatpush1.msra.mxu0 0.0
        %1150 = vmatprep.subr.mxu0 0.0
        %1151 = vmatpush1.msra.mxu0 0.0
        %1152 = vmatprep.subr.mxu0 0.0
        %1153 = vmatpush1.msra.mxu0 0.0
        %1154 = vmatprep.subr.mxu0 0.0
        %1155 = vmatpush1.msra.mxu0 0.0
        %1156 = vmatprep.subr.mxu0 0.0
        %1157 = vmatpush1.msra.mxu0 0.0
        %1158 = vmatprep.subr.mxu0 0.0
        %1159 = vmatpush1.msra.mxu0 0.0
        %1160 = vmatprep.subr.mxu0 0.0
        %1161 = vmatpush1.msra.mxu0 0.0
        %1162 = vmatprep.subr.mxu0 0.0
        %1163 = vmatpush1.msra.mxu0 0.0
        %1164 = vmatprep.subr.mxu0 0.0
        %1165 = vmatpush1.msra.mxu0 0.0
        %1166 = vmatprep.subr.mxu0 0.0
        %1167 = vmatpush1.msra.mxu0 0.0
        %1168 = vmatprep.subr.mxu0 0.0
        %1169 = vmatpush1.msra.mxu0 0.0
        %1170 = vmatprep.subr.mxu0 0.0
        %1171 = vmatpush1.msra.mxu0 0.0
        %1172 = vmatprep.subr.mxu0 0.0
        %1173 = vmatpush1.msra.mxu0 0.0
        %1174 = vmatprep.subr.mxu0 0.0
        %1175 = vmatpush1.msra.mxu0 0.0
        %1176 = vmatprep.mubr.f32.mxu0 0.0
        %1177 = vmatmul.mubr.f32.gmra.mrb[0].mxu0 %v1110
        %v1178 = vpop.f32.mrb[0].mxu0
        %v1179 = vadd.f32 0.0, %v1178
        %v1180 = vpop.f32.mrb[0].mxu0
        %1181 = vdwg.mxu0
        %1183 = vrot.lane.b32.xlu0 %v847, 8
        %v1184 = vpop.permute.xlu0 %1183
        %1187 = vrot.lane.b32.xlu0 %v1013, 16
        %v1188 = vpop.permute.xlu0 %1187
        %1191 = vrot.lane.b32.xlu0 %v1179, 24
        %v1192 = vpop.permute.xlu0 %1191
        %v1194 = vsel %vm521, %v681, %v1184
        %vm1195 = vcmask 130048
        %v1196 = vsel %vm1195, %v1194, %v1188
        %vm1197 = vcmask 195584
        %v1198 = vsel %vm1197, %v1196, %v1192
        %v1199 = vld [vmem:[%s4] sm:$0xff]
        %v1200 = vld [vmem:[%s4 + $0x8] sm:$0xff]
        %v1201 = vld [vmem:[%s4 + $0x10] sm:$0xff]
        %v1202 = vld [vmem:[%s4 + $0x18] sm:$0xff]
        %v1203 = vld [vmem:[%s5] sm:$0x1]
        %v1205 = vlaneseq
        %v1206 = vshrl.u32 %v1205, 7
        %v1207 = vsub.s32 0, %v1206
        %v1208 = vrot.slane %v1203, %v1207
        %v1211 = vsel %vm412, %v1198, 0
        %1213 = vmatprep.subr.mxu0 0.0
        %1214 = vmatpush1.msra.mxu0 %v1199
        %1215 = vmatprep.subr.mxu0 0.0
        %1216 = vmatpush1.msra.mxu0 %v1200
        %1217 = vmatprep.subr.mxu0 0.0
        %1218 = vmatpush1.msra.mxu0 %v1201
        %1219 = vmatprep.subr.mxu0 0.0
        %1220 = vmatpush1.msra.mxu0 %v1202
        %1221 = vmatprep.subr.mxu0 0.0
        %1222 = vmatpush1.msra.mxu0 0.0
        %1223 = vmatprep.subr.mxu0 0.0
        %1224 = vmatpush1.msra.mxu0 0.0
        %1225 = vmatprep.subr.mxu0 0.0
        %1226 = vmatpush1.msra.mxu0 0.0
        %1227 = vmatprep.subr.mxu0 0.0
        %1228 = vmatpush1.msra.mxu0 0.0
        %1229 = vmatprep.subr.mxu0 0.0
        %1230 = vmatpush1.msra.mxu0 0.0
        %1231 = vmatprep.subr.mxu0 0.0
        %1232 = vmatpush1.msra.mxu0 0.0
        %1233 = vmatprep.subr.mxu0 0.0
        %1234 = vmatpush1.msra.mxu0 0.0
        %1235 = vmatprep.subr.mxu0 0.0
        %1236 = vmatpush1.msra.mxu0 0.0
        %1237 = vmatprep.subr.mxu0 0.0
        %1238 = vmatpush1.msra.mxu0 0.0
        %1239 = vmatprep.subr.mxu0 0.0
        %1240 = vmatpush1.msra.mxu0 0.0
        %1241 = vmatprep.subr.mxu0 0.0
        %1242 = vmatpush1.msra.mxu0 0.0
        %1243 = vmatprep.subr.mxu0 0.0
        %1244 = vmatpush1.msra.mxu0 0.0
        %1245 = vmatprep.subr.mxu0 0.0
        %1246 = vmatpush1.msra.mxu0 0.0
        %1247 = vmatprep.subr.mxu0 0.0
        %1248 = vmatpush1.msra.mxu0 0.0
        %1249 = vmatprep.subr.mxu0 0.0
        %1250 = vmatpush1.msra.mxu0 0.0
        %1251 = vmatprep.subr.mxu0 0.0
        %1252 = vmatpush1.msra.mxu0 0.0
        %1253 = vmatprep.subr.mxu0 0.0
        %1254 = vmatpush1.msra.mxu0 0.0
        %1255 = vmatprep.subr.mxu0 0.0
        %1256 = vmatpush1.msra.mxu0 0.0
        %1257 = vmatprep.subr.mxu0 0.0
        %1258 = vmatpush1.msra.mxu0 0.0
        %1259 = vmatprep.subr.mxu0 0.0
        %1260 = vmatpush1.msra.mxu0 0.0
        %1261 = vmatprep.subr.mxu0 0.0
        %1262 = vmatpush1.msra.mxu0 0.0
        %1263 = vmatprep.subr.mxu0 0.0
        %1264 = vmatpush1.msra.mxu0 0.0
        %1265 = vmatprep.subr.mxu0 0.0
        %1266 = vmatpush1.msra.mxu0 0.0
        %1267 = vmatprep.subr.mxu0 0.0
        %1268 = vmatpush1.msra.mxu0 0.0
        %1269 = vmatprep.subr.mxu0 0.0
        %1270 = vmatpush1.msra.mxu0 0.0
        %1271 = vmatprep.subr.mxu0 0.0
        %1272 = vmatpush1.msra.mxu0 0.0
        %1273 = vmatprep.subr.mxu0 0.0
        %1274 = vmatpush1.msra.mxu0 0.0
        %1275 = vmatprep.subr.mxu0 0.0
        %1276 = vmatpush1.msra.mxu0 0.0
        %1277 = vmatprep.mubr.f32.mxu0 0.0
        %1278 = vmatmul.mubr.f32.gmra.mrb[0].mxu0 %v1211
        %v1279 = vpop.f32.mrb[0].mxu0
        %v1280 = vadd.f32 %v1208, %v1279
        %v1281 = vpop.f32.mrb[0].mxu0
        %1282 = vdwg.mxu0
        %v1283 = vadd.f32 %v409, %v1280
        %v1284 = vld [vmem:[%s6] sm:$0x1]
        %v1285 = vld [vmem:[%s7] sm:$0x1]
        %v1286 = vsel %vm412, %v1283, 0.0
        %1287 = vadd.xlane.f32.xlu0 %v1286
        %v1288 = vpop.xlane.xlu0 %1287
        %v1289 = vmul.f32 %v1288, %v416
        %v1290 = vsub.f32 %v1283, %v1289
        %v1291 = vmul.f32 %v1290, %v1290
        %v1292 = vsel %vm412, %v1291, 0.0
        %1293 = vadd.xlane.f32.xlu0 %v1292
        %v1294 = vpop.xlane.xlu0 %1293
        %v1295 = vmul.f32 %v1294, %v416
        %v1296 = vadd.f32 %v1295, 1e-05
        %v1297 = vrsqrt.pop %v1296
        %v1298 = vmul.f32 %v1290, %v1297
        %v1300 = vlaneseq
        %v1301 = vshrl.u32 %v1300, 7
        %v1302 = vsub.s32 0, %v1301
        %v1303 = vrot.slane %v1284, %v1302
        %v1305 = vmul.f32 %v1298, %v1303
        %v1307 = vlaneseq
        %v1308 = vshrl.u32 %v1307, 7
        %v1309 = vsub.s32 0, %v1308
        %v1310 = vrot.slane %v1285, %v1309
        %v1312 = vadd.f32 %v1305, %v1310
        %v1313 = vld [vmem:[%s8] sm:$0xff]
        %v1314 = vld [vmem:[%s8 + $0x8] sm:$0xff]
        %v1315 = vld [vmem:[%s8 + $0x10] sm:$0xff]
        %v1316 = vld [vmem:[%s8 + $0x18] sm:$0xff]
        %v1317 = vld [vmem:[%s9] sm:$0x1]
        %v1319 = vlaneseq
        %v1320 = vshrl.u32 %v1319, 7
        %v1321 = vsub.s32 0, %v1320
        %v1322 = vrot.slane %v1317, %v1321
        %v1325 = vsel %vm412, %v1312, 0
        %1327 = vmatprep.subr.mxu0 0.0
        %1328 = vmatpush1.msra.mxu0 %v1313
        %1329 = vmatprep.subr.mxu0 0.0
        %1330 = vmatpush1.msra.mxu0 %v1314
        %1331 = vmatprep.subr.mxu0 0.0
        %1332 = vmatpush1.msra.mxu0 %v1315
        %1333 = vmatprep.subr.mxu0 0.0
        %1334 = vmatpush1.msra.mxu0 %v1316
        %1335 = vmatprep.subr.mxu0 0.0
        %1336 = vmatpush1.msra.mxu0 0.0
        %1337 = vmatprep.subr.mxu0 0.0
        %1338 = vmatpush1.msra.mxu0 0.0
        %1339 = vmatprep.subr.mxu0 0.0
        %1340 = vmatpush1.msra.mxu0 0.0
        %1341 = vmatprep.subr.mxu0 0.0
        %1342 = vmatpush1.msra.mxu0 0.0
        %1343 = vmatprep.subr.mxu0 0.0
        %1344 = vmatpush1.msra.mxu0 0.0
        %1345 = vmatprep.subr.mxu0 0.0
        %1346 = vmatpush1.msra.mxu0 0.0
        %1347 = vmatprep.subr.mxu0 0.0
        %1348 = vmatpush1.msra.mxu0 0.0
        %1349 = vmatprep.subr.mxu0 0.0
        %1350 = vmatpush1.msra.mxu0 0.0
        %1351 = vmatprep.subr.mxu0 0.0
        %1352 = vmatpush1.msra.mxu0 0.0
        %1353 = vmatprep.subr.mxu0 0.0
        %1354 = vmatpush1.msra.mxu0 0.0
        %1355 = vmatprep.subr.mxu0 0.0
        %1356 = vmatpush1.msra.mxu0 0.0
        %1357 = vmatprep.subr.mxu0 0.0
        %1358 = vmatpush1.msra.mxu0 0.0
        %1359 = vmatprep.subr.mxu0 0.0
        %1360 = vmatpush1.msra.mxu0 0.0
        %1361 = vmatprep.subr.mxu0 0.0
        %1362 = vmatpush1.msra.mxu0 0.0
        %1363 = vmatprep.subr.mxu0 0.0
        %1364 = vmatpush1.msra.mxu0 0.0
        %1365 = vmatprep.subr.mxu0 0.0
        %1366 = vmatpush1.msra.mxu0 0.0
        %1367 = vmatprep.subr.mxu0 0.0
        %1368 = vmatpush1.msra.mxu0 0.0
        %1369 = vmatprep.subr.mxu0 0.0
        %1370 = vmatpush1.msra.mxu0 0.0
        %1371 = vmatprep.subr.mxu0 0.0
        %1372 = vmatpush1.msra.mxu0 0.0
        %1373 = vmatprep.subr.mxu0 0.0
        %1374 = vmatpush1.msra.mxu0 0.0
        %1375 = vmatprep.subr.mxu0 0.0
        %1376 = vmatpush1.msra.mxu0 0.0
        %1377 = vmatprep.subr.mxu0 0.0
        %1378 = vmatpush1.msra.mxu0 0.0
        %1379 = vmatprep.subr.mxu0 0.0
        %1380 = vmatpush1.msra.mxu0 0.0
        %1381 = vmatprep.subr.mxu0 0.0
        %1382 = vmatpush1.msra.mxu0 0.0
        %1383 = vmatprep.subr.mxu0 0.0
        %1384 = vmatpush1.msra.mxu0 0.0
        %1385 = vmatprep.subr.mxu0 0.0
        %1386 = vmatpush1.msra.mxu0 0.0
        %1387 = vmatprep.subr.mxu0 0.0
        %1388 = vmatpush1.msra.mxu0 0.0
        %1389 = vmatprep.subr.mxu0 0.0
        %1390 = vmatpush1.msra.mxu0 0.0
        %1391 = vmatprep.mubr.f32.mxu0 0.0
        %1392 = vmatmul.mubr.f32.gmra.mrb[0].mxu0 %v1325
        %v1393 = vpop.f32.mrb[0].mxu0
        %v1394 = vadd.f32 %v1322, %v1393
        %v1395 = vpop.f32.mrb[0].mxu0
        %1396 = vdwg.mxu0
        %v1397 = vmul.f32 %v1394, 0.5
        %v1398 = vmul.f32 %v1394, 0.70710677
        %v1399 = verf.f32.pop %v1398
        %v1400 = vadd.f32 %v1399, 1.0
        %v1401 = vmul.f32 %v1397, %v1400
        %v1402 = vld [vmem:[%s10] sm:$0xff]
        %v1403 = vld [vmem:[%s10 + $0x8] sm:$0xff]
        %v1404 = vld [vmem:[%s10 + $0x10] sm:$0xff]
        %v1405 = vld [vmem:[%s10 + $0x18] sm:$0xff]
        %v1406 = vld [vmem:[%s10 + $0x20] sm:$0xff]
        %v1407 = vld [vmem:[%s10 + $0x28] sm:$0xff]
        %v1408 = vld [vmem:[%s10 + $0x30] sm:$0xff]
        %v1409 = vld [vmem:[%s10 + $0x38] sm:$0xff]
        %v1410 = vld [vmem:[%s10 + $0x40] sm:$0xff]
        %v1411 = vld [vmem:[%s10 + $0x48] sm:$0xff]
        %v1412 = vld [vmem:[%s10 + $0x50] sm:$0xff]
        %v1413 = vld [vmem:[%s10 + $0x58] sm:$0xff]
        %v1414 = vld [vmem:[%s10 + $0x60] sm:$0xff]
        %v1415 = vld [vmem:[%s10 + $0x68] sm:$0xff]
        %v1416 = vld [vmem:[%s10 + $0x70] sm:$0xff]
        %v1417 = vld [vmem:[%s10 + $0x78] sm:$0xff]
        %v1418 = vld [vmem:[%s11] sm:$0x1]
        %v1420 = vlaneseq
        %v1421 = vshrl.u32 %v1420, 7
        %v1422 = vsub.s32 0, %v1421
        %v1423 = vrot.slane %v1418, %v1422
        %1425 = vmatprep.subr.mxu0 0.0
        %1426 = vmatpush1.msra.mxu0 %v1402
        %1427 = vmatprep.subr.mxu0 0.0
        %1428 = vmatpush1.msra.mxu0 %v1403
        %1429 = vmatprep.subr.mxu0 0.0
        %1430 = vmatpush1.msra.mxu0 %v1404
        %1431 = vmatprep.subr.mxu0 0.0
        %1432 = vmatpush1.msra.mxu0 %v1405
        %1433 = vmatprep.subr.mxu0 0.0
        %1434 = vmatpush1.msra.mxu0 %v1406
        %1435 = vmatprep.subr.mxu0 0.0
        %1436 = vmatpush1.msra.mxu0 %v1407
        %1437 = vmatprep.subr.mxu0 0.0
        %1438 = vmatpush1.msra.mxu0 %v1408
        %1439 = vmatprep.subr.mxu0 0.0
        %1440 = vmatpush1.msra.mxu0 %v1409
        %1441 = vmatprep.subr.mxu0 0.0
        %1442 = vmatpush1.msra.mxu0 %v1410
        %1443 = vmatprep.subr.mxu0 0.0
        %1444 = vmatpush1.msra.mxu0 %v1411
        %1445 = vmatprep.subr.mxu0 0.0
        %1446 = vmatpush1.msra.mxu0 %v1412
        %1447 = vmatprep.subr.mxu0 0.0
        %1448 = vmatpush1.msra.mxu0 %v1413
        %1449 = vmatprep.subr.mxu0 0.0
        %1450 = vmatpush1.msra.mxu0 %v1414
        %1451 = vmatprep.subr.mxu0 0.0
        %1452 = vmatpush1.msra.mxu0 %v1415
        %1453 = vmatprep.subr.mxu0 0.0
        %1454 = vmatpush1.msra.mxu0 %v1416
        %1455 = vmatprep.subr.mxu0 0.0
        %1456 = vmatpush1.msra.mxu0 %v1417
        %1457 = vmatprep.subr.mxu0 0.0
        %1458 = vmatpush1.msra.mxu0 0.0
        %1459 = vmatprep.subr.mxu0 0.0
        %1460 = vmatpush1.msra.mxu0 0.0
        %1461 = vmatprep.subr.mxu0 0.0
        %1462 = vmatpush1.msra.mxu0 0.0
        %1463 = vmatprep.subr.mxu0 0.0
        %1464 = vmatpush1.msra.mxu0 0.0
        %1465 = vmatprep.subr.mxu0 0.0
        %1466 = vmatpush1.msra.mxu0 0.0
        %1467 = vmatprep.subr.mxu0 0.0
        %1468 = vmatpush1.msra.mxu0 0.0
        %1469 = vmatprep.subr.mxu0 0.0
        %1470 = vmatpush1.msra.mxu0 0.0
        %1471 = vmatprep.subr.mxu0 0.0
        %1472 = vmatpush1.msra.mxu0 0.0
        %1473 = vmatprep.subr.mxu0 0.0
        %1474 = vmatpush1.msra.mxu0 0.0
        %1475 = vmatprep.subr.mxu0 0.0
        %1476 = vmatpush1.msra.mxu0 0.0
        %1477 = vmatprep.subr.mxu0 0.0
        %1478 = vmatpush1.msra.mxu0 0.0
        %1479 = vmatprep.subr.mxu0 0.0
        %1480 = vmatpush1.msra.mxu0 0.0
        %1481 = vmatprep.subr.mxu0 0.0
        %1482 = vmatpush1.msra.mxu0 0.0
        %1483 = vmatprep.subr.mxu0 0.0
        %1484 = vmatpush1.msra.mxu0 0.0
        %1485 = vmatprep.subr.mxu0 0.0
        %1486 = vmatpush1.msra.mxu0 0.0
        %1487 = vmatprep.subr.mxu0 0.0
        %1488 = vmatpush1.msra.mxu0 0.0
        %1489 = vmatprep.mubr.f32.mxu0 0.0
        %1490 = vmatmul.mubr.f32.gmra.mrb[0].mxu0 %v1401
        %v1491 = vpop.f32.mrb[0].mxu0
        %v1492 = vadd.f32 %v1423, %v1491
        %v1493 = vpop.f32.mrb[0].mxu0
        %1494 = vdwg.mxu0
        %v1495 = vadd.f32 %v1283, %v1492
        %1496 = vst.msk [vmem:[%s404] sm:$0xff] %vm412, %v1495
        %s1497 = sand.u32 %s291, 1
        %s1498 = scalar_lea.sflag [#allocation3], %s1497
        %s1499 = sand.u32 %s291, 1
        %s1500 = smul.addr %s1499, 8
        %s1501 = scalar_lea.vmem [#allocation2], %s1500
        // Predicated region
        $region69: #{tpu_custom_call.1} parent=67 // pred_check
          %p1502 = pneg %p301
        $region70: #{tpu_custom_call.1} parent=67 // pred_check_branch
          %1504 = sbr.rel (%p1502) target = $region72
        $region71: #{tpu_custom_call.1} parent=67 // pred_region
          %s1506 = ssub.s32 128, 128
          %1507 = vsyncadd %s1498, %s1506
          %s1508 = smul.addr %s26, 128
          %s1509 = scalar_lea.hbm %s12, %s1508
          %s1511 = sshll.u32 %s1501, 4
          %s1512 = int_to_ptr.vmem [resolvable:$true] %s1511
          %1514 = dma.vmem_to_hbm [thread:$0]  %s1512, 128, %s1509, %s1498
        $region72: #{tpu_custom_call.1} parent=67 // pred_fallthru
          _
      $region68: #{tpu_custom_call.1} parent=5 // pred_fallthru
        _
      %p1515 = scmp.le.s32.totalorder 2, %s21
      // Predicated region
      $region73: #{tpu_custom_call.1} parent=5 // pred_check
        %p1516 = pneg %p1515
      $region74: #{tpu_custom_call.1} parent=5 // pred_check_branch
        %1518 = sbr.rel (%p1516) target = $region76
      $region75: #{tpu_custom_call.1} parent=5 // pred_region
        %s1519 = ssub.s32 %s21, 2
        // Predicated region
        $region77: #{tpu_custom_call.1} parent=75 // pred_check
          %p1520 = pneg %p307
        $region78: #{tpu_custom_call.1} parent=75 // pred_check_branch
          %1522 = sbr.rel (%p1520) target = $region80
        $region79: #{tpu_custom_call.1} parent=75 // pred_region
          %s1523 = sand.u32 %s292, 1
          %s1524 = scalar_lea.sflag [#allocation3], %s1523
          %s1525 = sand.u32 %s292, 1
          %s1526 = smul.addr %s1525, 8
          %s1527 = scalar_lea.vmem [#allocation2], %s1526
          %1528 = dma.done %s1524, 128
        $region80: #{tpu_custom_call.1} parent=75 // pred_fallthru
          _
      $region76: #{tpu_custom_call.1} parent=5 // pred_fallthru
        _
    $region6: #{tpu_custom_call.1} parent=1 // loop_footer
      %s25 = sadd.s32 1, %s21
    $region7: #{tpu_custom_call.1} parent=1 // loop_footer_branch
      %20 = sbr.rel target = $region3
    $region8: #{tpu_custom_call.1} parent=1 // loop_exit
      _
    %1529 = vsyncpa [#allocation3], 1
    %s1530 = scalar_lea.sflag [#allocation3], 1
    %1531 = vsyncpa %s1530, 1

</llo_original>
